<compile_context>
chip_gen: v5e
topology: v5e:2x2
jax: 0.10.0
libtpu: 0.0.40
codegen_flags: <defaults>
</compile_context>

<pallas_src>
import functools
from math import sqrt, log

import jax
import jax.numpy as jnp
from jax.experimental import pallas as pl
from jax.experimental.pallas import tpu as pltpu


LN_EPS = 1e-6
BF16 = jnp.bfloat16


# ----------------------------------------------------------------------------
# In-kernel helpers (operate on loaded values, not refs)
# ----------------------------------------------------------------------------

def _ln_val(x, g, b, eps=LN_EPS):
    x = x.astype(jnp.float32)
    mu = jnp.mean(x, axis=-1, keepdims=True)
    xc = x - mu
    var = jnp.mean(xc * xc, axis=-1, keepdims=True)
    return xc * jax.lax.rsqrt(var + eps) * g + b


def _mha_val(q, k, v, wo_bf, bo, num_head):
    # q: (Sq, A) f32, k/v: (Sk, A) f32, wo_bf: (A, D) bf16.
    # Scale is already folded into Wq. Per-head softmax attention, heads are
    # lane-concatenated and projected with ONE large-K output matmul.
    # TODO(synk): for large S this materializes the full (Sq,Sk) score tile per
    # head; flash-style KV tiling would be needed for long sequences.
    A = q.shape[-1]
    dh = A // num_head
    ohs = []
    for h in range(num_head):
        sl = slice(h * dh, (h + 1) * dh)
        qh = q[:, sl].astype(BF16)
        kh = k[:, sl].astype(BF16)
        vh = v[:, sl].astype(BF16)
        s = jnp.dot(qh, kh.T, preferred_element_type=jnp.float32)
        m = jnp.max(s, axis=-1, keepdims=True)
        p = jnp.exp(s - m)
        p = p * pl.reciprocal(jnp.sum(p, axis=-1, keepdims=True), approx=True)
        ohs.append(jnp.dot(p.astype(BF16), vh, preferred_element_type=jnp.float32))
    o_all = jnp.concatenate(ohs, axis=-1).astype(BF16)            # (Sq, A)
    return jnp.dot(o_all, wo_bf, preferred_element_type=jnp.float32) + bo


def _ff_val(x, fln_g, fln_b, w1_bf, b1, w2_bf, b2):
    # PositionwiseFF: LN -> W1 -> ReLU -> W2 -> residual (residual from
    # un-normalized input, norm_residual=False).
    xn = _ln_val(x, fln_g, fln_b)
    h = jnp.dot(xn.astype(BF16), w1_bf, preferred_element_type=jnp.float32) + b1
    h = jnp.maximum(h, 0.0)
    y = jnp.dot(h.astype(BF16), w2_bf, preferred_element_type=jnp.float32) + b2
    return y + x


# ----------------------------------------------------------------------------
# Fused Pallas kernels (one sentence per grid step)
# ----------------------------------------------------------------------------

def _enc_layer_kernel(*refs, num_head, apply_out_ln):
    (x_ref, ln_g, ln_b, wqkv, bqkv, wo, bo,
     fln_g, fln_b, w1, b1, w2, b2, og, ob, o_ref) = refs

    x = x_ref[0].astype(jnp.float32)                               # (S, D)
    A = wqkv.shape[1] // 3

    # pre-LN self attention, residual from un-normalized input
    xn = _ln_val(x, ln_g[...], ln_b[...])
    qkv = jnp.dot(xn.astype(BF16), wqkv[...],
                  preferred_element_type=jnp.float32) + bqkv[...]
    q, k, v = qkv[:, :A], qkv[:, A:2 * A], qkv[:, 2 * A:]
    h = _mha_val(q, k, v, wo[...], bo[...], num_head) + x

    # feed-forward
    y = _ff_val(h, fln_g[...], fln_b[...], w1[...], b1[...], w2[...], b2[...])

    if apply_out_ln:                                               # static flag
        y = _ln_val(y, og[...], ob[...])
    o_ref[0] = y.astype(o_ref.dtype)


def _cross_layer_kernel(*refs, num_head, ncross, apply_out_ln):
    idx = 0
    x_ref = refs[idx]; idx += 1
    mem_refs = refs[idx:idx + ncross]; idx += ncross
    ln_g, ln_b, wqkv, bqkv, wo, bo = refs[idx:idx + 6]; idx += 6
    cross_refs = []
    for _ in range(ncross):
        cross_refs.append(refs[idx:idx + 11]); idx += 11
    fln_g, fln_b, w1, b1, w2, b2 = refs[idx:idx + 6]; idx += 6
    og, ob = refs[idx:idx + 2]; idx += 2
    o_ref = refs[idx]

    x = x_ref[0].astype(jnp.float32)                               # (Sq, D)
    A = wqkv.shape[1] // 3

    # self attention block
    xn = _ln_val(x, ln_g[...], ln_b[...])
    qkv = jnp.dot(xn.astype(BF16), wqkv[...],
                  preferred_element_type=jnp.float32) + bqkv[...]
    q, k, v = qkv[:, :A], qkv[:, A:2 * A], qkv[:, 2 * A:]
    ctx = _mha_val(q, k, v, wo[...], bo[...], num_head) + x

    # cross attention + GateResidual blocks
    for j in range(ncross):
        (cln_g, cln_b, cwq, cbq, cwkv, cbkv, cwo, cbo, gw1, gw2, gb) = cross_refs[j]
        mem = mem_refs[j][0].astype(jnp.float32)                   # (Sk, D)
        Ac = cwq.shape[1]
        xq = _ln_val(ctx, cln_g[...], cln_b[...])
        qc = jnp.dot(xq.astype(BF16), cwq[...],
                     preferred_element_type=jnp.float32) + cbq[...]
        kvc = jnp.dot(mem.astype(BF16), cwkv[...],
                      preferred_element_type=jnp.float32) + cbkv[...]
        kc, vc = kvc[:, :Ac], kvc[:, Ac:]
        cctx = _mha_val(qc, kc, vc, cwo[...], cbo[...], num_head)
        # GateResidual with split weight: gate = sigmoid(cctx@W1 + ctx@W2 + b)
        gate = jax.nn.sigmoid(
            jnp.dot(cctx.astype(BF16), gw1[...], preferred_element_type=jnp.float32)
            + jnp.dot(ctx.astype(BF16), gw2[...], preferred_element_type=jnp.float32)
            + gb[...])
        ctx = cctx * gate + ctx * (1.0 - gate)

    # feed-forward
    y = _ff_val(ctx, fln_g[...], fln_b[...], w1[...], b1[...], w2[...], b2[...])

    if apply_out_ln:
        y = _ln_val(y, og[...], ob[...])
    o_ref[0] = y.astype(o_ref.dtype)


# ----------------------------------------------------------------------------
# pallas_call wrappers
# ----------------------------------------------------------------------------

def _vmem_limit(args, out_block_bytes):
    need = sum(int(a.size) * a.dtype.itemsize for a in args) * 2 + out_block_bytes * 2
    need += 2 << 20
    return int(min(max(need, 16 << 20), 64 << 20))


def _const_spec(a):
    # full-array block, same block every grid step (no re-fetch between steps)
    return pl.BlockSpec(a.shape, lambda b, nd=a.ndim: (0,) * nd)


def enc_layer_call(x, lp, out_ln_g, out_ln_b, *, num_head, apply_out_ln, out_dtype):
    B, S, D = x.shape
    args = (x, lp["ln_g"], lp["ln_b"], lp["wqkv"], lp["bqkv"], lp["wo"], lp["bo"],
            lp["ff_ln_g"], lp["ff_ln_b"], lp["w1"], lp["b1"], lp["w2"], lp["b2"],
            out_ln_g, out_ln_b)
    in_specs = [pl.BlockSpec((1, S, D), lambda b: (b, 0, 0))] + [
        _const_spec(a) for a in args[1:]]
    kernel = functools.partial(_enc_layer_kernel, num_head=num_head,
                               apply_out_ln=apply_out_ln)
    out_bytes = S * D * jnp.dtype(out_dtype).itemsize
    return pl.pallas_call(
        kernel,
        out_shape=jax.ShapeDtypeStruct((B, S, D), out_dtype),
        grid=(B,),
        in_specs=in_specs,
        out_specs=pl.BlockSpec((1, S, D), lambda b: (b, 0, 0)),
        compiler_params=pltpu.CompilerParams(
            dimension_semantics=("parallel",),
            vmem_limit_bytes=_vmem_limit(args, out_bytes)),
    )(*args)


def cross_layer_call(x, mems, lp, out_ln_g, out_ln_b, *, num_head, apply_out_ln,
                     out_dtype):
    B, Sq, D = x.shape
    ncross = len(lp["cross"])
    assert len(mems) == ncross

    args = [x] + list(mems)
    args += [lp["ln_g"], lp["ln_b"], lp["wqkv"], lp["bqkv"], lp["wo"], lp["bo"]]
    for cp in lp["cross"]:
        args += [cp["ln_g"], cp["ln_b"], cp["wq"], cp["bq"], cp["wkv"], cp["bkv"],
                 cp["wo"], cp["bo"], cp["gw1"], cp["gw2"], cp["gb"]]
    args += [lp["ff_ln_g"], lp["ff_ln_b"], lp["w1"], lp["b1"], lp["w2"], lp["b2"],
             out_ln_g, out_ln_b]

    in_specs = [pl.BlockSpec((1, Sq, D), lambda b: (b, 0, 0))]
    for m in mems:
        Sk = m.shape[1]
        in_specs.append(pl.BlockSpec((1, Sk, D), lambda b: (b, 0, 0)))
    in_specs += [_const_spec(a) for a in args[1 + ncross:]]

    kernel = functools.partial(_cross_layer_kernel, num_head=num_head,
                               ncross=ncross, apply_out_ln=apply_out_ln)
    out_bytes = Sq * D * jnp.dtype(out_dtype).itemsize
    return pl.pallas_call(
        kernel,
        out_shape=jax.ShapeDtypeStruct((B, Sq, D), out_dtype),
        grid=(B,),
        in_specs=in_specs,
        out_specs=pl.BlockSpec((1, Sq, D), lambda b: (b, 0, 0)),
        compiler_params=pltpu.CompilerParams(
            dimension_semantics=("parallel",),
            vmem_limit_bytes=_vmem_limit(args, out_bytes)),
    )(*args)


# ----------------------------------------------------------------------------
# Model (only embedding gather / reshapes left as JAX glue)
# ----------------------------------------------------------------------------

def sinusoidal_pemb(num_pos, num_dim):
    pos = jnp.arange(num_pos, dtype=jnp.float32)[:, None]
    div = jnp.exp(jnp.arange(0, num_dim, 2, dtype=jnp.float32)
                  * (-(log(10000.0) / num_dim)))
    w = jnp.zeros((num_pos, num_dim), jnp.float32)
    w = w.at[:, 0::2].set(jnp.sin(pos * div))
    w = w.at[:, 1::2].set(jnp.cos(pos * div))
    return w


def embed(tokens, wemb, pemb_w):
    # TODO(synk): embedding gather + positional add kept as JAX glue (no clean
    # Pallas equivalent for the table lookup at this scale).
    out = wemb[tokens] * sqrt(wemb.shape[1])
    out = out + pemb_w[None, : tokens.shape[1], :]
    return out.astype(BF16)   # bf16 residual stream between fused layer kernels


def encoder_base_forward(tokens, p, num_head):
    out = embed(tokens, p["wemb"], p["pemb"])
    n = len(p["layers"])
    for li, lp in enumerate(p["layers"]):
        last = li == n - 1
        out = enc_layer_call(out, lp, p["out_ln_g"], p["out_ln_b"],
                             num_head=num_head, apply_out_ln=last,
                             out_dtype=jnp.float32 if last else BF16)
    return out


def cross_encoder_forward(tokens, contexts, p, num_head):
    out = embed(tokens, p["wemb"], p["pemb"])
    mems = [c.astype(BF16) for c in contexts]   # halve memory reads per layer
    n = len(p["layers"])
    for li, lp in enumerate(p["layers"]):
        last = li == n - 1
        out = cross_layer_call(out, mems, lp, p["out_ln_g"], p["out_ln_b"],
                               num_head=num_head, apply_out_ln=last,
                               out_dtype=jnp.float32 if last else BF16)
    return out


def doc_encoder_forward(inputs, inputc, params, *, num_head, nprev_context):
    # inputs: (bsize, nsent, seql), inputc: (bsize, nsentc, seql)
    # TODO(synk): dropout (rate 0) and mask / context_mask handling omitted
    # (this call path passes mask=None, context_mask=None).
    bsize, nsentc, seql = inputc.shape
    pad = jnp.zeros((1, nprev_context - 1, seql), dtype=inputc.dtype).at[:, :, 0].set(1)
    _inputc = jnp.concatenate(
        [jnp.broadcast_to(pad, (bsize, nprev_context - 1, seql)), inputc], axis=1)

    ctx = encoder_base_forward(_inputc.reshape(-1, seql),
                               params["context_enc"], num_head)        # f32
    isize = ctx.shape[-1]
    ctx4 = ctx.reshape(bsize, nsentc + nprev_context - 1, seql, isize)
    # contexts must be materialized anyway: they are part of the return value.
    contexts = [ctx4[:, i: i + nsentc].reshape(-1, seql, isize)
                for i in range(nprev_context)]
    context_masks = [None] * nprev_context

    seql_in = inputs.shape[-1]
    enc_out = cross_encoder_forward(inputs.reshape(-1, seql_in), contexts,
                                    params["enc"], num_head)
    return enc_out, contexts, context_masks


# ----------------------------------------------------------------------------
# Parameter init (logical, PyTorch-shaped) and kernel-ready preparation
# ----------------------------------------------------------------------------

class KeyGen:
    def __init__(self, key):
        self.key = key

    def __call__(self):
        self.key, sub = jax.random.split(self.key)
        return sub


def _dense(kg, fan_in, fan_out):
    return jax.random.normal(kg(), (fan_in, fan_out), jnp.float32) * 0.02


def init_attn(kg, isize, hsize):
    return dict(
        wq=_dense(kg, isize, hsize), bq=jnp.zeros((hsize,), jnp.float32),
        wk=_dense(kg, isize, hsize), bk=jnp.zeros((hsize,), jnp.float32),
        wv=_dense(kg, isize, hsize), bv=jnp.zeros((hsize,), jnp.float32),
        wo=_dense(kg, hsize, isize), bo=jnp.zeros((isize,), jnp.float32),
    )


def init_ff(kg, isize, fhsize):
    return dict(
        ln_g=jnp.ones((isize,), jnp.float32), ln_b=jnp.zeros((isize,), jnp.float32),
        w1=_dense(kg, isize, fhsize), b1=jnp.zeros((fhsize,), jnp.float32),
        w2=_dense(kg, fhsize, isize), b2=jnp.zeros((isize,), jnp.float32),
    )


def init_enc_layer(kg, isize, ahsize, fhsize):
    return dict(
        ln_g=jnp.ones((isize,), jnp.float32), ln_b=jnp.zeros((isize,), jnp.float32),
        attn=init_attn(kg, isize, ahsize),
        ff=init_ff(kg, isize, fhsize),
    )


def init_cross_enc_layer(kg, isize, ahsize, fhsize, ncross):
    p = init_enc_layer(kg, isize, ahsize, fhsize)
    cross = []
    for _ in range(ncross):
        # GateResidual Linear(2*isize, isize) stored split:
        # gr_w1 multiplies the cross-attn output, gr_w2 the residual context.
        cross.append(dict(
            ln_g=jnp.ones((isize,), jnp.float32), ln_b=jnp.zeros((isize,), jnp.float32),
            attn=init_attn(kg, isize, ahsize),
            gr_w1=_dense(kg, isize, isize),
            gr_w2=_dense(kg, isize, isize),
            gr_b=jnp.zeros((isize,), jnp.float32),
        ))
    p["cross"] = cross
    return p


def init_encoder_base(kg, isize, nwd, num_layer, ahsize, fhsize, xseql):
    wemb = jax.random.normal(kg(), (nwd, isize), jnp.float32) * 0.02
    wemb = wemb.at[0].set(0.0)   # padding_idx=0
    return dict(
        wemb=wemb, pemb=sinusoidal_pemb(xseql, isize),
        layers=[init_enc_layer(kg, isize, ahsize, fhsize) for _ in range(num_layer)],
        out_ln_g=jnp.ones((isize,), jnp.float32),
        out_ln_b=jnp.zeros((isize,), jnp.float32),
    )


def init_cross_encoder(kg, isize, nwd, num_layer, ahsize, fhsize, xseql, ncross):
    wemb = jax.random.normal(kg(), (nwd, isize), jnp.float32) * 0.02
    wemb = wemb.at[0].set(0.0)
    return dict(
        wemb=wemb, pemb=sinusoidal_pemb(xseql, isize),
        layers=[init_cross_enc_layer(kg, isize, ahsize, fhsize, ncross)
                for _ in range(num_layer)],
        out_ln_g=jnp.ones((isize,), jnp.float32),
        out_ln_b=jnp.zeros((isize,), jnp.float32),
    )


def init_doc_encoder(seed, isize, nwd, num_layer, num_layer_context, ahsize, fhsize,
                     xseql, nprev_context):
    kg = KeyGen(jax.random.PRNGKey(seed))
    return dict(
        context_enc=init_encoder_base(kg, isize, nwd, num_layer_context, ahsize,
                                      fhsize, xseql),
        enc=init_cross_encoder(kg, isize, nwd, num_layer, ahsize, fhsize, xseql,
                               nprev_context),
    )


# --- prepare: fold scale into Wq, fuse QKV / KV weights, cast to bf16 ---

def _prep_ln(g, b):
    return (g.reshape(1, -1).astype(jnp.float32),
            b.reshape(1, -1).astype(jnp.float32))


def _prepare_self_attn(ap, num_head):
    A = ap["wq"].shape[1]
    scale = 1.0 / sqrt(A // num_head)
    wqkv = jnp.concatenate([ap["wq"] * scale, ap["wk"], ap["wv"]], axis=1).astype(BF16)
    bqkv = jnp.concatenate([ap["bq"] * scale, ap["bk"], ap["bv"]]
                           ).reshape(1, -1).astype(jnp.float32)
    return dict(wqkv=wqkv, bqkv=bqkv,
                wo=ap["wo"].astype(BF16),
                bo=ap["bo"].reshape(1, -1).astype(jnp.float32))


def prepare_base_layer(lp, num_head):
    p = {}
    p["ln_g"], p["ln_b"] = _prep_ln(lp["ln_g"], lp["ln_b"])
    p.update(_prepare_self_attn(lp["attn"], num_head))
    ff = lp["ff"]
    p["ff_ln_g"], p["ff_ln_b"] = _prep_ln(ff["ln_g"], ff["ln_b"])
    p["w1"] = ff["w1"].astype(BF16)
    p["b1"] = ff["b1"].reshape(1, -1).astype(jnp.float32)
    p["w2"] = ff["w2"].astype(BF16)
    p["b2"] = ff["b2"].reshape(1, -1).astype(jnp.float32)
    return p


def prepare_cross_layer(lp, num_head):
    p = prepare_base_layer(lp, num_head)
    cross = []
    for cp in lp["cross"]:
        ap = cp["attn"]
        A = ap["wq"].shape[1]
        scale = 1.0 / sqrt(A // num_head)
        cg, cb = _prep_ln(cp["ln_g"], cp["ln_b"])
        cross.append(dict(
            ln_g=cg, ln_b=cb,
            wq=(ap["wq"] * scale).astype(BF16),
            bq=(ap["bq"] * scale).reshape(1, -1).astype(jnp.float32),
            wkv=jnp.concatenate([ap["wk"], ap["wv"]], axis=1).astype(BF16),
            bkv=jnp.concatenate([ap["bk"], ap["bv"]]).reshape(1, -1).astype(jnp.float32),
            wo=ap["wo"].astype(BF16),
            bo=ap["bo"].reshape(1, -1).astype(jnp.float32),
            gw1=cp["gr_w1"].astype(BF16),
            gw2=cp["gr_w2"].astype(BF16),
            gb=cp["gr_b"].reshape(1, -1).astype(jnp.float32),
        ))
    p["cross"] = cross
    return p


def prepare_doc_encoder(params, num_head):
    def prep_enc(ep, prep_layer):
        g, b = _prep_ln(ep["out_ln_g"], ep["out_ln_b"])
        return dict(wemb=ep["wemb"], pemb=ep["pemb"],
                    layers=[prep_layer(lp, num_head) for lp in ep["layers"]],
                    out_ln_g=g, out_ln_b=b)
    return dict(context_enc=prep_enc(params["context_enc"], prepare_base_layer),
                enc=prep_enc(params["enc"], prepare_cross_layer))


# ----------------------------------------------------------------------------
# Main
# ----------------------------------------------------------------------------

if __name__ == "__main__":
    # small config
    isize = 32          # model dim (TODO(synk): production dims should be a
                        # multiple of 128 for lane-dense stores)
    nwd = 64            # vocab
    num_head = 4        # head dim = 8
    ahsize = isize
    fhsize = ahsize * 4  # 128
    num_layer = 1
    num_layer_context = 1
    nprev_context = 2
    xseql = 16
    bsize, nsent, seql = 2, 2, 8

    raw_params = init_doc_encoder(0, isize, nwd, num_layer, num_layer_context,
                                  ahsize, fhsize, xseql, nprev_context)
    params = prepare_doc_encoder(raw_params, num_head)   # bf16 / fused weights

    key = jax.random.PRNGKey(0)
    k1, k2 = jax.random.split(key)
    inputs = jax.random.randint(k1, (bsize, nsent, seql), 1, nwd, dtype=jnp.int32)
    inputc = jax.random.randint(k2, (bsize, nsent, seql), 1, nwd, dtype=jnp.int32)

    fwd = jax.jit(functools.partial(doc_encoder_forward,
                                    num_head=num_head, nprev_context=nprev_context))
    enc_out, contexts, context_masks = fwd(inputs, inputc, params)

    jax.block_until_ready(enc_out)
    for c in contexts:
        jax.block_until_ready(c)

    assert enc_out.shape == (bsize * nsent, seql, isize)
    assert all(c.shape == (bsize * nsent, seql, isize) for c in contexts)
    assert bool(jnp.all(jnp.isfinite(enc_out)))
    print("KERNEL_OK")
</pallas_src>

<mosaic_0001>
module attributes {stable_mosaic.version = 11 : i64} {
  func.func @_enc_layer_kernel(%arg0: i32, %arg1: memref<1x8x32xbf16, #tpu.memory_space<vmem>>, %arg2: memref<1x32xf32, #tpu.memory_space<vmem>>, %arg3: memref<1x32xf32, #tpu.memory_space<vmem>>, %arg4: memref<32x96xbf16, #tpu.memory_space<vmem>>, %arg5: memref<1x96xf32, #tpu.memory_space<vmem>>, %arg6: memref<32x32xbf16, #tpu.memory_space<vmem>>, %arg7: memref<1x32xf32, #tpu.memory_space<vmem>>, %arg8: memref<1x32xf32, #tpu.memory_space<vmem>>, %arg9: memref<1x32xf32, #tpu.memory_space<vmem>>, %arg10: memref<32x128xbf16, #tpu.memory_space<vmem>>, %arg11: memref<1x128xf32, #tpu.memory_space<vmem>>, %arg12: memref<128x32xbf16, #tpu.memory_space<vmem>>, %arg13: memref<1x32xf32, #tpu.memory_space<vmem>>, %arg14: memref<1x32xf32, #tpu.memory_space<vmem>>, %arg15: memref<1x32xf32, #tpu.memory_space<vmem>>, %arg16: memref<1x8x32xf32, #tpu.memory_space<vmem>>) attributes {dimension_semantics = [#tpu.dimension_semantics<parallel>], iteration_bounds = array<i64: 6>, scalar_prefetch = 0 : i64, scratch_operands = 0 : i64, tpu.core_type = #tpu.core_type<tc>, window_params = [{transform_indices = @transform_0, window_bounds = array<i64: 1, 8, 32>}, {pipeline_mode = #tpu.pipeline_mode<synchronous>, transform_indices = @transform_1, window_bounds = array<i64: 1, 32>}, {pipeline_mode = #tpu.pipeline_mode<synchronous>, transform_indices = @transform_2, window_bounds = array<i64: 1, 32>}, {pipeline_mode = #tpu.pipeline_mode<synchronous>, transform_indices = @transform_3, window_bounds = array<i64: 32, 96>}, {pipeline_mode = #tpu.pipeline_mode<synchronous>, transform_indices = @transform_4, window_bounds = array<i64: 1, 96>}, {pipeline_mode = #tpu.pipeline_mode<synchronous>, transform_indices = @transform_5, window_bounds = array<i64: 32, 32>}, {pipeline_mode = #tpu.pipeline_mode<synchronous>, transform_indices = @transform_6, window_bounds = array<i64: 1, 32>}, {pipeline_mode = #tpu.pipeline_mode<synchronous>, transform_indices = @transform_7, window_bounds = array<i64: 1, 32>}, {pipeline_mode = #tpu.pipeline_mode<synchronous>, transform_indices = @transform_8, window_bounds = array<i64: 1, 32>}, {pipeline_mode = #tpu.pipeline_mode<synchronous>, transform_indices = @transform_9, window_bounds = array<i64: 32, 128>}, {pipeline_mode = #tpu.pipeline_mode<synchronous>, transform_indices = @transform_10, window_bounds = array<i64: 1, 128>}, {pipeline_mode = #tpu.pipeline_mode<synchronous>, transform_indices = @transform_11, window_bounds = array<i64: 128, 32>}, {pipeline_mode = #tpu.pipeline_mode<synchronous>, transform_indices = @transform_12, window_bounds = array<i64: 1, 32>}, {pipeline_mode = #tpu.pipeline_mode<synchronous>, transform_indices = @transform_13, window_bounds = array<i64: 1, 32>}, {pipeline_mode = #tpu.pipeline_mode<synchronous>, transform_indices = @transform_14, window_bounds = array<i64: 1, 32>}, {transform_indices = @transform_15, window_bounds = array<i64: 1, 8, 32>}]} {
    %c0 = arith.constant 0 : index
    %c0_0 = arith.constant 0 : index
    %c0_1 = arith.constant 0 : index
    %0 = vector.load %arg1[%c0, %c0_0, %c0_1] : memref<1x8x32xbf16, #tpu.memory_space<vmem>>, vector<1x8x32xbf16>
    %1 = vector.shape_cast %0 : vector<1x8x32xbf16> to vector<8x32xbf16>
    %2 = arith.extf %1 : vector<8x32xbf16> to vector<8x32xf32>
    %c0_2 = arith.constant 0 : index
    %c0_3 = arith.constant 0 : index
    %3 = vector.load %arg2[%c0_2, %c0_3] : memref<1x32xf32, #tpu.memory_space<vmem>>, vector<1x32xf32>
    %c0_4 = arith.constant 0 : index
    %c0_5 = arith.constant 0 : index
    %4 = vector.load %arg3[%c0_4, %c0_5] : memref<1x32xf32, #tpu.memory_space<vmem>>, vector<1x32xf32>
    %cst = arith.constant dense<0.000000e+00> : vector<8xf32>
    %5 = vector.multi_reduction <add>, %2, %cst [1] : vector<8x32xf32> to vector<8xf32>
    %6 = vector.shape_cast %5 : vector<8xf32> to vector<8x1xf32>
    %cst_6 = arith.constant 3.200000e+01 : f32
    %7 = vector.broadcast %cst_6 : f32 to vector<8x1xf32>
    %8 = arith.divf %6, %7 : vector<8x1xf32>
    %9 = vector.broadcast %8 : vector<8x1xf32> to vector<8x32xf32>
    %10 = arith.subf %2, %9 : vector<8x32xf32>
    %11 = arith.mulf %10, %10 : vector<8x32xf32>
    %cst_7 = arith.constant dense<0.000000e+00> : vector<8xf32>
    %12 = vector.multi_reduction <add>, %11, %cst_7 [1] : vector<8x32xf32> to vector<8xf32>
    %13 = vector.shape_cast %12 : vector<8xf32> to vector<8x1xf32>
    %cst_8 = arith.constant 3.200000e+01 : f32
    %14 = vector.broadcast %cst_8 : f32 to vector<8x1xf32>
    %15 = arith.divf %13, %14 : vector<8x1xf32>
    %cst_9 = arith.constant 9.99999997E-7 : f32
    %16 = vector.broadcast %cst_9 : f32 to vector<8x1xf32>
    %17 = arith.addf %15, %16 : vector<8x1xf32>
    %18 = math.rsqrt %17 : vector<8x1xf32>
    %19 = vector.broadcast %18 : vector<8x1xf32> to vector<8x32xf32>
    %20 = arith.mulf %10, %19 : vector<8x32xf32>
    %21 = vector.broadcast %3 : vector<1x32xf32> to vector<8x32xf32>
    %22 = arith.mulf %20, %21 : vector<8x32xf32>
    %23 = vector.broadcast %4 : vector<1x32xf32> to vector<8x32xf32>
    %24 = arith.addf %22, %23 : vector<8x32xf32>
    %25 = arith.truncf %24 : vector<8x32xf32> to vector<8x32xbf16>
    %c0_10 = arith.constant 0 : index
    %c0_11 = arith.constant 0 : index
    %26 = vector.load %arg4[%c0_10, %c0_11] : memref<32x96xbf16, #tpu.memory_space<vmem>>, vector<32x96xbf16>
    %cst_12 = arith.constant dense<0.000000e+00> : vector<8x96xf32>
    %27 = tpu.matmul %25, %26, %cst_12 {dimension_numbers = #tpu.dot_dimension_numbers<[1], [0], [0], [1], [0, 0, 1, 1], [], []>} : vector<8x32xbf16>, vector<32x96xbf16>, vector<8x96xf32> -> vector<8x96xf32>
    %c0_13 = arith.constant 0 : index
    %c0_14 = arith.constant 0 : index
    %28 = vector.load %arg5[%c0_13, %c0_14] : memref<1x96xf32, #tpu.memory_space<vmem>>, vector<1x96xf32>
    %29 = vector.broadcast %28 : vector<1x96xf32> to vector<8x96xf32>
    %30 = arith.addf %27, %29 : vector<8x96xf32>
    %31 = vector.extract_strided_slice %30 {offsets = [0, 0], sizes = [8, 32], strides = [1, 1]} : vector<8x96xf32> to vector<8x32xf32>
    %32 = vector.extract_strided_slice %30 {offsets = [0, 32], sizes = [8, 32], strides = [1, 1]} : vector<8x96xf32> to vector<8x32xf32>
    %33 = vector.extract_strided_slice %30 {offsets = [0, 64], sizes = [8, 32], strides = [1, 1]} : vector<8x96xf32> to vector<8x32xf32>
    %c0_15 = arith.constant 0 : index
    %c0_16 = arith.constant 0 : index
    %34 = vector.load %arg6[%c0_15, %c0_16] : memref<32x32xbf16, #tpu.memory_space<vmem>>, vector<32x32xbf16>
    %c0_17 = arith.constant 0 : index
    %c0_18 = arith.constant 0 : index
    %35 = vector.load %arg7[%c0_17, %c0_18] : memref<1x32xf32, #tpu.memory_space<vmem>>, vector<1x32xf32>
    %36 = vector.extract_strided_slice %31 {offsets = [0, 0], sizes = [8, 8], strides = [1, 1]} : vector<8x32xf32> to vector<8x8xf32>
    %37 = arith.truncf %36 : vector<8x8xf32> to vector<8x8xbf16>
    %38 = vector.extract_strided_slice %32 {offsets = [0, 0], sizes = [8, 8], strides = [1, 1]} : vector<8x32xf32> to vector<8x8xf32>
    %39 = arith.truncf %38 : vector<8x8xf32> to vector<8x8xbf16>
    %40 = vector.extract_strided_slice %33 {offsets = [0, 0], sizes = [8, 8], strides = [1, 1]} : vector<8x32xf32> to vector<8x8xf32>
    %41 = arith.truncf %40 : vector<8x8xf32> to vector<8x8xbf16>
    %42 = tpu.transpose %39, [1, 0] : vector<8x8xbf16> -> vector<8x8xbf16>
    %cst_19 = arith.constant dense<0.000000e+00> : vector<8x8xf32>
    %43 = tpu.matmul %37, %42, %cst_19 {dimension_numbers = #tpu.dot_dimension_numbers<[1], [0], [0], [1], [0, 0, 1, 1], [], []>} : vector<8x8xbf16>, vector<8x8xbf16>, vector<8x8xf32> -> vector<8x8xf32>
    %cst_20 = arith.constant dense<0xFF800000> : vector<8xf32>
    %44 = vector.multi_reduction <maximumf>, %43, %cst_20 [1] : vector<8x8xf32> to vector<8xf32>
    %45 = vector.shape_cast %44 : vector<8xf32> to vector<8x1xf32>
    %46 = vector.broadcast %45 : vector<8x1xf32> to vector<8x8xf32>
    %47 = arith.subf %43, %46 : vector<8x8xf32>
    %48 = math.exp %47 : vector<8x8xf32>
    %cst_21 = arith.constant dense<0.000000e+00> : vector<8xf32>
    %49 = vector.multi_reduction <add>, %48, %cst_21 [1] : vector<8x8xf32> to vector<8xf32>
    %50 = vector.shape_cast %49 : vector<8xf32> to vector<8x1xf32>
    %51 = tpu.reciprocal %50 {approx = true} : vector<8x1xf32> -> vector<8x1xf32>
    %52 = vector.broadcast %51 : vector<8x1xf32> to vector<8x8xf32>
    %53 = arith.mulf %48, %52 : vector<8x8xf32>
    %54 = arith.truncf %53 : vector<8x8xf32> to vector<8x8xbf16>
    %cst_22 = arith.constant dense<0.000000e+00> : vector<8x8xf32>
    %55 = tpu.matmul %54, %41, %cst_22 {dimension_numbers = #tpu.dot_dimension_numbers<[1], [0], [0], [1], [0, 0, 1, 1], [], []>} : vector<8x8xbf16>, vector<8x8xbf16>, vector<8x8xf32> -> vector<8x8xf32>
    %56 = vector.extract_strided_slice %31 {offsets = [0, 8], sizes = [8, 8], strides = [1, 1]} : vector<8x32xf32> to vector<8x8xf32>
    %57 = arith.truncf %56 : vector<8x8xf32> to vector<8x8xbf16>
    %58 = vector.extract_strided_slice %32 {offsets = [0, 8], sizes = [8, 8], strides = [1, 1]} : vector<8x32xf32> to vector<8x8xf32>
    %59 = arith.truncf %58 : vector<8x8xf32> to vector<8x8xbf16>
    %60 = vector.extract_strided_slice %33 {offsets = [0, 8], sizes = [8, 8], strides = [1, 1]} : vector<8x32xf32> to vector<8x8xf32>
    %61 = arith.truncf %60 : vector<8x8xf32> to vector<8x8xbf16>
    %62 = tpu.transpose %59, [1, 0] : vector<8x8xbf16> -> vector<8x8xbf16>
    %cst_23 = arith.constant dense<0.000000e+00> : vector<8x8xf32>
    %63 = tpu.matmul %57, %62, %cst_23 {dimension_numbers = #tpu.dot_dimension_numbers<[1], [0], [0], [1], [0, 0, 1, 1], [], []>} : vector<8x8xbf16>, vector<8x8xbf16>, vector<8x8xf32> -> vector<8x8xf32>
    %cst_24 = arith.constant dense<0xFF800000> : vector<8xf32>
    %64 = vector.multi_reduction <maximumf>, %63, %cst_24 [1] : vector<8x8xf32> to vector<8xf32>
    %65 = vector.shape_cast %64 : vector<8xf32> to vector<8x1xf32>
    %66 = vector.broadcast %65 : vector<8x1xf32> to vector<8x8xf32>
    %67 = arith.subf %63, %66 : vector<8x8xf32>
    %68 = math.exp %67 : vector<8x8xf32>
    %cst_25 = arith.constant dense<0.000000e+00> : vector<8xf32>
    %69 = vector.multi_reduction <add>, %68, %cst_25 [1] : vector<8x8xf32> to vector<8xf32>
    %70 = vector.shape_cast %69 : vector<8xf32> to vector<8x1xf32>
    %71 = tpu.reciprocal %70 {approx = true} : vector<8x1xf32> -> vector<8x1xf32>
    %72 = vector.broadcast %71 : vector<8x1xf32> to vector<8x8xf32>
    %73 = arith.mulf %68, %72 : vector<8x8xf32>
    %74 = arith.truncf %73 : vector<8x8xf32> to vector<8x8xbf16>
    %cst_26 = arith.constant dense<0.000000e+00> : vector<8x8xf32>
    %75 = tpu.matmul %74, %61, %cst_26 {dimension_numbers = #tpu.dot_dimension_numbers<[1], [0], [0], [1], [0, 0, 1, 1], [], []>} : vector<8x8xbf16>, vector<8x8xbf16>, vector<8x8xf32> -> vector<8x8xf32>
    %76 = vector.extract_strided_slice %31 {offsets = [0, 16], sizes = [8, 8], strides = [1, 1]} : vector<8x32xf32> to vector<8x8xf32>
    %77 = arith.truncf %76 : vector<8x8xf32> to vector<8x8xbf16>
    %78 = vector.extract_strided_slice %32 {offsets = [0, 16], sizes = [8, 8], strides = [1, 1]} : vector<8x32xf32> to vector<8x8xf32>
    %79 = arith.truncf %78 : vector<8x8xf32> to vector<8x8xbf16>
    %80 = vector.extract_strided_slice %33 {offsets = [0, 16], sizes = [8, 8], strides = [1, 1]} : vector<8x32xf32> to vector<8x8xf32>
    %81 = arith.truncf %80 : vector<8x8xf32> to vector<8x8xbf16>
    %82 = tpu.transpose %79, [1, 0] : vector<8x8xbf16> -> vector<8x8xbf16>
    %cst_27 = arith.constant dense<0.000000e+00> : vector<8x8xf32>
    %83 = tpu.matmul %77, %82, %cst_27 {dimension_numbers = #tpu.dot_dimension_numbers<[1], [0], [0], [1], [0, 0, 1, 1], [], []>} : vector<8x8xbf16>, vector<8x8xbf16>, vector<8x8xf32> -> vector<8x8xf32>
    %cst_28 = arith.constant dense<0xFF800000> : vector<8xf32>
    %84 = vector.multi_reduction <maximumf>, %83, %cst_28 [1] : vector<8x8xf32> to vector<8xf32>
    %85 = vector.shape_cast %84 : vector<8xf32> to vector<8x1xf32>
    %86 = vector.broadcast %85 : vector<8x1xf32> to vector<8x8xf32>
    %87 = arith.subf %83, %86 : vector<8x8xf32>
    %88 = math.exp %87 : vector<8x8xf32>
    %cst_29 = arith.constant dense<0.000000e+00> : vector<8xf32>
    %89 = vector.multi_reduction <add>, %88, %cst_29 [1] : vector<8x8xf32> to vector<8xf32>
    %90 = vector.shape_cast %89 : vector<8xf32> to vector<8x1xf32>
    %91 = tpu.reciprocal %90 {approx = true} : vector<8x1xf32> -> vector<8x1xf32>
    %92 = vector.broadcast %91 : vector<8x1xf32> to vector<8x8xf32>
    %93 = arith.mulf %88, %92 : vector<8x8xf32>
    %94 = arith.truncf %93 : vector<8x8xf32> to vector<8x8xbf16>
    %cst_30 = arith.constant dense<0.000000e+00> : vector<8x8xf32>
    %95 = tpu.matmul %94, %81, %cst_30 {dimension_numbers = #tpu.dot_dimension_numbers<[1], [0], [0], [1], [0, 0, 1, 1], [], []>} : vector<8x8xbf16>, vector<8x8xbf16>, vector<8x8xf32> -> vector<8x8xf32>
    %96 = vector.extract_strided_slice %31 {offsets = [0, 24], sizes = [8, 8], strides = [1, 1]} : vector<8x32xf32> to vector<8x8xf32>
    %97 = arith.truncf %96 : vector<8x8xf32> to vector<8x8xbf16>
    %98 = vector.extract_strided_slice %32 {offsets = [0, 24], sizes = [8, 8], strides = [1, 1]} : vector<8x32xf32> to vector<8x8xf32>
    %99 = arith.truncf %98 : vector<8x8xf32> to vector<8x8xbf16>
    %100 = vector.extract_strided_slice %33 {offsets = [0, 24], sizes = [8, 8], strides = [1, 1]} : vector<8x32xf32> to vector<8x8xf32>
    %101 = arith.truncf %100 : vector<8x8xf32> to vector<8x8xbf16>
    %102 = tpu.transpose %99, [1, 0] : vector<8x8xbf16> -> vector<8x8xbf16>
    %cst_31 = arith.constant dense<0.000000e+00> : vector<8x8xf32>
    %103 = tpu.matmul %97, %102, %cst_31 {dimension_numbers = #tpu.dot_dimension_numbers<[1], [0], [0], [1], [0, 0, 1, 1], [], []>} : vector<8x8xbf16>, vector<8x8xbf16>, vector<8x8xf32> -> vector<8x8xf32>
    %cst_32 = arith.constant dense<0xFF800000> : vector<8xf32>
    %104 = vector.multi_reduction <maximumf>, %103, %cst_32 [1] : vector<8x8xf32> to vector<8xf32>
    %105 = vector.shape_cast %104 : vector<8xf32> to vector<8x1xf32>
    %106 = vector.broadcast %105 : vector<8x1xf32> to vector<8x8xf32>
    %107 = arith.subf %103, %106 : vector<8x8xf32>
    %108 = math.exp %107 : vector<8x8xf32>
    %cst_33 = arith.constant dense<0.000000e+00> : vector<8xf32>
    %109 = vector.multi_reduction <add>, %108, %cst_33 [1] : vector<8x8xf32> to vector<8xf32>
    %110 = vector.shape_cast %109 : vector<8xf32> to vector<8x1xf32>
    %111 = tpu.reciprocal %110 {approx = true} : vector<8x1xf32> -> vector<8x1xf32>
    %112 = vector.broadcast %111 : vector<8x1xf32> to vector<8x8xf32>
    %113 = arith.mulf %108, %112 : vector<8x8xf32>
    %114 = arith.truncf %113 : vector<8x8xf32> to vector<8x8xbf16>
    %cst_34 = arith.constant dense<0.000000e+00> : vector<8x8xf32>
    %115 = tpu.matmul %114, %101, %cst_34 {dimension_numbers = #tpu.dot_dimension_numbers<[1], [0], [0], [1], [0, 0, 1, 1], [], []>} : vector<8x8xbf16>, vector<8x8xbf16>, vector<8x8xf32> -> vector<8x8xf32>
    %116 = tpu.concatenate %55, %75, %95, %115 in 1 : vector<8x8xf32>, vector<8x8xf32>, vector<8x8xf32>, vector<8x8xf32> -> vector<8x32xf32>
    %117 = arith.truncf %116 : vector<8x32xf32> to vector<8x32xbf16>
    %cst_35 = arith.constant dense<0.000000e+00> : vector<8x32xf32>
    %118 = tpu.matmul %117, %34, %cst_35 {dimension_numbers = #tpu.dot_dimension_numbers<[1], [0], [0], [1], [0, 0, 1, 1], [], []>} : vector<8x32xbf16>, vector<32x32xbf16>, vector<8x32xf32> -> vector<8x32xf32>
    %119 = vector.broadcast %35 : vector<1x32xf32> to vector<8x32xf32>
    %120 = arith.addf %118, %119 : vector<8x32xf32>
    %121 = arith.addf %120, %2 : vector<8x32xf32>
    %c0_36 = arith.constant 0 : index
    %c0_37 = arith.constant 0 : index
    %122 = vector.load %arg8[%c0_36, %c0_37] : memref<1x32xf32, #tpu.memory_space<vmem>>, vector<1x32xf32>
    %c0_38 = arith.constant 0 : index
    %c0_39 = arith.constant 0 : index
    %123 = vector.load %arg9[%c0_38, %c0_39] : memref<1x32xf32, #tpu.memory_space<vmem>>, vector<1x32xf32>
    %c0_40 = arith.constant 0 : index
    %c0_41 = arith.constant 0 : index
    %124 = vector.load %arg10[%c0_40, %c0_41] : memref<32x128xbf16, #tpu.memory_space<vmem>>, vector<32x128xbf16>
    %c0_42 = arith.constant 0 : index
    %c0_43 = arith.constant 0 : index
    %125 = vector.load %arg11[%c0_42, %c0_43] : memref<1x128xf32, #tpu.memory_space<vmem>>, vector<1x128xf32>
    %c0_44 = arith.constant 0 : index
    %c0_45 = arith.constant 0 : index
    %126 = vector.load %arg12[%c0_44, %c0_45] : memref<128x32xbf16, #tpu.memory_space<vmem>>, vector<128x32xbf16>
    %c0_46 = arith.constant 0 : index
    %c0_47 = arith.constant 0 : index
    %127 = vector.load %arg13[%c0_46, %c0_47] : memref<1x32xf32, #tpu.memory_space<vmem>>, vector<1x32xf32>
    %cst_48 = arith.constant dense<0.000000e+00> : vector<8xf32>
    %128 = vector.multi_reduction <add>, %121, %cst_48 [1] : vector<8x32xf32> to vector<8xf32>
    %129 = vector.shape_cast %128 : vector<8xf32> to vector<8x1xf32>
    %cst_49 = arith.constant 3.200000e+01 : f32
    %130 = vector.broadcast %cst_49 : f32 to vector<8x1xf32>
    %131 = arith.divf %129, %130 : vector<8x1xf32>
    %132 = vector.broadcast %131 : vector<8x1xf32> to vector<8x32xf32>
    %133 = arith.subf %121, %132 : vector<8x32xf32>
    %134 = arith.mulf %133, %133 : vector<8x32xf32>
    %cst_50 = arith.constant dense<0.000000e+00> : vector<8xf32>
    %135 = vector.multi_reduction <add>, %134, %cst_50 [1] : vector<8x32xf32> to vector<8xf32>
    %136 = vector.shape_cast %135 : vector<8xf32> to vector<8x1xf32>
    %cst_51 = arith.constant 3.200000e+01 : f32
    %137 = vector.broadcast %cst_51 : f32 to vector<8x1xf32>
    %138 = arith.divf %136, %137 : vector<8x1xf32>
    %cst_52 = arith.constant 9.99999997E-7 : f32
    %139 = vector.broadcast %cst_52 : f32 to vector<8x1xf32>
    %140 = arith.addf %138, %139 : vector<8x1xf32>
    %141 = math.rsqrt %140 : vector<8x1xf32>
    %142 = vector.broadcast %141 : vector<8x1xf32> to vector<8x32xf32>
    %143 = arith.mulf %133, %142 : vector<8x32xf32>
    %144 = vector.broadcast %122 : vector<1x32xf32> to vector<8x32xf32>
    %145 = arith.mulf %143, %144 : vector<8x32xf32>
    %146 = vector.broadcast %123 : vector<1x32xf32> to vector<8x32xf32>
    %147 = arith.addf %145, %146 : vector<8x32xf32>
    %148 = arith.truncf %147 : vector<8x32xf32> to vector<8x32xbf16>
    %cst_53 = arith.constant dense<0.000000e+00> : vector<8x128xf32>
    %149 = tpu.matmul %148, %124, %cst_53 {dimension_numbers = #tpu.dot_dimension_numbers<[1], [0], [0], [1], [0, 0, 1, 1], [], []>} : vector<8x32xbf16>, vector<32x128xbf16>, vector<8x128xf32> -> vector<8x128xf32>
    %150 = vector.broadcast %125 : vector<1x128xf32> to vector<8x128xf32>
    %151 = arith.addf %149, %150 : vector<8x128xf32>
    %cst_54 = arith.constant 0.000000e+00 : f32
    %152 = vector.broadcast %cst_54 : f32 to vector<8x128xf32>
    %153 = arith.maximumf %151, %152 : vector<8x128xf32>
    %154 = arith.truncf %153 : vector<8x128xf32> to vector<8x128xbf16>
    %cst_55 = arith.constant dense<0.000000e+00> : vector<8x32xf32>
    %155 = tpu.matmul %154, %126, %cst_55 {dimension_numbers = #tpu.dot_dimension_numbers<[1], [0], [0], [1], [0, 0, 1, 1], [], []>} : vector<8x128xbf16>, vector<128x32xbf16>, vector<8x32xf32> -> vector<8x32xf32>
    %156 = vector.broadcast %127 : vector<1x32xf32> to vector<8x32xf32>
    %157 = arith.addf %155, %156 : vector<8x32xf32>
    %158 = arith.addf %157, %121 : vector<8x32xf32>
    %c0_56 = arith.constant 0 : index
    %c0_57 = arith.constant 0 : index
    %159 = vector.load %arg14[%c0_56, %c0_57] : memref<1x32xf32, #tpu.memory_space<vmem>>, vector<1x32xf32>
    %c0_58 = arith.constant 0 : index
    %c0_59 = arith.constant 0 : index
    %160 = vector.load %arg15[%c0_58, %c0_59] : memref<1x32xf32, #tpu.memory_space<vmem>>, vector<1x32xf32>
    %cst_60 = arith.constant dense<0.000000e+00> : vector<8xf32>
    %161 = vector.multi_reduction <add>, %158, %cst_60 [1] : vector<8x32xf32> to vector<8xf32>
    %162 = vector.shape_cast %161 : vector<8xf32> to vector<8x1xf32>
    %cst_61 = arith.constant 3.200000e+01 : f32
    %163 = vector.broadcast %cst_61 : f32 to vector<8x1xf32>
    %164 = arith.divf %162, %163 : vector<8x1xf32>
    %165 = vector.broadcast %164 : vector<8x1xf32> to vector<8x32xf32>
    %166 = arith.subf %158, %165 : vector<8x32xf32>
    %167 = arith.mulf %166, %166 : vector<8x32xf32>
    %cst_62 = arith.constant dense<0.000000e+00> : vector<8xf32>
    %168 = vector.multi_reduction <add>, %167, %cst_62 [1] : vector<8x32xf32> to vector<8xf32>
    %169 = vector.shape_cast %168 : vector<8xf32> to vector<8x1xf32>
    %cst_63 = arith.constant 3.200000e+01 : f32
    %170 = vector.broadcast %cst_63 : f32 to vector<8x1xf32>
    %171 = arith.divf %169, %170 : vector<8x1xf32>
    %cst_64 = arith.constant 9.99999997E-7 : f32
    %172 = vector.broadcast %cst_64 : f32 to vector<8x1xf32>
    %173 = arith.addf %171, %172 : vector<8x1xf32>
    %174 = math.rsqrt %173 : vector<8x1xf32>
    %175 = vector.broadcast %174 : vector<8x1xf32> to vector<8x32xf32>
    %176 = arith.mulf %166, %175 : vector<8x32xf32>
    %177 = vector.broadcast %159 : vector<1x32xf32> to vector<8x32xf32>
    %178 = arith.mulf %176, %177 : vector<8x32xf32>
    %179 = vector.broadcast %160 : vector<1x32xf32> to vector<8x32xf32>
    %180 = arith.addf %178, %179 : vector<8x32xf32>
    %c0_65 = arith.constant 0 : index
    %c0_66 = arith.constant 0 : index
    %c0_67 = arith.constant 0 : index
    %181 = vector.load %arg16[%c0_65, %c0_66, %c0_67] : memref<1x8x32xf32, #tpu.memory_space<vmem>>, vector<1x8x32xf32>
    %182 = vector.shape_cast %181 : vector<1x8x32xf32> to vector<8x32xf32>
    %183 = vector.shape_cast %180 : vector<8x32xf32> to vector<1x8x32xf32>
    tpu.vector_store %arg16[%c0_65, %c0_66, %c0_67], %183 {strides = array<i32>} : memref<1x8x32xf32, #tpu.memory_space<vmem>>, vector<1x8x32xf32>,
    return
  }
  func.func @transform_0(%arg0: i32) -> (i32, i32, i32) {
    %c0_i32 = arith.constant 0 : i32
    %c0_i32_0 = arith.constant 0 : i32
    %c0_i32_1 = arith.constant 0 : i32
    return %arg0, %c0_i32, %c0_i32_0 : i32, i32, i32
  }
  func.func @transform_1(%arg0: i32) -> (i32, i32) {
    %c0_i32 = arith.constant 0 : i32
    %c0_i32_0 = arith.constant 0 : i32
    %c0_i32_1 = arith.constant 0 : i32
    return %c0_i32, %c0_i32_0 : i32, i32
  }
  func.func @transform_2(%arg0: i32) -> (i32, i32) {
    %c0_i32 = arith.constant 0 : i32
    %c0_i32_0 = arith.constant 0 : i32
    %c0_i32_1 = arith.constant 0 : i32
    return %c0_i32, %c0_i32_0 : i32, i32
  }
  func.func @transform_3(%arg0: i32) -> (i32, i32) {
    %c0_i32 = arith.constant 0 : i32
    %c0_i32_0 = arith.constant 0 : i32
    %c0_i32_1 = arith.constant 0 : i32
    return %c0_i32, %c0_i32_0 : i32, i32
  }
  func.func @transform_4(%arg0: i32) -> (i32, i32) {
    %c0_i32 = arith.constant 0 : i32
    %c0_i32_0 = arith.constant 0 : i32
    %c0_i32_1 = arith.constant 0 : i32
    return %c0_i32, %c0_i32_0 : i32, i32
  }
  func.func @transform_5(%arg0: i32) -> (i32, i32) {
    %c0_i32 = arith.constant 0 : i32
    %c0_i32_0 = arith.constant 0 : i32
    %c0_i32_1 = arith.constant 0 : i32
    return %c0_i32, %c0_i32_0 : i32, i32
  }
  func.func @transform_6(%arg0: i32) -> (i32, i32) {
    %c0_i32 = arith.constant 0 : i32
    %c0_i32_0 = arith.constant 0 : i32
    %c0_i32_1 = arith.constant 0 : i32
    return %c0_i32, %c0_i32_0 : i32, i32
  }
  func.func @transform_7(%arg0: i32) -> (i32, i32) {
    %c0_i32 = arith.constant 0 : i32
    %c0_i32_0 = arith.constant 0 : i32
    %c0_i32_1 = arith.constant 0 : i32
    return %c0_i32, %c0_i32_0 : i32, i32
  }
  func.func @transform_8(%arg0: i32) -> (i32, i32) {
    %c0_i32 = arith.constant 0 : i32
    %c0_i32_0 = arith.constant 0 : i32
    %c0_i32_1 = arith.constant 0 : i32
    return %c0_i32, %c0_i32_0 : i32, i32
  }
  func.func @transform_9(%arg0: i32) -> (i32, i32) {
    %c0_i32 = arith.constant 0 : i32
    %c0_i32_0 = arith.constant 0 : i32
    %c0_i32_1 = arith.constant 0 : i32
    return %c0_i32, %c0_i32_0 : i32, i32
  }
  func.func @transform_10(%arg0: i32) -> (i32, i32) {
    %c0_i32 = arith.constant 0 : i32
    %c0_i32_0 = arith.constant 0 : i32
    %c0_i32_1 = arith.constant 0 : i32
    return %c0_i32, %c0_i32_0 : i32, i32
  }
  func.func @transform_11(%arg0: i32) -> (i32, i32) {
    %c0_i32 = arith.constant 0 : i32
    %c0_i32_0 = arith.constant 0 : i32
    %c0_i32_1 = arith.constant 0 : i32
    return %c0_i32, %c0_i32_0 : i32, i32
  }
  func.func @transform_12(%arg0: i32) -> (i32, i32) {
    %c0_i32 = arith.constant 0 : i32
    %c0_i32_0 = arith.constant 0 : i32
    %c0_i32_1 = arith.constant 0 : i32
    return %c0_i32, %c0_i32_0 : i32, i32
  }
  func.func @transform_13(%arg0: i32) -> (i32, i32) {
    %c0_i32 = arith.constant 0 : i32
    %c0_i32_0 = arith.constant 0 : i32
    %c0_i32_1 = arith.constant 0 : i32
    return %c0_i32, %c0_i32_0 : i32, i32
  }
  func.func @transform_14(%arg0: i32) -> (i32, i32) {
    %c0_i32 = arith.constant 0 : i32
    %c0_i32_0 = arith.constant 0 : i32
    %c0_i32_1 = arith.constant 0 : i32
    return %c0_i32, %c0_i32_0 : i32, i32
  }
  func.func @transform_15(%arg0: i32) -> (i32, i32, i32) {
    %c0_i32 = arith.constant 0 : i32
    %c0_i32_0 = arith.constant 0 : i32
    %c0_i32_1 = arith.constant 0 : i32
    return %arg0, %c0_i32, %c0_i32_0 : i32, i32, i32
  }
}

module attributes {stable_mosaic.version = 11 : i64} {
  func.func @_cross_layer_kernel(%arg0: i32, %arg1: memref<1x8x32xbf16, #tpu.memory_space<vmem>>, %arg2: memref<1x8x32xbf16, #tpu.memory_space<vmem>>, %arg3: memref<1x8x32xbf16, #tpu.memory_space<vmem>>, %arg4: memref<1x32xf32, #tpu.memory_space<vmem>>, %arg5: memref<1x32xf32, #tpu.memory_space<vmem>>, %arg6: memref<32x96xbf16, #tpu.memory_space<vmem>>, %arg7: memref<1x96xf32, #tpu.memory_space<vmem>>, %arg8: memref<32x32xbf16, #tpu.memory_space<vmem>>, %arg9: memref<1x32xf32, #tpu.memory_space<vmem>>, %arg10: memref<1x32xf32, #tpu.memory_space<vmem>>, %arg11: memref<1x32xf32, #tpu.memory_space<vmem>>, %arg12: memref<32x32xbf16, #tpu.memory_space<vmem>>, %arg13: memref<1x32xf32, #tpu.memory_space<vmem>>, %arg14: memref<32x64xbf16, #tpu.memory_space<vmem>>, %arg15: memref<1x64xf32, #tpu.memory_space<vmem>>, %arg16: memref<32x32xbf16, #tpu.memory_space<vmem>>, %arg17: memref<1x32xf32, #tpu.memory_space<vmem>>, %arg18: memref<32x32xbf16, #tpu.memory_space<vmem>>, %arg19: memref<32x32xbf16, #tpu.memory_space<vmem>>, %arg20: memref<1x32xf32, #tpu.memory_space<vmem>>, %arg21: memref<1x32xf32, #tpu.memory_space<vmem>>, %arg22: memref<1x32xf32, #tpu.memory_space<vmem>>, %arg23: memref<32x32xbf16, #tpu.memory_space<vmem>>, %arg24: memref<1x32xf32, #tpu.memory_space<vmem>>, %arg25: memref<32x64xbf16, #tpu.memory_space<vmem>>, %arg26: memref<1x64xf32, #tpu.memory_space<vmem>>, %arg27: memref<32x32xbf16, #tpu.memory_space<vmem>>, %arg28: memref<1x32xf32, #tpu.memory_space<vmem>>, %arg29: memref<32x32xbf16, #tpu.memory_space<vmem>>, %arg30: memref<32x32xbf16, #tpu.memory_space<vmem>>, %arg31: memref<1x32xf32, #tpu.memory_space<vmem>>, %arg32: memref<1x32xf32, #tpu.memory_space<vmem>>, %arg33: memref<1x32xf32, #tpu.memory_space<vmem>>, %arg34: memref<32x128xbf16, #tpu.memory_space<vmem>>, %arg35: memref<1x128xf32, #tpu.memory_space<vmem>>, %arg36: memref<128x32xbf16, #tpu.memory_space<vmem>>, %arg37: memref<1x32xf32, #tpu.memory_space<vmem>>, %arg38: memref<1x32xf32, #tpu.memory_space<vmem>>, %arg39: memref<1x32xf32, #tpu.memory_space<vmem>>, %arg40: memref<1x8x32xf32, #tpu.memory_space<vmem>>) attributes {dimension_semantics = [#tpu.dimension_semantics<parallel>], iteration_bounds = array<i64: 4>, scalar_prefetch = 0 : i64, scratch_operands = 0 : i64, tpu.core_type = #tpu.core_type<tc>, window_params = [{transform_indices = @transform_0, window_bounds = array<i64: 1, 8, 32>}, {transform_indices = @transform_1, window_bounds = array<i64: 1, 8, 32>}, {transform_indices = @transform_2, window_bounds = array<i64: 1, 8, 32>}, {pipeline_mode = #tpu.pipeline_mode<synchronous>, transform_indices = @transform_3, window_bounds = array<i64: 1, 32>}, {pipeline_mode = #tpu.pipeline_mode<synchronous>, transform_indices = @transform_4, window_bounds = array<i64: 1, 32>}, {pipeline_mode = #tpu.pipeline_mode<synchronous>, transform_indices = @transform_5, window_bounds = array<i64: 32, 96>}, {pipeline_mode = #tpu.pipeline_mode<synchronous>, transform_indices = @transform_6, window_bounds = array<i64: 1, 96>}, {pipeline_mode = #tpu.pipeline_mode<synchronous>, transform_indices = @transform_7, window_bounds = array<i64: 32, 32>}, {pipeline_mode = #tpu.pipeline_mode<synchronous>, transform_indices = @transform_8, window_bounds = array<i64: 1, 32>}, {pipeline_mode = #tpu.pipeline_mode<synchronous>, transform_indices = @transform_9, window_bounds = array<i64: 1, 32>}, {pipeline_mode = #tpu.pipeline_mode<synchronous>, transform_indices = @transform_10, window_bounds = array<i64: 1, 32>}, {pipeline_mode = #tpu.pipeline_mode<synchronous>, transform_indices = @transform_11, window_bounds = array<i64: 32, 32>}, {pipeline_mode = #tpu.pipeline_mode<synchronous>, transform_indices = @transform_12, window_bounds = array<i64: 1, 32>}, {pipeline_mode = #tpu.pipeline_mode<synchronous>, transform_indices = @transform_13, window_bounds = array<i64: 32, 64>}, {pipeline_mode = #tpu.pipeline_mode<synchronous>, transform_indices = @transform_14, window_bounds = array<i64: 1, 64>}, {pipeline_mode = #tpu.pipeline_mode<synchronous>, transform_indices = @transform_15, window_bounds = array<i64: 32, 32>}, {pipeline_mode = #tpu.pipeline_mode<synchronous>, transform_indices = @transform_16, window_bounds = array<i64: 1, 32>}, {pipeline_mode = #tpu.pipeline_mode<synchronous>, transform_indices = @transform_17, window_bounds = array<i64: 32, 32>}, {pipeline_mode = #tpu.pipeline_mode<synchronous>, transform_indices = @transform_18, window_bounds = array<i64: 32, 32>}, {pipeline_mode = #tpu.pipeline_mode<synchronous>, transform_indices = @transform_19, window_bounds = array<i64: 1, 32>}, {pipeline_mode = #tpu.pipeline_mode<synchronous>, transform_indices = @transform_20, window_bounds = array<i64: 1, 32>}, {pipeline_mode = #tpu.pipeline_mode<synchronous>, transform_indices = @transform_21, window_bounds = array<i64: 1, 32>}, {pipeline_mode = #tpu.pipeline_mode<synchronous>, transform_indices = @transform_22, window_bounds = array<i64: 32, 32>}, {pipeline_mode = #tpu.pipeline_mode<synchronous>, transform_indices = @transform_23, window_bounds = array<i64: 1, 32>}, {pipeline_mode = #tpu.pipeline_mode<synchronous>, transform_indices = @transform_24, window_bounds = array<i64: 32, 64>}, {pipeline_mode = #tpu.pipeline_mode<synchronous>, transform_indices = @transform_25, window_bounds = array<i64: 1, 64>}, {pipeline_mode = #tpu.pipeline_mode<synchronous>, transform_indices = @transform_26, window_bounds = array<i64: 32, 32>}, {pipeline_mode = #tpu.pipeline_mode<synchronous>, transform_indices = @transform_27, window_bounds = array<i64: 1, 32>}, {pipeline_mode = #tpu.pipeline_mode<synchronous>, transform_indices = @transform_28, window_bounds = array<i64: 32, 32>}, {pipeline_mode = #tpu.pipeline_mode<synchronous>, transform_indices = @transform_29, window_bounds = array<i64: 32, 32>}, {pipeline_mode = #tpu.pipeline_mode<synchronous>, transform_indices = @transform_30, window_bounds = array<i64: 1, 32>}, {pipeline_mode = #tpu.pipeline_mode<synchronous>, transform_indices = @transform_31, window_bounds = array<i64: 1, 32>}, {pipeline_mode = #tpu.pipeline_mode<synchronous>, transform_indices = @transform_32, window_bounds = array<i64: 1, 32>}, {pipeline_mode = #tpu.pipeline_mode<synchronous>, transform_indices = @transform_33, window_bounds = array<i64: 32, 128>}, {pipeline_mode = #tpu.pipeline_mode<synchronous>, transform_indices = @transform_34, window_bounds = array<i64: 1, 128>}, {pipeline_mode = #tpu.pipeline_mode<synchronous>, transform_indices = @transform_35, window_bounds = array<i64: 128, 32>}, {pipeline_mode = #tpu.pipeline_mode<synchronous>, transform_indices = @transform_36, window_bounds = array<i64: 1, 32>}, {pipeline_mode = #tpu.pipeline_mode<synchronous>, transform_indices = @transform_37, window_bounds = array<i64: 1, 32>}, {pipeline_mode = #tpu.pipeline_mode<synchronous>, transform_indices = @transform_38, window_bounds = array<i64: 1, 32>}, {transform_indices = @transform_39, window_bounds = array<i64: 1, 8, 32>}]} {
    %c0 = arith.constant 0 : index
    %c0_0 = arith.constant 0 : index
    %c0_1 = arith.constant 0 : index
    %0 = vector.load %arg1[%c0, %c0_0, %c0_1] : memref<1x8x32xbf16, #tpu.memory_space<vmem>>, vector<1x8x32xbf16>
    %1 = vector.shape_cast %0 : vector<1x8x32xbf16> to vector<8x32xbf16>
    %2 = arith.extf %1 : vector<8x32xbf16> to vector<8x32xf32>
    %c0_2 = arith.constant 0 : index
    %c0_3 = arith.constant 0 : index
    %3 = vector.load %arg4[%c0_2, %c0_3] : memref<1x32xf32, #tpu.memory_space<vmem>>, vector<1x32xf32>
    %c0_4 = arith.constant 0 : index
    %c0_5 = arith.constant 0 : index
    %4 = vector.load %arg5[%c0_4, %c0_5] : memref<1x32xf32, #tpu.memory_space<vmem>>, vector<1x32xf32>
    %cst = arith.constant dense<0.000000e+00> : vector<8xf32>
    %5 = vector.multi_reduction <add>, %2, %cst [1] : vector<8x32xf32> to vector<8xf32>
    %6 = vector.shape_cast %5 : vector<8xf32> to vector<8x1xf32>
    %cst_6 = arith.constant 3.200000e+01 : f32
    %7 = vector.broadcast %cst_6 : f32 to vector<8x1xf32>
    %8 = arith.divf %6, %7 : vector<8x1xf32>
    %9 = vector.broadcast %8 : vector<8x1xf32> to vector<8x32xf32>
    %10 = arith.subf %2, %9 : vector<8x32xf32>
    %11 = arith.mulf %10, %10 : vector<8x32xf32>
    %cst_7 = arith.constant dense<0.000000e+00> : vector<8xf32>
    %12 = vector.multi_reduction <add>, %11, %cst_7 [1] : vector<8x32xf32> to vector<8xf32>
    %13 = vector.shape_cast %12 : vector<8xf32> to vector<8x1xf32>
    %cst_8 = arith.constant 3.200000e+01 : f32
    %14 = vector.broadcast %cst_8 : f32 to vector<8x1xf32>
    %15 = arith.divf %13, %14 : vector<8x1xf32>
    %cst_9 = arith.constant 9.99999997E-7 : f32
    %16 = vector.broadcast %cst_9 : f32 to vector<8x1xf32>
    %17 = arith.addf %15, %16 : vector<8x1xf32>
    %18 = math.rsqrt %17 : vector<8x1xf32>
    %19 = vector.broadcast %18 : vector<8x1xf32> to vector<8x32xf32>
    %20 = arith.mulf %10, %19 : vector<8x32xf32>
    %21 = vector.broadcast %3 : vector<1x32xf32> to vector<8x32xf32>
    %22 = arith.mulf %20, %21 : vector<8x32xf32>
    %23 = vector.broadcast %4 : vector<1x32xf32> to vector<8x32xf32>
    %24 = arith.addf %22, %23 : vector<8x32xf32>
    %25 = arith.truncf %24 : vector<8x32xf32> to vector<8x32xbf16>
    %c0_10 = arith.constant 0 : index
    %c0_11 = arith.constant 0 : index
    %26 = vector.load %arg6[%c0_10, %c0_11] : memref<32x96xbf16, #tpu.memory_space<vmem>>, vector<32x96xbf16>
    %cst_12 = arith.constant dense<0.000000e+00> : vector<8x96xf32>
    %27 = tpu.matmul %25, %26, %cst_12 {dimension_numbers = #tpu.dot_dimension_numbers<[1], [0], [0], [1], [0, 0, 1, 1], [], []>} : vector<8x32xbf16>, vector<32x96xbf16>, vector<8x96xf32> -> vector<8x96xf32>
    %c0_13 = arith.constant 0 : index
    %c0_14 = arith.constant 0 : index
    %28 = vector.load %arg7[%c0_13, %c0_14] : memref<1x96xf32, #tpu.memory_space<vmem>>, vector<1x96xf32>
    %29 = vector.broadcast %28 : vector<1x96xf32> to vector<8x96xf32>
    %30 = arith.addf %27, %29 : vector<8x96xf32>
    %31 = vector.extract_strided_slice %30 {offsets = [0, 0], sizes = [8, 32], strides = [1, 1]} : vector<8x96xf32> to vector<8x32xf32>
    %32 = vector.extract_strided_slice %30 {offsets = [0, 32], sizes = [8, 32], strides = [1, 1]} : vector<8x96xf32> to vector<8x32xf32>
    %33 = vector.extract_strided_slice %30 {offsets = [0, 64], sizes = [8, 32], strides = [1, 1]} : vector<8x96xf32> to vector<8x32xf32>
    %c0_15 = arith.constant 0 : index
    %c0_16 = arith.constant 0 : index
    %34 = vector.load %arg8[%c0_15, %c0_16] : memref<32x32xbf16, #tpu.memory_space<vmem>>, vector<32x32xbf16>
    %c0_17 = arith.constant 0 : index
    %c0_18 = arith.constant 0 : index
    %35 = vector.load %arg9[%c0_17, %c0_18] : memref<1x32xf32, #tpu.memory_space<vmem>>, vector<1x32xf32>
    %36 = vector.extract_strided_slice %31 {offsets = [0, 0], sizes = [8, 8], strides = [1, 1]} : vector<8x32xf32> to vector<8x8xf32>
    %37 = arith.truncf %36 : vector<8x8xf32> to vector<8x8xbf16>
    %38 = vector.extract_strided_slice %32 {offsets = [0, 0], sizes = [8, 8], strides = [1, 1]} : vector<8x32xf32> to vector<8x8xf32>
    %39 = arith.truncf %38 : vector<8x8xf32> to vector<8x8xbf16>
    %40 = vector.extract_strided_slice %33 {offsets = [0, 0], sizes = [8, 8], strides = [1, 1]} : vector<8x32xf32> to vector<8x8xf32>
    %41 = arith.truncf %40 : vector<8x8xf32> to vector<8x8xbf16>
    %42 = tpu.transpose %39, [1, 0] : vector<8x8xbf16> -> vector<8x8xbf16>
    %cst_19 = arith.constant dense<0.000000e+00> : vector<8x8xf32>
    %43 = tpu.matmul %37, %42, %cst_19 {dimension_numbers = #tpu.dot_dimension_numbers<[1], [0], [0], [1], [0, 0, 1, 1], [], []>} : vector<8x8xbf16>, vector<8x8xbf16>, vector<8x8xf32> -> vector<8x8xf32>
    %cst_20 = arith.constant dense<0xFF800000> : vector<8xf32>
    %44 = vector.multi_reduction <maximumf>, %43, %cst_20 [1] : vector<8x8xf32> to vector<8xf32>
    %45 = vector.shape_cast %44 : vector<8xf32> to vector<8x1xf32>
    %46 = vector.broadcast %45 : vector<8x1xf32> to vector<8x8xf32>
    %47 = arith.subf %43, %46 : vector<8x8xf32>
    %48 = math.exp %47 : vector<8x8xf32>
    %cst_21 = arith.constant dense<0.000000e+00> : vector<8xf32>
    %49 = vector.multi_reduction <add>, %48, %cst_21 [1] : vector<8x8xf32> to vector<8xf32>
    %50 = vector.shape_cast %49 : vector<8xf32> to vector<8x1xf32>
    %51 = tpu.reciprocal %50 {approx = true} : vector<8x1xf32> -> vector<8x1xf32>
    %52 = vector.broadcast %51 : vector<8x1xf32> to vector<8x8xf32>
    %53 = arith.mulf %48, %52 : vector<8x8xf32>
    %54 = arith.truncf %53 : vector<8x8xf32> to vector<8x8xbf16>
    %cst_22 = arith.constant dense<0.000000e+00> : vector<8x8xf32>
    %55 = tpu.matmul %54, %41, %cst_22 {dimension_numbers = #tpu.dot_dimension_numbers<[1], [0], [0], [1], [0, 0, 1, 1], [], []>} : vector<8x8xbf16>, vector<8x8xbf16>, vector<8x8xf32> -> vector<8x8xf32>
    %56 = vector.extract_strided_slice %31 {offsets = [0, 8], sizes = [8, 8], strides = [1, 1]} : vector<8x32xf32> to vector<8x8xf32>
    %57 = arith.truncf %56 : vector<8x8xf32> to vector<8x8xbf16>
    %58 = vector.extract_strided_slice %32 {offsets = [0, 8], sizes = [8, 8], strides = [1, 1]} : vector<8x32xf32> to vector<8x8xf32>
    %59 = arith.truncf %58 : vector<8x8xf32> to vector<8x8xbf16>
    %60 = vector.extract_strided_slice %33 {offsets = [0, 8], sizes = [8, 8], strides = [1, 1]} : vector<8x32xf32> to vector<8x8xf32>
    %61 = arith.truncf %60 : vector<8x8xf32> to vector<8x8xbf16>
    %62 = tpu.transpose %59, [1, 0] : vector<8x8xbf16> -> vector<8x8xbf16>
    %cst_23 = arith.constant dense<0.000000e+00> : vector<8x8xf32>
    %63 = tpu.matmul %57, %62, %cst_23 {dimension_numbers = #tpu.dot_dimension_numbers<[1], [0], [0], [1], [0, 0, 1, 1], [], []>} : vector<8x8xbf16>, vector<8x8xbf16>, vector<8x8xf32> -> vector<8x8xf32>
    %cst_24 = arith.constant dense<0xFF800000> : vector<8xf32>
    %64 = vector.multi_reduction <maximumf>, %63, %cst_24 [1] : vector<8x8xf32> to vector<8xf32>
    %65 = vector.shape_cast %64 : vector<8xf32> to vector<8x1xf32>
    %66 = vector.broadcast %65 : vector<8x1xf32> to vector<8x8xf32>
    %67 = arith.subf %63, %66 : vector<8x8xf32>
    %68 = math.exp %67 : vector<8x8xf32>
    %cst_25 = arith.constant dense<0.000000e+00> : vector<8xf32>
    %69 = vector.multi_reduction <add>, %68, %cst_25 [1] : vector<8x8xf32> to vector<8xf32>
    %70 = vector.shape_cast %69 : vector<8xf32> to vector<8x1xf32>
    %71 = tpu.reciprocal %70 {approx = true} : vector<8x1xf32> -> vector<8x1xf32>
    %72 = vector.broadcast %71 : vector<8x1xf32> to vector<8x8xf32>
    %73 = arith.mulf %68, %72 : vector<8x8xf32>
    %74 = arith.truncf %73 : vector<8x8xf32> to vector<8x8xbf16>
    %cst_26 = arith.constant dense<0.000000e+00> : vector<8x8xf32>
    %75 = tpu.matmul %74, %61, %cst_26 {dimension_numbers = #tpu.dot_dimension_numbers<[1], [0], [0], [1], [0, 0, 1, 1], [], []>} : vector<8x8xbf16>, vector<8x8xbf16>, vector<8x8xf32> -> vector<8x8xf32>
    %76 = vector.extract_strided_slice %31 {offsets = [0, 16], sizes = [8, 8], strides = [1, 1]} : vector<8x32xf32> to vector<8x8xf32>
    %77 = arith.truncf %76 : vector<8x8xf32> to vector<8x8xbf16>
    %78 = vector.extract_strided_slice %32 {offsets = [0, 16], sizes = [8, 8], strides = [1, 1]} : vector<8x32xf32> to vector<8x8xf32>
    %79 = arith.truncf %78 : vector<8x8xf32> to vector<8x8xbf16>
    %80 = vector.extract_strided_slice %33 {offsets = [0, 16], sizes = [8, 8], strides = [1, 1]} : vector<8x32xf32> to vector<8x8xf32>
    %81 = arith.truncf %80 : vector<8x8xf32> to vector<8x8xbf16>
    %82 = tpu.transpose %79, [1, 0] : vector<8x8xbf16> -> vector<8x8xbf16>
    %cst_27 = arith.constant dense<0.000000e+00> : vector<8x8xf32>
    %83 = tpu.matmul %77, %82, %cst_27 {dimension_numbers = #tpu.dot_dimension_numbers<[1], [0], [0], [1], [0, 0, 1, 1], [], []>} : vector<8x8xbf16>, vector<8x8xbf16>, vector<8x8xf32> -> vector<8x8xf32>
    %cst_28 = arith.constant dense<0xFF800000> : vector<8xf32>
    %84 = vector.multi_reduction <maximumf>, %83, %cst_28 [1] : vector<8x8xf32> to vector<8xf32>
    %85 = vector.shape_cast %84 : vector<8xf32> to vector<8x1xf32>
    %86 = vector.broadcast %85 : vector<8x1xf32> to vector<8x8xf32>
    %87 = arith.subf %83, %86 : vector<8x8xf32>
    %88 = math.exp %87 : vector<8x8xf32>
    %cst_29 = arith.constant dense<0.000000e+00> : vector<8xf32>
    %89 = vector.multi_reduction <add>, %88, %cst_29 [1] : vector<8x8xf32> to vector<8xf32>
    %90 = vector.shape_cast %89 : vector<8xf32> to vector<8x1xf32>
    %91 = tpu.reciprocal %90 {approx = true} : vector<8x1xf32> -> vector<8x1xf32>
    %92 = vector.broadcast %91 : vector<8x1xf32> to vector<8x8xf32>
    %93 = arith.mulf %88, %92 : vector<8x8xf32>
    %94 = arith.truncf %93 : vector<8x8xf32> to vector<8x8xbf16>
    %cst_30 = arith.constant dense<0.000000e+00> : vector<8x8xf32>
    %95 = tpu.matmul %94, %81, %cst_30 {dimension_numbers = #tpu.dot_dimension_numbers<[1], [0], [0], [1], [0, 0, 1, 1], [], []>} : vector<8x8xbf16>, vector<8x8xbf16>, vector<8x8xf32> -> vector<8x8xf32>
    %96 = vector.extract_strided_slice %31 {offsets = [0, 24], sizes = [8, 8], strides = [1, 1]} : vector<8x32xf32> to vector<8x8xf32>
    %97 = arith.truncf %96 : vector<8x8xf32> to vector<8x8xbf16>
    %98 = vector.extract_strided_slice %32 {offsets = [0, 24], sizes = [8, 8], strides = [1, 1]} : vector<8x32xf32> to vector<8x8xf32>
    %99 = arith.truncf %98 : vector<8x8xf32> to vector<8x8xbf16>
    %100 = vector.extract_strided_slice %33 {offsets = [0, 24], sizes = [8, 8], strides = [1, 1]} : vector<8x32xf32> to vector<8x8xf32>
    %101 = arith.truncf %100 : vector<8x8xf32> to vector<8x8xbf16>
    %102 = tpu.transpose %99, [1, 0] : vector<8x8xbf16> -> vector<8x8xbf16>
    %cst_31 = arith.constant dense<0.000000e+00> : vector<8x8xf32>
    %103 = tpu.matmul %97, %102, %cst_31 {dimension_numbers = #tpu.dot_dimension_numbers<[1], [0], [0], [1], [0, 0, 1, 1], [], []>} : vector<8x8xbf16>, vector<8x8xbf16>, vector<8x8xf32> -> vector<8x8xf32>
    %cst_32 = arith.constant dense<0xFF800000> : vector<8xf32>
    %104 = vector.multi_reduction <maximumf>, %103, %cst_32 [1] : vector<8x8xf32> to vector<8xf32>
    %105 = vector.shape_cast %104 : vector<8xf32> to vector<8x1xf32>
    %106 = vector.broadcast %105 : vector<8x1xf32> to vector<8x8xf32>
    %107 = arith.subf %103, %106 : vector<8x8xf32>
    %108 = math.exp %107 : vector<8x8xf32>
    %cst_33 = arith.constant dense<0.000000e+00> : vector<8xf32>
    %109 = vector.multi_reduction <add>, %108, %cst_33 [1] : vector<8x8xf32> to vector<8xf32>
    %110 = vector.shape_cast %109 : vector<8xf32> to vector<8x1xf32>
    %111 = tpu.reciprocal %110 {approx = true} : vector<8x1xf32> -> vector<8x1xf32>
    %112 = vector.broadcast %111 : vector<8x1xf32> to vector<8x8xf32>
    %113 = arith.mulf %108, %112 : vector<8x8xf32>
    %114 = arith.truncf %113 : vector<8x8xf32> to vector<8x8xbf16>
    %cst_34 = arith.constant dense<0.000000e+00> : vector<8x8xf32>
    %115 = tpu.matmul %114, %101, %cst_34 {dimension_numbers = #tpu.dot_dimension_numbers<[1], [0], [0], [1], [0, 0, 1, 1], [], []>} : vector<8x8xbf16>, vector<8x8xbf16>, vector<8x8xf32> -> vector<8x8xf32>
    %116 = tpu.concatenate %55, %75, %95, %115 in 1 : vector<8x8xf32>, vector<8x8xf32>, vector<8x8xf32>, vector<8x8xf32> -> vector<8x32xf32>
    %117 = arith.truncf %116 : vector<8x32xf32> to vector<8x32xbf16>
    %cst_35 = arith.constant dense<0.000000e+00> : vector<8x32xf32>
    %118 = tpu.matmul %117, %34, %cst_35 {dimension_numbers = #tpu.dot_dimension_numbers<[1], [0], [0], [1], [0, 0, 1, 1], [], []>} : vector<8x32xbf16>, vector<32x32xbf16>, vector<8x32xf32> -> vector<8x32xf32>
    %119 = vector.broadcast %35 : vector<1x32xf32> to vector<8x32xf32>
    %120 = arith.addf %118, %119 : vector<8x32xf32>
    %121 = arith.addf %120, %2 : vector<8x32xf32>
    %c0_36 = arith.constant 0 : index
    %c0_37 = arith.constant 0 : index
    %c0_38 = arith.constant 0 : index
    %122 = vector.load %arg2[%c0_36, %c0_37, %c0_38] : memref<1x8x32xbf16, #tpu.memory_space<vmem>>, vector<1x8x32xbf16>
    %123 = vector.shape_cast %122 : vector<1x8x32xbf16> to vector<8x32xbf16>
    %124 = arith.extf %123 : vector<8x32xbf16> to vector<8x32xf32>
    %c0_39 = arith.constant 0 : index
    %c0_40 = arith.constant 0 : index
    %125 = vector.load %arg10[%c0_39, %c0_40] : memref<1x32xf32, #tpu.memory_space<vmem>>, vector<1x32xf32>
    %c0_41 = arith.constant 0 : index
    %c0_42 = arith.constant 0 : index
    %126 = vector.load %arg11[%c0_41, %c0_42] : memref<1x32xf32, #tpu.memory_space<vmem>>, vector<1x32xf32>
    %cst_43 = arith.constant dense<0.000000e+00> : vector<8xf32>
    %127 = vector.multi_reduction <add>, %121, %cst_43 [1] : vector<8x32xf32> to vector<8xf32>
    %128 = vector.shape_cast %127 : vector<8xf32> to vector<8x1xf32>
    %cst_44 = arith.constant 3.200000e+01 : f32
    %129 = vector.broadcast %cst_44 : f32 to vector<8x1xf32>
    %130 = arith.divf %128, %129 : vector<8x1xf32>
    %131 = vector.broadcast %130 : vector<8x1xf32> to vector<8x32xf32>
    %132 = arith.subf %121, %131 : vector<8x32xf32>
    %133 = arith.mulf %132, %132 : vector<8x32xf32>
    %cst_45 = arith.constant dense<0.000000e+00> : vector<8xf32>
    %134 = vector.multi_reduction <add>, %133, %cst_45 [1] : vector<8x32xf32> to vector<8xf32>
    %135 = vector.shape_cast %134 : vector<8xf32> to vector<8x1xf32>
    %cst_46 = arith.constant 3.200000e+01 : f32
    %136 = vector.broadcast %cst_46 : f32 to vector<8x1xf32>
    %137 = arith.divf %135, %136 : vector<8x1xf32>
    %cst_47 = arith.constant 9.99999997E-7 : f32
    %138 = vector.broadcast %cst_47 : f32 to vector<8x1xf32>
    %139 = arith.addf %137, %138 : vector<8x1xf32>
    %140 = math.rsqrt %139 : vector<8x1xf32>
    %141 = vector.broadcast %140 : vector<8x1xf32> to vector<8x32xf32>
    %142 = arith.mulf %132, %141 : vector<8x32xf32>
    %143 = vector.broadcast %125 : vector<1x32xf32> to vector<8x32xf32>
    %144 = arith.mulf %142, %143 : vector<8x32xf32>
    %145 = vector.broadcast %126 : vector<1x32xf32> to vector<8x32xf32>
    %146 = arith.addf %144, %145 : vector<8x32xf32>
    %147 = arith.truncf %146 : vector<8x32xf32> to vector<8x32xbf16>
    %c0_48 = arith.constant 0 : index
    %c0_49 = arith.constant 0 : index
    %148 = vector.load %arg12[%c0_48, %c0_49] : memref<32x32xbf16, #tpu.memory_space<vmem>>, vector<32x32xbf16>
    %cst_50 = arith.constant dense<0.000000e+00> : vector<8x32xf32>
    %149 = tpu.matmul %147, %148, %cst_50 {dimension_numbers = #tpu.dot_dimension_numbers<[1], [0], [0], [1], [0, 0, 1, 1], [], []>} : vector<8x32xbf16>, vector<32x32xbf16>, vector<8x32xf32> -> vector<8x32xf32>
    %c0_51 = arith.constant 0 : index
    %c0_52 = arith.constant 0 : index
    %150 = vector.load %arg13[%c0_51, %c0_52] : memref<1x32xf32, #tpu.memory_space<vmem>>, vector<1x32xf32>
    %151 = vector.broadcast %150 : vector<1x32xf32> to vector<8x32xf32>
    %152 = arith.addf %149, %151 : vector<8x32xf32>
    %153 = arith.truncf %124 : vector<8x32xf32> to vector<8x32xbf16>
    %c0_53 = arith.constant 0 : index
    %c0_54 = arith.constant 0 : index
    %154 = vector.load %arg14[%c0_53, %c0_54] : memref<32x64xbf16, #tpu.memory_space<vmem>>, vector<32x64xbf16>
    %cst_55 = arith.constant dense<0.000000e+00> : vector<8x64xf32>
    %155 = tpu.matmul %153, %154, %cst_55 {dimension_numbers = #tpu.dot_dimension_numbers<[1], [0], [0], [1], [0, 0, 1, 1], [], []>} : vector<8x32xbf16>, vector<32x64xbf16>, vector<8x64xf32> -> vector<8x64xf32>
    %c0_56 = arith.constant 0 : index
    %c0_57 = arith.constant 0 : index
    %156 = vector.load %arg15[%c0_56, %c0_57] : memref<1x64xf32, #tpu.memory_space<vmem>>, vector<1x64xf32>
    %157 = vector.broadcast %156 : vector<1x64xf32> to vector<8x64xf32>
    %158 = arith.addf %155, %157 : vector<8x64xf32>
    %159 = vector.extract_strided_slice %158 {offsets = [0, 0], sizes = [8, 32], strides = [1, 1]} : vector<8x64xf32> to vector<8x32xf32>
    %160 = vector.extract_strided_slice %158 {offsets = [0, 32], sizes = [8, 32], strides = [1, 1]} : vector<8x64xf32> to vector<8x32xf32>
    %c0_58 = arith.constant 0 : index
    %c0_59 = arith.constant 0 : index
    %161 = vector.load %arg16[%c0_58, %c0_59] : memref<32x32xbf16, #tpu.memory_space<vmem>>, vector<32x32xbf16>
    %c0_60 = arith.constant 0 : index
    %c0_61 = arith.constant 0 : index
    %162 = vector.load %arg17[%c0_60, %c0_61] : memref<1x32xf32, #tpu.memory_space<vmem>>, vector<1x32xf32>
    %163 = vector.extract_strided_slice %152 {offsets = [0, 0], sizes = [8, 8], strides = [1, 1]} : vector<8x32xf32> to vector<8x8xf32>
    %164 = arith.truncf %163 : vector<8x8xf32> to vector<8x8xbf16>
    %165 = vector.extract_strided_slice %159 {offsets = [0, 0], sizes = [8, 8], strides = [1, 1]} : vector<8x32xf32> to vector<8x8xf32>
    %166 = arith.truncf %165 : vector<8x8xf32> to vector<8x8xbf16>
    %167 = vector.extract_strided_slice %160 {offsets = [0, 0], sizes = [8, 8], strides = [1, 1]} : vector<8x32xf32> to vector<8x8xf32>
    %168 = arith.truncf %167 : vector<8x8xf32> to vector<8x8xbf16>
    %169 = tpu.transpose %166, [1, 0] : vector<8x8xbf16> -> vector<8x8xbf16>
    %cst_62 = arith.constant dense<0.000000e+00> : vector<8x8xf32>
    %170 = tpu.matmul %164, %169, %cst_62 {dimension_numbers = #tpu.dot_dimension_numbers<[1], [0], [0], [1], [0, 0, 1, 1], [], []>} : vector<8x8xbf16>, vector<8x8xbf16>, vector<8x8xf32> -> vector<8x8xf32>
    %cst_63 = arith.constant dense<0xFF800000> : vector<8xf32>
    %171 = vector.multi_reduction <maximumf>, %170, %cst_63 [1] : vector<8x8xf32> to vector<8xf32>
    %172 = vector.shape_cast %171 : vector<8xf32> to vector<8x1xf32>
    %173 = vector.broadcast %172 : vector<8x1xf32> to vector<8x8xf32>
    %174 = arith.subf %170, %173 : vector<8x8xf32>
    %175 = math.exp %174 : vector<8x8xf32>
    %cst_64 = arith.constant dense<0.000000e+00> : vector<8xf32>
    %176 = vector.multi_reduction <add>, %175, %cst_64 [1] : vector<8x8xf32> to vector<8xf32>
    %177 = vector.shape_cast %176 : vector<8xf32> to vector<8x1xf32>
    %178 = tpu.reciprocal %177 {approx = true} : vector<8x1xf32> -> vector<8x1xf32>
    %179 = vector.broadcast %178 : vector<8x1xf32> to vector<8x8xf32>
    %180 = arith.mulf %175, %179 : vector<8x8xf32>
    %181 = arith.truncf %180 : vector<8x8xf32> to vector<8x8xbf16>
    %cst_65 = arith.constant dense<0.000000e+00> : vector<8x8xf32>
    %182 = tpu.matmul %181, %168, %cst_65 {dimension_numbers = #tpu.dot_dimension_numbers<[1], [0], [0], [1], [0, 0, 1, 1], [], []>} : vector<8x8xbf16>, vector<8x8xbf16>, vector<8x8xf32> -> vector<8x8xf32>
    %183 = vector.extract_strided_slice %152 {offsets = [0, 8], sizes = [8, 8], strides = [1, 1]} : vector<8x32xf32> to vector<8x8xf32>
    %184 = arith.truncf %183 : vector<8x8xf32> to vector<8x8xbf16>
    %185 = vector.extract_strided_slice %159 {offsets = [0, 8], sizes = [8, 8], strides = [1, 1]} : vector<8x32xf32> to vector<8x8xf32>
    %186 = arith.truncf %185 : vector<8x8xf32> to vector<8x8xbf16>
    %187 = vector.extract_strided_slice %160 {offsets = [0, 8], sizes = [8, 8], strides = [1, 1]} : vector<8x32xf32> to vector<8x8xf32>
    %188 = arith.truncf %187 : vector<8x8xf32> to vector<8x8xbf16>
    %189 = tpu.transpose %186, [1, 0] : vector<8x8xbf16> -> vector<8x8xbf16>
    %cst_66 = arith.constant dense<0.000000e+00> : vector<8x8xf32>
    %190 = tpu.matmul %184, %189, %cst_66 {dimension_numbers = #tpu.dot_dimension_numbers<[1], [0], [0], [1], [0, 0, 1, 1], [], []>} : vector<8x8xbf16>, vector<8x8xbf16>, vector<8x8xf32> -> vector<8x8xf32>
    %cst_67 = arith.constant dense<0xFF800000> : vector<8xf32>
    %191 = vector.multi_reduction <maximumf>, %190, %cst_67 [1] : vector<8x8xf32> to vector<8xf32>
    %192 = vector.shape_cast %191 : vector<8xf32> to vector<8x1xf32>
    %193 = vector.broadcast %192 : vector<8x1xf32> to vector<8x8xf32>
    %194 = arith.subf %190, %193 : vector<8x8xf32>
    %195 = math.exp %194 : vector<8x8xf32>
    %cst_68 = arith.constant dense<0.000000e+00> : vector<8xf32>
    %196 = vector.multi_reduction <add>, %195, %cst_68 [1] : vector<8x8xf32> to vector<8xf32>
    %197 = vector.shape_cast %196 : vector<8xf32> to vector<8x1xf32>
    %198 = tpu.reciprocal %197 {approx = true} : vector<8x1xf32> -> vector<8x1xf32>
    %199 = vector.broadcast %198 : vector<8x1xf32> to vector<8x8xf32>
    %200 = arith.mulf %195, %199 : vector<8x8xf32>
    %201 = arith.truncf %200 : vector<8x8xf32> to vector<8x8xbf16>
    %cst_69 = arith.constant dense<0.000000e+00> : vector<8x8xf32>
    %202 = tpu.matmul %201, %188, %cst_69 {dimension_numbers = #tpu.dot_dimension_numbers<[1], [0], [0], [1], [0, 0, 1, 1], [], []>} : vector<8x8xbf16>, vector<8x8xbf16>, vector<8x8xf32> -> vector<8x8xf32>
    %203 = vector.extract_strided_slice %152 {offsets = [0, 16], sizes = [8, 8], strides = [1, 1]} : vector<8x32xf32> to vector<8x8xf32>
    %204 = arith.truncf %203 : vector<8x8xf32> to vector<8x8xbf16>
    %205 = vector.extract_strided_slice %159 {offsets = [0, 16], sizes = [8, 8], strides = [1, 1]} : vector<8x32xf32> to vector<8x8xf32>
    %206 = arith.truncf %205 : vector<8x8xf32> to vector<8x8xbf16>
    %207 = vector.extract_strided_slice %160 {offsets = [0, 16], sizes = [8, 8], strides = [1, 1]} : vector<8x32xf32> to vector<8x8xf32>
    %208 = arith.truncf %207 : vector<8x8xf32> to vector<8x8xbf16>
    %209 = tpu.transpose %206, [1, 0] : vector<8x8xbf16> -> vector<8x8xbf16>
    %cst_70 = arith.constant dense<0.000000e+00> : vector<8x8xf32>
    %210 = tpu.matmul %204, %209, %cst_70 {dimension_numbers = #tpu.dot_dimension_numbers<[1], [0], [0], [1], [0, 0, 1, 1], [], []>} : vector<8x8xbf16>, vector<8x8xbf16>, vector<8x8xf32> -> vector<8x8xf32>
    %cst_71 = arith.constant dense<0xFF800000> : vector<8xf32>
    %211 = vector.multi_reduction <maximumf>, %210, %cst_71 [1] : vector<8x8xf32> to vector<8xf32>
    %212 = vector.shape_cast %211 : vector<8xf32> to vector<8x1xf32>
    %213 = vector.broadcast %212 : vector<8x1xf32> to vector<8x8xf32>
    %214 = arith.subf %210, %213 : vector<8x8xf32>
    %215 = math.exp %214 : vector<8x8xf32>
    %cst_72 = arith.constant dense<0.000000e+00> : vector<8xf32>
    %216 = vector.multi_reduction <add>, %215, %cst_72 [1] : vector<8x8xf32> to vector<8xf32>
    %217 = vector.shape_cast %216 : vector<8xf32> to vector<8x1xf32>
    %218 = tpu.reciprocal %217 {approx = true} : vector<8x1xf32> -> vector<8x1xf32>
    %219 = vector.broadcast %218 : vector<8x1xf32> to vector<8x8xf32>
    %220 = arith.mulf %215, %219 : vector<8x8xf32>
    %221 = arith.truncf %220 : vector<8x8xf32> to vector<8x8xbf16>
    %cst_73 = arith.constant dense<0.000000e+00> : vector<8x8xf32>
    %222 = tpu.matmul %221, %208, %cst_73 {dimension_numbers = #tpu.dot_dimension_numbers<[1], [0], [0], [1], [0, 0, 1, 1], [], []>} : vector<8x8xbf16>, vector<8x8xbf16>, vector<8x8xf32> -> vector<8x8xf32>
    %223 = vector.extract_strided_slice %152 {offsets = [0, 24], sizes = [8, 8], strides = [1, 1]} : vector<8x32xf32> to vector<8x8xf32>
    %224 = arith.truncf %223 : vector<8x8xf32> to vector<8x8xbf16>
    %225 = vector.extract_strided_slice %159 {offsets = [0, 24], sizes = [8, 8], strides = [1, 1]} : vector<8x32xf32> to vector<8x8xf32>
    %226 = arith.truncf %225 : vector<8x8xf32> to vector<8x8xbf16>
    %227 = vector.extract_strided_slice %160 {offsets = [0, 24], sizes = [8, 8], strides = [1, 1]} : vector<8x32xf32> to vector<8x8xf32>
    %228 = arith.truncf %227 : vector<8x8xf32> to vector<8x8xbf16>
    %229 = tpu.transpose %226, [1, 0] : vector<8x8xbf16> -> vector<8x8xbf16>
    %cst_74 = arith.constant dense<0.000000e+00> : vector<8x8xf32>
    %230 = tpu.matmul %224, %229, %cst_74 {dimension_numbers = #tpu.dot_dimension_numbers<[1], [0], [0], [1], [0, 0, 1, 1], [], []>} : vector<8x8xbf16>, vector<8x8xbf16>, vector<8x8xf32> -> vector<8x8xf32>
    %cst_75 = arith.constant dense<0xFF800000> : vector<8xf32>
    %231 = vector.multi_reduction <maximumf>, %230, %cst_75 [1] : vector<8x8xf32> to vector<8xf32>
    %232 = vector.shape_cast %231 : vector<8xf32> to vector<8x1xf32>
    %233 = vector.broadcast %232 : vector<8x1xf32> to vector<8x8xf32>
    %234 = arith.subf %230, %233 : vector<8x8xf32>
    %235 = math.exp %234 : vector<8x8xf32>
    %cst_76 = arith.constant dense<0.000000e+00> : vector<8xf32>
    %236 = vector.multi_reduction <add>, %235, %cst_76 [1] : vector<8x8xf32> to vector<8xf32>
    %237 = vector.shape_cast %236 : vector<8xf32> to vector<8x1xf32>
    %238 = tpu.reciprocal %237 {approx = true} : vector<8x1xf32> -> vector<8x1xf32>
    %239 = vector.broadcast %238 : vector<8x1xf32> to vector<8x8xf32>
    %240 = arith.mulf %235, %239 : vector<8x8xf32>
    %241 = arith.truncf %240 : vector<8x8xf32> to vector<8x8xbf16>
    %cst_77 = arith.constant dense<0.000000e+00> : vector<8x8xf32>
    %242 = tpu.matmul %241, %228, %cst_77 {dimension_numbers = #tpu.dot_dimension_numbers<[1], [0], [0], [1], [0, 0, 1, 1], [], []>} : vector<8x8xbf16>, vector<8x8xbf16>, vector<8x8xf32> -> vector<8x8xf32>
    %243 = tpu.concatenate %182, %202, %222, %242 in 1 : vector<8x8xf32>, vector<8x8xf32>, vector<8x8xf32>, vector<8x8xf32> -> vector<8x32xf32>
    %244 = arith.truncf %243 : vector<8x32xf32> to vector<8x32xbf16>
    %cst_78 = arith.constant dense<0.000000e+00> : vector<8x32xf32>
    %245 = tpu.matmul %244, %161, %cst_78 {dimension_numbers = #tpu.dot_dimension_numbers<[1], [0], [0], [1], [0, 0, 1, 1], [], []>} : vector<8x32xbf16>, vector<32x32xbf16>, vector<8x32xf32> -> vector<8x32xf32>
    %246 = vector.broadcast %162 : vector<1x32xf32> to vector<8x32xf32>
    %247 = arith.addf %245, %246 : vector<8x32xf32>
    %248 = arith.truncf %247 : vector<8x32xf32> to vector<8x32xbf16>
    %c0_79 = arith.constant 0 : index
    %c0_80 = arith.constant 0 : index
    %249 = vector.load %arg18[%c0_79, %c0_80] : memref<32x32xbf16, #tpu.memory_space<vmem>>, vector<32x32xbf16>
    %cst_81 = arith.constant dense<0.000000e+00> : vector<8x32xf32>
    %250 = tpu.matmul %248, %249, %cst_81 {dimension_numbers = #tpu.dot_dimension_numbers<[1], [0], [0], [1], [0, 0, 1, 1], [], []>} : vector<8x32xbf16>, vector<32x32xbf16>, vector<8x32xf32> -> vector<8x32xf32>
    %251 = arith.truncf %121 : vector<8x32xf32> to vector<8x32xbf16>
    %c0_82 = arith.constant 0 : index
    %c0_83 = arith.constant 0 : index
    %252 = vector.load %arg19[%c0_82, %c0_83] : memref<32x32xbf16, #tpu.memory_space<vmem>>, vector<32x32xbf16>
    %cst_84 = arith.constant dense<0.000000e+00> : vector<8x32xf32>
    %253 = tpu.matmul %251, %252, %cst_84 {dimension_numbers = #tpu.dot_dimension_numbers<[1], [0], [0], [1], [0, 0, 1, 1], [], []>} : vector<8x32xbf16>, vector<32x32xbf16>, vector<8x32xf32> -> vector<8x32xf32>
    %254 = arith.addf %250, %253 : vector<8x32xf32>
    %c0_85 = arith.constant 0 : index
    %c0_86 = arith.constant 0 : index
    %255 = vector.load %arg20[%c0_85, %c0_86] : memref<1x32xf32, #tpu.memory_space<vmem>>, vector<1x32xf32>
    %256 = vector.broadcast %255 : vector<1x32xf32> to vector<8x32xf32>
    %257 = arith.addf %254, %256 : vector<8x32xf32>
    %258 = arith.negf %257 : vector<8x32xf32>
    %259 = math.exp %258 : vector<8x32xf32>
    %cst_87 = arith.constant 1.000000e+00 : f32
    %260 = vector.broadcast %cst_87 : f32 to vector<8x32xf32>
    %261 = arith.addf %260, %259 : vector<8x32xf32>
    %262 = arith.divf %260, %261 : vector<8x32xf32>
    %263 = arith.mulf %247, %262 : vector<8x32xf32>
    %cst_88 = arith.constant 1.000000e+00 : f32
    %264 = vector.broadcast %cst_88 : f32 to vector<8x32xf32>
    %265 = arith.subf %264, %262 : vector<8x32xf32>
    %266 = arith.mulf %121, %265 : vector<8x32xf32>
    %267 = arith.addf %263, %266 : vector<8x32xf32>
    %c0_89 = arith.constant 0 : index
    %c0_90 = arith.constant 0 : index
    %c0_91 = arith.constant 0 : index
    %268 = vector.load %arg3[%c0_89, %c0_90, %c0_91] : memref<1x8x32xbf16, #tpu.memory_space<vmem>>, vector<1x8x32xbf16>
    %269 = vector.shape_cast %268 : vector<1x8x32xbf16> to vector<8x32xbf16>
    %270 = arith.extf %269 : vector<8x32xbf16> to vector<8x32xf32>
    %c0_92 = arith.constant 0 : index
    %c0_93 = arith.constant 0 : index
    %271 = vector.load %arg21[%c0_92, %c0_93] : memref<1x32xf32, #tpu.memory_space<vmem>>, vector<1x32xf32>
    %c0_94 = arith.constant 0 : index
    %c0_95 = arith.constant 0 : index
    %272 = vector.load %arg22[%c0_94, %c0_95] : memref<1x32xf32, #tpu.memory_space<vmem>>, vector<1x32xf32>
    %cst_96 = arith.constant dense<0.000000e+00> : vector<8xf32>
    %273 = vector.multi_reduction <add>, %267, %cst_96 [1] : vector<8x32xf32> to vector<8xf32>
    %274 = vector.shape_cast %273 : vector<8xf32> to vector<8x1xf32>
    %cst_97 = arith.constant 3.200000e+01 : f32
    %275 = vector.broadcast %cst_97 : f32 to vector<8x1xf32>
    %276 = arith.divf %274, %275 : vector<8x1xf32>
    %277 = vector.broadcast %276 : vector<8x1xf32> to vector<8x32xf32>
    %278 = arith.subf %267, %277 : vector<8x32xf32>
    %279 = arith.mulf %278, %278 : vector<8x32xf32>
    %cst_98 = arith.constant dense<0.000000e+00> : vector<8xf32>
    %280 = vector.multi_reduction <add>, %279, %cst_98 [1] : vector<8x32xf32> to vector<8xf32>
    %281 = vector.shape_cast %280 : vector<8xf32> to vector<8x1xf32>
    %cst_99 = arith.constant 3.200000e+01 : f32
    %282 = vector.broadcast %cst_99 : f32 to vector<8x1xf32>
    %283 = arith.divf %281, %282 : vector<8x1xf32>
    %cst_100 = arith.constant 9.99999997E-7 : f32
    %284 = vector.broadcast %cst_100 : f32 to vector<8x1xf32>
    %285 = arith.addf %283, %284 : vector<8x1xf32>
    %286 = math.rsqrt %285 : vector<8x1xf32>
    %287 = vector.broadcast %286 : vector<8x1xf32> to vector<8x32xf32>
    %288 = arith.mulf %278, %287 : vector<8x32xf32>
    %289 = vector.broadcast %271 : vector<1x32xf32> to vector<8x32xf32>
    %290 = arith.mulf %288, %289 : vector<8x32xf32>
    %291 = vector.broadcast %272 : vector<1x32xf32> to vector<8x32xf32>
    %292 = arith.addf %290, %291 : vector<8x32xf32>
    %293 = arith.truncf %292 : vector<8x32xf32> to vector<8x32xbf16>
    %c0_101 = arith.constant 0 : index
    %c0_102 = arith.constant 0 : index
    %294 = vector.load %arg23[%c0_101, %c0_102] : memref<32x32xbf16, #tpu.memory_space<vmem>>, vector<32x32xbf16>
    %cst_103 = arith.constant dense<0.000000e+00> : vector<8x32xf32>
    %295 = tpu.matmul %293, %294, %cst_103 {dimension_numbers = #tpu.dot_dimension_numbers<[1], [0], [0], [1], [0, 0, 1, 1], [], []>} : vector<8x32xbf16>, vector<32x32xbf16>, vector<8x32xf32> -> vector<8x32xf32>
    %c0_104 = arith.constant 0 : index
    %c0_105 = arith.constant 0 : index
    %296 = vector.load %arg24[%c0_104, %c0_105] : memref<1x32xf32, #tpu.memory_space<vmem>>, vector<1x32xf32>
    %297 = vector.broadcast %296 : vector<1x32xf32> to vector<8x32xf32>
    %298 = arith.addf %295, %297 : vector<8x32xf32>
    %299 = arith.truncf %270 : vector<8x32xf32> to vector<8x32xbf16>
    %c0_106 = arith.constant 0 : index
    %c0_107 = arith.constant 0 : index
    %300 = vector.load %arg25[%c0_106, %c0_107] : memref<32x64xbf16, #tpu.memory_space<vmem>>, vector<32x64xbf16>
    %cst_108 = arith.constant dense<0.000000e+00> : vector<8x64xf32>
    %301 = tpu.matmul %299, %300, %cst_108 {dimension_numbers = #tpu.dot_dimension_numbers<[1], [0], [0], [1], [0, 0, 1, 1], [], []>} : vector<8x32xbf16>, vector<32x64xbf16>, vector<8x64xf32> -> vector<8x64xf32>
    %c0_109 = arith.constant 0 : index
    %c0_110 = arith.constant 0 : index
    %302 = vector.load %arg26[%c0_109, %c0_110] : memref<1x64xf32, #tpu.memory_space<vmem>>, vector<1x64xf32>
    %303 = vector.broadcast %302 : vector<1x64xf32> to vector<8x64xf32>
    %304 = arith.addf %301, %303 : vector<8x64xf32>
    %305 = vector.extract_strided_slice %304 {offsets = [0, 0], sizes = [8, 32], strides = [1, 1]} : vector<8x64xf32> to vector<8x32xf32>
    %306 = vector.extract_strided_slice %304 {offsets = [0, 32], sizes = [8, 32], strides = [1, 1]} : vector<8x64xf32> to vector<8x32xf32>
    %c0_111 = arith.constant 0 : index
    %c0_112 = arith.constant 0 : index
    %307 = vector.load %arg27[%c0_111, %c0_112] : memref<32x32xbf16, #tpu.memory_space<vmem>>, vector<32x32xbf16>
    %c0_113 = arith.constant 0 : index
    %c0_114 = arith.constant 0 : index
    %308 = vector.load %arg28[%c0_113, %c0_114] : memref<1x32xf32, #tpu.memory_space<vmem>>, vector<1x32xf32>
    %309 = vector.extract_strided_slice %298 {offsets = [0, 0], sizes = [8, 8], strides = [1, 1]} : vector<8x32xf32> to vector<8x8xf32>
    %310 = arith.truncf %309 : vector<8x8xf32> to vector<8x8xbf16>
    %311 = vector.extract_strided_slice %305 {offsets = [0, 0], sizes = [8, 8], strides = [1, 1]} : vector<8x32xf32> to vector<8x8xf32>
    %312 = arith.truncf %311 : vector<8x8xf32> to vector<8x8xbf16>
    %313 = vector.extract_strided_slice %306 {offsets = [0, 0], sizes = [8, 8], strides = [1, 1]} : vector<8x32xf32> to vector<8x8xf32>
    %314 = arith.truncf %313 : vector<8x8xf32> to vector<8x8xbf16>
    %315 = tpu.transpose %312, [1, 0] : vector<8x8xbf16> -> vector<8x8xbf16>
    %cst_115 = arith.constant dense<0.000000e+00> : vector<8x8xf32>
    %316 = tpu.matmul %310, %315, %cst_115 {dimension_numbers = #tpu.dot_dimension_numbers<[1], [0], [0], [1], [0, 0, 1, 1], [], []>} : vector<8x8xbf16>, vector<8x8xbf16>, vector<8x8xf32> -> vector<8x8xf32>
    %cst_116 = arith.constant dense<0xFF800000> : vector<8xf32>
    %317 = vector.multi_reduction <maximumf>, %316, %cst_116 [1] : vector<8x8xf32> to vector<8xf32>
    %318 = vector.shape_cast %317 : vector<8xf32> to vector<8x1xf32>
    %319 = vector.broadcast %318 : vector<8x1xf32> to vector<8x8xf32>
    %320 = arith.subf %316, %319 : vector<8x8xf32>
    %321 = math.exp %320 : vector<8x8xf32>
    %cst_117 = arith.constant dense<0.000000e+00> : vector<8xf32>
    %322 = vector.multi_reduction <add>, %321, %cst_117 [1] : vector<8x8xf32> to vector<8xf32>
    %323 = vector.shape_cast %322 : vector<8xf32> to vector<8x1xf32>
    %324 = tpu.reciprocal %323 {approx = true} : vector<8x1xf32> -> vector<8x1xf32>
    %325 = vector.broadcast %324 : vector<8x1xf32> to vector<8x8xf32>
    %326 = arith.mulf %321, %325 : vector<8x8xf32>
    %327 = arith.truncf %326 : vector<8x8xf32> to vector<8x8xbf16>
    %cst_118 = arith.constant dense<0.000000e+00> : vector<8x8xf32>
    %328 = tpu.matmul %327, %314, %cst_118 {dimension_numbers = #tpu.dot_dimension_numbers<[1], [0], [0], [1], [0, 0, 1, 1], [], []>} : vector<8x8xbf16>, vector<8x8xbf16>, vector<8x8xf32> -> vector<8x8xf32>
    %329 = vector.extract_strided_slice %298 {offsets = [0, 8], sizes = [8, 8], strides = [1, 1]} : vector<8x32xf32> to vector<8x8xf32>
    %330 = arith.truncf %329 : vector<8x8xf32> to vector<8x8xbf16>
    %331 = vector.extract_strided_slice %305 {offsets = [0, 8], sizes = [8, 8], strides = [1, 1]} : vector<8x32xf32> to vector<8x8xf32>
    %332 = arith.truncf %331 : vector<8x8xf32> to vector<8x8xbf16>
    %333 = vector.extract_strided_slice %306 {offsets = [0, 8], sizes = [8, 8], strides = [1, 1]} : vector<8x32xf32> to vector<8x8xf32>
    %334 = arith.truncf %333 : vector<8x8xf32> to vector<8x8xbf16>
    %335 = tpu.transpose %332, [1, 0] : vector<8x8xbf16> -> vector<8x8xbf16>
    %cst_119 = arith.constant dense<0.000000e+00> : vector<8x8xf32>
    %336 = tpu.matmul %330, %335, %cst_119 {dimension_numbers = #tpu.dot_dimension_numbers<[1], [0], [0], [1], [0, 0, 1, 1], [], []>} : vector<8x8xbf16>, vector<8x8xbf16>, vector<8x8xf32> -> vector<8x8xf32>
    %cst_120 = arith.constant dense<0xFF800000> : vector<8xf32>
    %337 = vector.multi_reduction <maximumf>, %336, %cst_120 [1] : vector<8x8xf32> to vector<8xf32>
    %338 = vector.shape_cast %337 : vector<8xf32> to vector<8x1xf32>
    %339 = vector.broadcast %338 : vector<8x1xf32> to vector<8x8xf32>
    %340 = arith.subf %336, %339 : vector<8x8xf32>
    %341 = math.exp %340 : vector<8x8xf32>
    %cst_121 = arith.constant dense<0.000000e+00> : vector<8xf32>
    %342 = vector.multi_reduction <add>, %341, %cst_121 [1] : vector<8x8xf32> to vector<8xf32>
    %343 = vector.shape_cast %342 : vector<8xf32> to vector<8x1xf32>
    %344 = tpu.reciprocal %343 {approx = true} : vector<8x1xf32> -> vector<8x1xf32>
    %345 = vector.broadcast %344 : vector<8x1xf32> to vector<8x8xf32>
    %346 = arith.mulf %341, %345 : vector<8x8xf32>
    %347 = arith.truncf %346 : vector<8x8xf32> to vector<8x8xbf16>
    %cst_122 = arith.constant dense<0.000000e+00> : vector<8x8xf32>
    %348 = tpu.matmul %347, %334, %cst_122 {dimension_numbers = #tpu.dot_dimension_numbers<[1], [0], [0], [1], [0, 0, 1, 1], [], []>} : vector<8x8xbf16>, vector<8x8xbf16>, vector<8x8xf32> -> vector<8x8xf32>
    %349 = vector.extract_strided_slice %298 {offsets = [0, 16], sizes = [8, 8], strides = [1, 1]} : vector<8x32xf32> to vector<8x8xf32>
    %350 = arith.truncf %349 : vector<8x8xf32> to vector<8x8xbf16>
    %351 = vector.extract_strided_slice %305 {offsets = [0, 16], sizes = [8, 8], strides = [1, 1]} : vector<8x32xf32> to vector<8x8xf32>
    %352 = arith.truncf %351 : vector<8x8xf32> to vector<8x8xbf16>
    %353 = vector.extract_strided_slice %306 {offsets = [0, 16], sizes = [8, 8], strides = [1, 1]} : vector<8x32xf32> to vector<8x8xf32>
    %354 = arith.truncf %353 : vector<8x8xf32> to vector<8x8xbf16>
    %355 = tpu.transpose %352, [1, 0] : vector<8x8xbf16> -> vector<8x8xbf16>
    %cst_123 = arith.constant dense<0.000000e+00> : vector<8x8xf32>
    %356 = tpu.matmul %350, %355, %cst_123 {dimension_numbers = #tpu.dot_dimension_numbers<[1], [0], [0], [1], [0, 0, 1, 1], [], []>} : vector<8x8xbf16>, vector<8x8xbf16>, vector<8x8xf32> -> vector<8x8xf32>
    %cst_124 = arith.constant dense<0xFF800000> : vector<8xf32>
    %357 = vector.multi_reduction <maximumf>, %356, %cst_124 [1] : vector<8x8xf32> to vector<8xf32>
    %358 = vector.shape_cast %357 : vector<8xf32> to vector<8x1xf32>
    %359 = vector.broadcast %358 : vector<8x1xf32> to vector<8x8xf32>
    %360 = arith.subf %356, %359 : vector<8x8xf32>
    %361 = math.exp %360 : vector<8x8xf32>
    %cst_125 = arith.constant dense<0.000000e+00> : vector<8xf32>
    %362 = vector.multi_reduction <add>, %361, %cst_125 [1] : vector<8x8xf32> to vector<8xf32>
    %363 = vector.shape_cast %362 : vector<8xf32> to vector<8x1xf32>
    %364 = tpu.reciprocal %363 {approx = true} : vector<8x1xf32> -> vector<8x1xf32>
    %365 = vector.broadcast %364 : vector<8x1xf32> to vector<8x8xf32>
    %366 = arith.mulf %361, %365 : vector<8x8xf32>
    %367 = arith.truncf %366 : vector<8x8xf32> to vector<8x8xbf16>
    %cst_126 = arith.constant dense<0.000000e+00> : vector<8x8xf32>
    %368 = tpu.matmul %367, %354, %cst_126 {dimension_numbers = #tpu.dot_dimension_numbers<[1], [0], [0], [1], [0, 0, 1, 1], [], []>} : vector<8x8xbf16>, vector<8x8xbf16>, vector<8x8xf32> -> vector<8x8xf32>
    %369 = vector.extract_strided_slice %298 {offsets = [0, 24], sizes = [8, 8], strides = [1, 1]} : vector<8x32xf32> to vector<8x8xf32>
    %370 = arith.truncf %369 : vector<8x8xf32> to vector<8x8xbf16>
    %371 = vector.extract_strided_slice %305 {offsets = [0, 24], sizes = [8, 8], strides = [1, 1]} : vector<8x32xf32> to vector<8x8xf32>
    %372 = arith.truncf %371 : vector<8x8xf32> to vector<8x8xbf16>
    %373 = vector.extract_strided_slice %306 {offsets = [0, 24], sizes = [8, 8], strides = [1, 1]} : vector<8x32xf32> to vector<8x8xf32>
    %374 = arith.truncf %373 : vector<8x8xf32> to vector<8x8xbf16>
    %375 = tpu.transpose %372, [1, 0] : vector<8x8xbf16> -> vector<8x8xbf16>
    %cst_127 = arith.constant dense<0.000000e+00> : vector<8x8xf32>
    %376 = tpu.matmul %370, %375, %cst_127 {dimension_numbers = #tpu.dot_dimension_numbers<[1], [0], [0], [1], [0, 0, 1, 1], [], []>} : vector<8x8xbf16>, vector<8x8xbf16>, vector<8x8xf32> -> vector<8x8xf32>
    %cst_128 = arith.constant dense<0xFF800000> : vector<8xf32>
    %377 = vector.multi_reduction <maximumf>, %376, %cst_128 [1] : vector<8x8xf32> to vector<8xf32>
    %378 = vector.shape_cast %377 : vector<8xf32> to vector<8x1xf32>
    %379 = vector.broadcast %378 : vector<8x1xf32> to vector<8x8xf32>
    %380 = arith.subf %376, %379 : vector<8x8xf32>
    %381 = math.exp %380 : vector<8x8xf32>
    %cst_129 = arith.constant dense<0.000000e+00> : vector<8xf32>
    %382 = vector.multi_reduction <add>, %381, %cst_129 [1] : vector<8x8xf32> to vector<8xf32>
    %383 = vector.shape_cast %382 : vector<8xf32> to vector<8x1xf32>
    %384 = tpu.reciprocal %383 {approx = true} : vector<8x1xf32> -> vector<8x1xf32>
    %385 = vector.broadcast %384 : vector<8x1xf32> to vector<8x8xf32>
    %386 = arith.mulf %381, %385 : vector<8x8xf32>
    %387 = arith.truncf %386 : vector<8x8xf32> to vector<8x8xbf16>
    %cst_130 = arith.constant dense<0.000000e+00> : vector<8x8xf32>
    %388 = tpu.matmul %387, %374, %cst_130 {dimension_numbers = #tpu.dot_dimension_numbers<[1], [0], [0], [1], [0, 0, 1, 1], [], []>} : vector<8x8xbf16>, vector<8x8xbf16>, vector<8x8xf32> -> vector<8x8xf32>
    %389 = tpu.concatenate %328, %348, %368, %388 in 1 : vector<8x8xf32>, vector<8x8xf32>, vector<8x8xf32>, vector<8x8xf32> -> vector<8x32xf32>
    %390 = arith.truncf %389 : vector<8x32xf32> to vector<8x32xbf16>
    %cst_131 = arith.constant dense<0.000000e+00> : vector<8x32xf32>
    %391 = tpu.matmul %390, %307, %cst_131 {dimension_numbers = #tpu.dot_dimension_numbers<[1], [0], [0], [1], [0, 0, 1, 1], [], []>} : vector<8x32xbf16>, vector<32x32xbf16>, vector<8x32xf32> -> vector<8x32xf32>
    %392 = vector.broadcast %308 : vector<1x32xf32> to vector<8x32xf32>
    %393 = arith.addf %391, %392 : vector<8x32xf32>
    %394 = arith.truncf %393 : vector<8x32xf32> to vector<8x32xbf16>
    %c0_132 = arith.constant 0 : index
    %c0_133 = arith.constant 0 : index
    %395 = vector.load %arg29[%c0_132, %c0_133] : memref<32x32xbf16, #tpu.memory_space<vmem>>, vector<32x32xbf16>
    %cst_134 = arith.constant dense<0.000000e+00> : vector<8x32xf32>
    %396 = tpu.matmul %394, %395, %cst_134 {dimension_numbers = #tpu.dot_dimension_numbers<[1], [0], [0], [1], [0, 0, 1, 1], [], []>} : vector<8x32xbf16>, vector<32x32xbf16>, vector<8x32xf32> -> vector<8x32xf32>
    %397 = arith.truncf %267 : vector<8x32xf32> to vector<8x32xbf16>
    %c0_135 = arith.constant 0 : index
    %c0_136 = arith.constant 0 : index
    %398 = vector.load %arg30[%c0_135, %c0_136] : memref<32x32xbf16, #tpu.memory_space<vmem>>, vector<32x32xbf16>
    %cst_137 = arith.constant dense<0.000000e+00> : vector<8x32xf32>
    %399 = tpu.matmul %397, %398, %cst_137 {dimension_numbers = #tpu.dot_dimension_numbers<[1], [0], [0], [1], [0, 0, 1, 1], [], []>} : vector<8x32xbf16>, vector<32x32xbf16>, vector<8x32xf32> -> vector<8x32xf32>
    %400 = arith.addf %396, %399 : vector<8x32xf32>
    %c0_138 = arith.constant 0 : index
    %c0_139 = arith.constant 0 : index
    %401 = vector.load %arg31[%c0_138, %c0_139] : memref<1x32xf32, #tpu.memory_space<vmem>>, vector<1x32xf32>
    %402 = vector.broadcast %401 : vector<1x32xf32> to vector<8x32xf32>
    %403 = arith.addf %400, %402 : vector<8x32xf32>
    %404 = arith.negf %403 : vector<8x32xf32>
    %405 = math.exp %404 : vector<8x32xf32>
    %cst_140 = arith.constant 1.000000e+00 : f32
    %406 = vector.broadcast %cst_140 : f32 to vector<8x32xf32>
    %407 = arith.addf %406, %405 : vector<8x32xf32>
    %408 = arith.divf %406, %407 : vector<8x32xf32>
    %409 = arith.mulf %393, %408 : vector<8x32xf32>
    %cst_141 = arith.constant 1.000000e+00 : f32
    %410 = vector.broadcast %cst_141 : f32 to vector<8x32xf32>
    %411 = arith.subf %410, %408 : vector<8x32xf32>
    %412 = arith.mulf %267, %411 : vector<8x32xf32>
    %413 = arith.addf %409, %412 : vector<8x32xf32>
    %c0_142 = arith.constant 0 : index
    %c0_143 = arith.constant 0 : index
    %414 = vector.load %arg32[%c0_142, %c0_143] : memref<1x32xf32, #tpu.memory_space<vmem>>, vector<1x32xf32>
    %c0_144 = arith.constant 0 : index
    %c0_145 = arith.constant 0 : index
    %415 = vector.load %arg33[%c0_144, %c0_145] : memref<1x32xf32, #tpu.memory_space<vmem>>, vector<1x32xf32>
    %c0_146 = arith.constant 0 : index
    %c0_147 = arith.constant 0 : index
    %416 = vector.load %arg34[%c0_146, %c0_147] : memref<32x128xbf16, #tpu.memory_space<vmem>>, vector<32x128xbf16>
    %c0_148 = arith.constant 0 : index
    %c0_149 = arith.constant 0 : index
    %417 = vector.load %arg35[%c0_148, %c0_149] : memref<1x128xf32, #tpu.memory_space<vmem>>, vector<1x128xf32>
    %c0_150 = arith.constant 0 : index
    %c0_151 = arith.constant 0 : index
    %418 = vector.load %arg36[%c0_150, %c0_151] : memref<128x32xbf16, #tpu.memory_space<vmem>>, vector<128x32xbf16>
    %c0_152 = arith.constant 0 : index
    %c0_153 = arith.constant 0 : index
    %419 = vector.load %arg37[%c0_152, %c0_153] : memref<1x32xf32, #tpu.memory_space<vmem>>, vector<1x32xf32>
    %cst_154 = arith.constant dense<0.000000e+00> : vector<8xf32>
    %420 = vector.multi_reduction <add>, %413, %cst_154 [1] : vector<8x32xf32> to vector<8xf32>
    %421 = vector.shape_cast %420 : vector<8xf32> to vector<8x1xf32>
    %cst_155 = arith.constant 3.200000e+01 : f32
    %422 = vector.broadcast %cst_155 : f32 to vector<8x1xf32>
    %423 = arith.divf %421, %422 : vector<8x1xf32>
    %424 = vector.broadcast %423 : vector<8x1xf32> to vector<8x32xf32>
    %425 = arith.subf %413, %424 : vector<8x32xf32>
    %426 = arith.mulf %425, %425 : vector<8x32xf32>
    %cst_156 = arith.constant dense<0.000000e+00> : vector<8xf32>
    %427 = vector.multi_reduction <add>, %426, %cst_156 [1] : vector<8x32xf32> to vector<8xf32>
    %428 = vector.shape_cast %427 : vector<8xf32> to vector<8x1xf32>
    %cst_157 = arith.constant 3.200000e+01 : f32
    %429 = vector.broadcast %cst_157 : f32 to vector<8x1xf32>
    %430 = arith.divf %428, %429 : vector<8x1xf32>
    %cst_158 = arith.constant 9.99999997E-7 : f32
    %431 = vector.broadcast %cst_158 : f32 to vector<8x1xf32>
    %432 = arith.addf %430, %431 : vector<8x1xf32>
    %433 = math.rsqrt %432 : vector<8x1xf32>
    %434 = vector.broadcast %433 : vector<8x1xf32> to vector<8x32xf32>
    %435 = arith.mulf %425, %434 : vector<8x32xf32>
    %436 = vector.broadcast %414 : vector<1x32xf32> to vector<8x32xf32>
    %437 = arith.mulf %435, %436 : vector<8x32xf32>
    %438 = vector.broadcast %415 : vector<1x32xf32> to vector<8x32xf32>
    %439 = arith.addf %437, %438 : vector<8x32xf32>
    %440 = arith.truncf %439 : vector<8x32xf32> to vector<8x32xbf16>
    %cst_159 = arith.constant dense<0.000000e+00> : vector<8x128xf32>
    %441 = tpu.matmul %440, %416, %cst_159 {dimension_numbers = #tpu.dot_dimension_numbers<[1], [0], [0], [1], [0, 0, 1, 1], [], []>} : vector<8x32xbf16>, vector<32x128xbf16>, vector<8x128xf32> -> vector<8x128xf32>
    %442 = vector.broadcast %417 : vector<1x128xf32> to vector<8x128xf32>
    %443 = arith.addf %441, %442 : vector<8x128xf32>
    %cst_160 = arith.constant 0.000000e+00 : f32
    %444 = vector.broadcast %cst_160 : f32 to vector<8x128xf32>
    %445 = arith.maximumf %443, %444 : vector<8x128xf32>
    %446 = arith.truncf %445 : vector<8x128xf32> to vector<8x128xbf16>
    %cst_161 = arith.constant dense<0.000000e+00> : vector<8x32xf32>
    %447 = tpu.matmul %446, %418, %cst_161 {dimension_numbers = #tpu.dot_dimension_numbers<[1], [0], [0], [1], [0, 0, 1, 1], [], []>} : vector<8x128xbf16>, vector<128x32xbf16>, vector<8x32xf32> -> vector<8x32xf32>
    %448 = vector.broadcast %419 : vector<1x32xf32> to vector<8x32xf32>
    %449 = arith.addf %447, %448 : vector<8x32xf32>
    %450 = arith.addf %449, %413 : vector<8x32xf32>
    %c0_162 = arith.constant 0 : index
    %c0_163 = arith.constant 0 : index
    %451 = vector.load %arg38[%c0_162, %c0_163] : memref<1x32xf32, #tpu.memory_space<vmem>>, vector<1x32xf32>
    %c0_164 = arith.constant 0 : index
    %c0_165 = arith.constant 0 : index
    %452 = vector.load %arg39[%c0_164, %c0_165] : memref<1x32xf32, #tpu.memory_space<vmem>>, vector<1x32xf32>
    %cst_166 = arith.constant dense<0.000000e+00> : vector<8xf32>
    %453 = vector.multi_reduction <add>, %450, %cst_166 [1] : vector<8x32xf32> to vector<8xf32>
    %454 = vector.shape_cast %453 : vector<8xf32> to vector<8x1xf32>
    %cst_167 = arith.constant 3.200000e+01 : f32
    %455 = vector.broadcast %cst_167 : f32 to vector<8x1xf32>
    %456 = arith.divf %454, %455 : vector<8x1xf32>
    %457 = vector.broadcast %456 : vector<8x1xf32> to vector<8x32xf32>
    %458 = arith.subf %450, %457 : vector<8x32xf32>
    %459 = arith.mulf %458, %458 : vector<8x32xf32>
    %cst_168 = arith.constant dense<0.000000e+00> : vector<8xf32>
    %460 = vector.multi_reduction <add>, %459, %cst_168 [1] : vector<8x32xf32> to vector<8xf32>
    %461 = vector.shape_cast %460 : vector<8xf32> to vector<8x1xf32>
    %cst_169 = arith.constant 3.200000e+01 : f32
    %462 = vector.broadcast %cst_169 : f32 to vector<8x1xf32>
    %463 = arith.divf %461, %462 : vector<8x1xf32>
    %cst_170 = arith.constant 9.99999997E-7 : f32
    %464 = vector.broadcast %cst_170 : f32 to vector<8x1xf32>
    %465 = arith.addf %463, %464 : vector<8x1xf32>
    %466 = math.rsqrt %465 : vector<8x1xf32>
    %467 = vector.broadcast %466 : vector<8x1xf32> to vector<8x32xf32>
    %468 = arith.mulf %458, %467 : vector<8x32xf32>
    %469 = vector.broadcast %451 : vector<1x32xf32> to vector<8x32xf32>
    %470 = arith.mulf %468, %469 : vector<8x32xf32>
    %471 = vector.broadcast %452 : vector<1x32xf32> to vector<8x32xf32>
    %472 = arith.addf %470, %471 : vector<8x32xf32>
    %c0_171 = arith.constant 0 : index
    %c0_172 = arith.constant 0 : index
    %c0_173 = arith.constant 0 : index
    %473 = vector.load %arg40[%c0_171, %c0_172, %c0_173] : memref<1x8x32xf32, #tpu.memory_space<vmem>>, vector<1x8x32xf32>
    %474 = vector.shape_cast %473 : vector<1x8x32xf32> to vector<8x32xf32>
    %475 = vector.shape_cast %472 : vector<8x32xf32> to vector<1x8x32xf32>
    tpu.vector_store %arg40[%c0_171, %c0_172, %c0_173], %475 {strides = array<i32>} : memref<1x8x32xf32, #tpu.memory_space<vmem>>, vector<1x8x32xf32>,
    return
  }
  func.func @transform_0(%arg0: i32) -> (i32, i32, i32) {
    %c0_i32 = arith.constant 0 : i32
    %c0_i32_0 = arith.constant 0 : i32
    %c0_i32_1 = arith.constant 0 : i32
    return %arg0, %c0_i32, %c0_i32_0 : i32, i32, i32
  }
  func.func @transform_1(%arg0: i32) -> (i32, i32, i32) {
    %c0_i32 = arith.constant 0 : i32
    %c0_i32_0 = arith.constant 0 : i32
    %c0_i32_1 = arith.constant 0 : i32
    return %arg0, %c0_i32, %c0_i32_0 : i32, i32, i32
  }
  func.func @transform_2(%arg0: i32) -> (i32, i32, i32) {
    %c0_i32 = arith.constant 0 : i32
    %c0_i32_0 = arith.constant 0 : i32
    %c0_i32_1 = arith.constant 0 : i32
    return %arg0, %c0_i32, %c0_i32_0 : i32, i32, i32
  }
  func.func @transform_3(%arg0: i32) -> (i32, i32) {
    %c0_i32 = arith.constant 0 : i32
    %c0_i32_0 = arith.constant 0 : i32
    %c0_i32_1 = arith.constant 0 : i32
    return %c0_i32, %c0_i32_0 : i32, i32
  }
  func.func @transform_4(%arg0: i32) -> (i32, i32) {
    %c0_i32 = arith.constant 0 : i32
    %c0_i32_0 = arith.constant 0 : i32
    %c0_i32_1 = arith.constant 0 : i32
    return %c0_i32, %c0_i32_0 : i32, i32
  }
  func.func @transform_5(%arg0: i32) -> (i32, i32) {
    %c0_i32 = arith.constant 0 : i32
    %c0_i32_0 = arith.constant 0 : i32
    %c0_i32_1 = arith.constant 0 : i32
    return %c0_i32, %c0_i32_0 : i32, i32
  }
  func.func @transform_6(%arg0: i32) -> (i32, i32) {
    %c0_i32 = arith.constant 0 : i32
    %c0_i32_0 = arith.constant 0 : i32
    %c0_i32_1 = arith.constant 0 : i32
    return %c0_i32, %c0_i32_0 : i32, i32
  }
  func.func @transform_7(%arg0: i32) -> (i32, i32) {
    %c0_i32 = arith.constant 0 : i32
    %c0_i32_0 = arith.constant 0 : i32
    %c0_i32_1 = arith.constant 0 : i32
    return %c0_i32, %c0_i32_0 : i32, i32
  }
  func.func @transform_8(%arg0: i32) -> (i32, i32) {
    %c0_i32 = arith.constant 0 : i32
    %c0_i32_0 = arith.constant 0 : i32
    %c0_i32_1 = arith.constant 0 : i32
    return %c0_i32, %c0_i32_0 : i32, i32
  }
  func.func @transform_9(%arg0: i32) -> (i32, i32) {
    %c0_i32 = arith.constant 0 : i32
    %c0_i32_0 = arith.constant 0 : i32
    %c0_i32_1 = arith.constant 0 : i32
    return %c0_i32, %c0_i32_0 : i32, i32
  }
  func.func @transform_10(%arg0: i32) -> (i32, i32) {
    %c0_i32 = arith.constant 0 : i32
    %c0_i32_0 = arith.constant 0 : i32
    %c0_i32_1 = arith.constant 0 : i32
    return %c0_i32, %c0_i32_0 : i32, i32
  }
  func.func @transform_11(%arg0: i32) -> (i32, i32) {
    %c0_i32 = arith.constant 0 : i32
    %c0_i32_0 = arith.constant 0 : i32
    %c0_i32_1 = arith.constant 0 : i32
    return %c0_i32, %c0_i32_0 : i32, i32
  }
  func.func @transform_12(%arg0: i32) -> (i32, i32) {
    %c0_i32 = arith.constant 0 : i32
    %c0_i32_0 = arith.constant 0 : i32
    %c0_i32_1 = arith.constant 0 : i32
    return %c0_i32, %c0_i32_0 : i32, i32
  }
  func.func @transform_13(%arg0: i32) -> (i32, i32) {
    %c0_i32 = arith.constant 0 : i32
    %c0_i32_0 = arith.constant 0 : i32
    %c0_i32_1 = arith.constant 0 : i32
    return %c0_i32, %c0_i32_0 : i32, i32
  }
  func.func @transform_14(%arg0: i32) -> (i32, i32) {
    %c0_i32 = arith.constant 0 : i32
    %c0_i32_0 = arith.constant 0 : i32
    %c0_i32_1 = arith.constant 0 : i32
    return %c0_i32, %c0_i32_0 : i32, i32
  }
  func.func @transform_15(%arg0: i32) -> (i32, i32) {
    %c0_i32 = arith.constant 0 : i32
    %c0_i32_0 = arith.constant 0 : i32
    %c0_i32_1 = arith.constant 0 : i32
    return %c0_i32, %c0_i32_0 : i32, i32
  }
  func.func @transform_16(%arg0: i32) -> (i32, i32) {
    %c0_i32 = arith.constant 0 : i32
    %c0_i32_0 = arith.constant 0 : i32
    %c0_i32_1 = arith.constant 0 : i32
    return %c0_i32, %c0_i32_0 : i32, i32
  }
  func.func @transform_17(%arg0: i32) -> (i32, i32) {
    %c0_i32 = arith.constant 0 : i32
    %c0_i32_0 = arith.constant 0 : i32
    %c0_i32_1 = arith.constant 0 : i32
    return %c0_i32, %c0_i32_0 : i32, i32
  }
  func.func @transform_18(%arg0: i32) -> (i32, i32) {
    %c0_i32 = arith.constant 0 : i32
    %c0_i32_0 = arith.constant 0 : i32
    %c0_i32_1 = arith.constant 0 : i32
    return %c0_i32, %c0_i32_0 : i32, i32
  }
  func.func @transform_19(%arg0: i32) -> (i32, i32) {
    %c0_i32 = arith.constant 0 : i32
    %c0_i32_0 = arith.constant 0 : i32
    %c0_i32_1 = arith.constant 0 : i32
    return %c0_i32, %c0_i32_0 : i32, i32
  }
  func.func @transform_20(%arg0: i32) -> (i32, i32) {
    %c0_i32 = arith.constant 0 : i32
    %c0_i32_0 = arith.constant 0 : i32
    %c0_i32_1 = arith.constant 0 : i32
    return %c0_i32, %c0_i32_0 : i32, i32
  }
  func.func @transform_21(%arg0: i32) -> (i32, i32) {
    %c0_i32 = arith.constant 0 : i32
    %c0_i32_0 = arith.constant 0 : i32
    %c0_i32_1 = arith.constant 0 : i32
    return %c0_i32, %c0_i32_0 : i32, i32
  }
  func.func @transform_22(%arg0: i32) -> (i32, i32) {
    %c0_i32 = arith.constant 0 : i32
    %c0_i32_0 = arith.constant 0 : i32
    %c0_i32_1 = arith.constant 0 : i32
    return %c0_i32, %c0_i32_0 : i32, i32
  }
  func.func @transform_23(%arg0: i32) -> (i32, i32) {
    %c0_i32 = arith.constant 0 : i32
    %c0_i32_0 = arith.constant 0 : i32
    %c0_i32_1 = arith.constant 0 : i32
    return %c0_i32, %c0_i32_0 : i32, i32
  }
  func.func @transform_24(%arg0: i32) -> (i32, i32) {
    %c0_i32 = arith.constant 0 : i32
    %c0_i32_0 = arith.constant 0 : i32
    %c0_i32_1 = arith.constant 0 : i32
    return %c0_i32, %c0_i32_0 : i32, i32
  }
  func.func @transform_25(%arg0: i32) -> (i32, i32) {
    %c0_i32 = arith.constant 0 : i32
    %c0_i32_0 = arith.constant 0 : i32
    %c0_i32_1 = arith.constant 0 : i32
    return %c0_i32, %c0_i32_0 : i32, i32
  }
  func.func @transform_26(%arg0: i32) -> (i32, i32) {
    %c0_i32 = arith.constant 0 : i32
    %c0_i32_0 = arith.constant 0 : i32
    %c0_i32_1 = arith.constant 0 : i32
    return %c0_i32, %c0_i32_0 : i32, i32
  }
  func.func @transform_27(%arg0: i32) -> (i32, i32) {
    %c0_i32 = arith.constant 0 : i32
    %c0_i32_0 = arith.constant 0 : i32
    %c0_i32_1 = arith.constant 0 : i32
    return %c0_i32, %c0_i32_0 : i32, i32
  }
  func.func @transform_28(%arg0: i32) -> (i32, i32) {
    %c0_i32 = arith.constant 0 : i32
    %c0_i32_0 = arith.constant 0 : i32
    %c0_i32_1 = arith.constant 0 : i32
    return %c0_i32, %c0_i32_0 : i32, i32
  }
  func.func @transform_29(%arg0: i32) -> (i32, i32) {
    %c0_i32 = arith.constant 0 : i32
    %c0_i32_0 = arith.constant 0 : i32
    %c0_i32_1 = arith.constant 0 : i32
    return %c0_i32, %c0_i32_0 : i32, i32
  }
  func.func @transform_30(%arg0: i32) -> (i32, i32) {
    %c0_i32 = arith.constant 0 : i32
    %c0_i32_0 = arith.constant 0 : i32
    %c0_i32_1 = arith.constant 0 : i32
    return %c0_i32, %c0_i32_0 : i32, i32
  }
  func.func @transform_31(%arg0: i32) -> (i32, i32) {
    %c0_i32 = arith.constant 0 : i32
    %c0_i32_0 = arith.constant 0 : i32
    %c0_i32_1 = arith.constant 0 : i32
    return %c0_i32, %c0_i32_0 : i32, i32
  }
  func.func @transform_32(%arg0: i32) -> (i32, i32) {
    %c0_i32 = arith.constant 0 : i32
    %c0_i32_0 = arith.constant 0 : i32
    %c0_i32_1 = arith.constant 0 : i32
    return %c0_i32, %c0_i32_0 : i32, i32
  }
  func.func @transform_33(%arg0: i32) -> (i32, i32) {
    %c0_i32 = arith.constant 0 : i32
    %c0_i32_0 = arith.constant 0 : i32
    %c0_i32_1 = arith.constant 0 : i32
    return %c0_i32, %c0_i32_0 : i32, i32
  }
  func.func @transform_34(%arg0: i32) -> (i32, i32) {
    %c0_i32 = arith.constant 0 : i32
    %c0_i32_0 = arith.constant 0 : i32
    %c0_i32_1 = arith.constant 0 : i32
    return %c0_i32, %c0_i32_0 : i32, i32
  }
  func.func @transform_35(%arg0: i32) -> (i32, i32) {
    %c0_i32 = arith.constant 0 : i32
    %c0_i32_0 = arith.constant 0 : i32
    %c0_i32_1 = arith.constant 0 : i32
    return %c0_i32, %c0_i32_0 : i32, i32
  }
  func.func @transform_36(%arg0: i32) -> (i32, i32) {
    %c0_i32 = arith.constant 0 : i32
    %c0_i32_0 = arith.constant 0 : i32
    %c0_i32_1 = arith.constant 0 : i32
    return %c0_i32, %c0_i32_0 : i32, i32
  }
  func.func @transform_37(%arg0: i32) -> (i32, i32) {
    %c0_i32 = arith.constant 0 : i32
    %c0_i32_0 = arith.constant 0 : i32
    %c0_i32_1 = arith.constant 0 : i32
    return %c0_i32, %c0_i32_0 : i32, i32
  }
  func.func @transform_38(%arg0: i32) -> (i32, i32) {
    %c0_i32 = arith.constant 0 : i32
    %c0_i32_0 = arith.constant 0 : i32
    %c0_i32_1 = arith.constant 0 : i32
    return %c0_i32, %c0_i32_0 : i32, i32
  }
  func.func @transform_39(%arg0: i32) -> (i32, i32, i32) {
    %c0_i32 = arith.constant 0 : i32
    %c0_i32_0 = arith.constant 0 : i32
    %c0_i32_1 = arith.constant 0 : i32
    return %arg0, %c0_i32, %c0_i32_0 : i32, i32, i32
  }
}

</mosaic_0001>

<llo_original>
// kernel: doc_encoder_forward.2
$region0: #{doc_encoder_forward.2}
  #allocation0 [shape = 'u32[]', space=smem, size = 0x4, offset = 0x4, fixed_abs, tag = 'smem constant byte address 0x4 - core index']
  #allocation1 [shape = 'u32[72,128]{1,0:T(1,128)}', space=vmem, size = 0x9000, scoped, tag = 'internal scratch']
  %s0 = inlined_call_operand.vmem [shape: bf16[6,8,32], index: 0, kind: input, shape index: {}]
  %s1 = inlined_call_operand.vmem [shape: f32[1,32], index: 1, kind: input, shape index: {}]
  %s2 = inlined_call_operand.vmem [shape: f32[1,32], index: 2, kind: input, shape index: {}]
  %s3 = inlined_call_operand.vmem [shape: bf16[32,96], index: 3, kind: input, shape index: {}]
  %s4 = inlined_call_operand.vmem [shape: f32[1,96], index: 4, kind: input, shape index: {}]
  %s5 = inlined_call_operand.vmem [shape: bf16[32,32], index: 5, kind: input, shape index: {}]
  %s6 = inlined_call_operand.vmem [shape: f32[1,32], index: 6, kind: input, shape index: {}]
  %s7 = inlined_call_operand.vmem [shape: f32[1,32], index: 7, kind: input, shape index: {}]
  %s8 = inlined_call_operand.vmem [shape: f32[1,32], index: 8, kind: input, shape index: {}]
  %s9 = inlined_call_operand.vmem [shape: bf16[32,128], index: 9, kind: input, shape index: {}]
  %s10 = inlined_call_operand.vmem [shape: f32[1,128], index: 10, kind: input, shape index: {}]
  %s11 = inlined_call_operand.vmem [shape: bf16[128,32], index: 11, kind: input, shape index: {}]
  %s12 = inlined_call_operand.vmem [shape: f32[1,32], index: 12, kind: input, shape index: {}]
  %s13 = inlined_call_operand.vmem [shape: f32[1,32], index: 13, kind: input, shape index: {}]
  %s14 = inlined_call_operand.vmem [shape: f32[1,32], index: 14, kind: input, shape index: {}]
  %s15 = inlined_call_operand.vmem [shape: f32[6,8,32], index: 15, kind: output, shape index: {}]
  %s16 = sld [smem:[#allocation0]]
  $region93: #{doc_encoder_forward.2} parent=0
    _
  %s18 = ssub.s32 1, %s16
  %s19 = scalar_select 0, %s18, %s16
  loop: start=0, step=1, limit=8
  $region2: #{doc_encoder_forward.2} parent=0 // loop_pre_header
    _
  $region3: #{doc_encoder_forward.2} parent=0 // loop_header
    %s21 = sphi 0, %s25
    %p22 = scmp.ge.s32.totalorder %s21, 8
    %s31 = sphi 0, %s33
    %s34 = sphi 0, %s31
    %s35 = sphi 0, %s34
    %s51 = sphi 0, %s35
    %s55 = sphi 0, %s55
    %s57 = sphi 0, %s55
    %s58 = sphi 0, %s57
    %s72 = sphi 0, %s58
    %s76 = sphi 0, %s76
    %s78 = sphi 0, %s76
    %s79 = sphi 0, %s78
    %s93 = sphi 0, %s79
    %s97 = sphi 0, %s97
    %s99 = sphi 0, %s97
    %s100 = sphi 0, %s99
    %s114 = sphi 0, %s100
    %s118 = sphi 0, %s118
    %s120 = sphi 0, %s118
    %s121 = sphi 0, %s120
    %s135 = sphi 0, %s121
    %s139 = sphi 0, %s139
    %s141 = sphi 0, %s139
    %s142 = sphi 0, %s141
    %s156 = sphi 0, %s142
    %s160 = sphi 0, %s160
    %s162 = sphi 0, %s160
    %s163 = sphi 0, %s162
    %s177 = sphi 0, %s163
    %s181 = sphi 0, %s181
    %s183 = sphi 0, %s181
    %s184 = sphi 0, %s183
    %s198 = sphi 0, %s184
    %s202 = sphi 0, %s202
    %s204 = sphi 0, %s202
    %s205 = sphi 0, %s204
    %s219 = sphi 0, %s205
    %s223 = sphi 0, %s223
    %s225 = sphi 0, %s223
    %s226 = sphi 0, %s225
    %s240 = sphi 0, %s226
    %s244 = sphi 0, %s244
    %s246 = sphi 0, %s244
    %s247 = sphi 0, %s246
    %s261 = sphi 0, %s247
    %s265 = sphi 0, %s265
    %s267 = sphi 0, %s265
    %s268 = sphi 0, %s267
    %s282 = sphi 0, %s268
    %s286 = sphi 0, %s286
    %s288 = sphi 0, %s286
    %s289 = sphi 0, %s288
    %s303 = sphi 0, %s289
    %s307 = sphi 0, %s307
    %s309 = sphi 0, %s307
    %s310 = sphi 0, %s309
    %s324 = sphi 0, %s310
    %s328 = sphi 0, %s328
    %s330 = sphi 0, %s328
    %s331 = sphi 0, %s330
    %s345 = sphi 0, %s331
    %s351 = sphi 0, %s353
    %s354 = sphi 0, %s351
    %s355 = sphi 0, %s354
    %s371 = sphi 0, %s355
  $region4: #{doc_encoder_forward.2} parent=0 // loop_header_branch
    %24 = sbr.rel (%p22) target = $region8
  $region5: #{doc_encoder_forward.2} parent=0 // loop_body
    %s26 = ssub.s32 %s21, 1
    %s27 = ssub.s32 %s21, 2
    %s28 = sadd.s32 %s21, 1
    %s29 = ssub.s32 %s21, %s28
    %p30 = scmp.eq.s32.totalorder %s29, 0
    %s32 = sadd.s32 %s31, 1
    %s33 = scalar_select %p30, %s31, %s32
    %p36 = pneg %p30
    %p37 = scmp.eq.s32.totalorder %s21, 5
    %p38 = por %p36, %p37
    %p39 = scmp.ne.s32.totalorder %s31, %s34
    %p40 = scmp.eq.s32.totalorder %s21, 0
    %p41 = por %p39, %p40
    %p42 = scmp.ne.s32.totalorder %s31, %s34
    %p43 = scmp.eq.s32.totalorder %s26, 5
    %p44 = por %p42, %p43
    %p45 = scmp.ne.s32.totalorder %s34, %s35
    %p46 = scmp.eq.s32.totalorder %s26, 0
    %p47 = por %p45, %p46
    %p48 = scmp.ne.s32.totalorder %s34, %s35
    %p49 = scmp.eq.s32.totalorder %s27, 5
    %p50 = por %p48, %p49
    %p52 = scmp.ne.s32.totalorder %s35, %s51
    %p53 = scmp.eq.s32.totalorder %s27, 0
    %p54 = por %p52, %p53
    %s56 = sadd.s32 %s55, 1
    %p59 = scmp.eq.s32.totalorder %s21, 5
    %p60 = scmp.ne.s32.totalorder %s55, %s57
    %p61 = scmp.eq.s32.totalorder %s21, 0
    %p62 = por %p60, %p61
    %p63 = scmp.ne.s32.totalorder %s55, %s57
    %p64 = scmp.eq.s32.totalorder %s26, 5
    %p65 = por %p63, %p64
    %p66 = scmp.ne.s32.totalorder %s57, %s58
    %p67 = scmp.eq.s32.totalorder %s26, 0
    %p68 = por %p66, %p67
    %p69 = scmp.ne.s32.totalorder %s57, %s58
    %p70 = scmp.eq.s32.totalorder %s27, 5
    %p71 = por %p69, %p70
    %p73 = scmp.ne.s32.totalorder %s58, %s72
    %p74 = scmp.eq.s32.totalorder %s27, 0
    %p75 = por %p73, %p74
    %s77 = sadd.s32 %s76, 1
    %p80 = scmp.eq.s32.totalorder %s21, 5
    %p81 = scmp.ne.s32.totalorder %s76, %s78
    %p82 = scmp.eq.s32.totalorder %s21, 0
    %p83 = por %p81, %p82
    %p84 = scmp.ne.s32.totalorder %s76, %s78
    %p85 = scmp.eq.s32.totalorder %s26, 5
    %p86 = por %p84, %p85
    %p87 = scmp.ne.s32.totalorder %s78, %s79
    %p88 = scmp.eq.s32.totalorder %s26, 0
    %p89 = por %p87, %p88
    %p90 = scmp.ne.s32.totalorder %s78, %s79
    %p91 = scmp.eq.s32.totalorder %s27, 5
    %p92 = por %p90, %p91
    %p94 = scmp.ne.s32.totalorder %s79, %s93
    %p95 = scmp.eq.s32.totalorder %s27, 0
    %p96 = por %p94, %p95
    %s98 = sadd.s32 %s97, 1
    %p101 = scmp.eq.s32.totalorder %s21, 5
    %p102 = scmp.ne.s32.totalorder %s97, %s99
    %p103 = scmp.eq.s32.totalorder %s21, 0
    %p104 = por %p102, %p103
    %p105 = scmp.ne.s32.totalorder %s97, %s99
    %p106 = scmp.eq.s32.totalorder %s26, 5
    %p107 = por %p105, %p106
    %p108 = scmp.ne.s32.totalorder %s99, %s100
    %p109 = scmp.eq.s32.totalorder %s26, 0
    %p110 = por %p108, %p109
    %p111 = scmp.ne.s32.totalorder %s99, %s100
    %p112 = scmp.eq.s32.totalorder %s27, 5
    %p113 = por %p111, %p112
    %p115 = scmp.ne.s32.totalorder %s100, %s114
    %p116 = scmp.eq.s32.totalorder %s27, 0
    %p117 = por %p115, %p116
    %s119 = sadd.s32 %s118, 1
    %p122 = scmp.eq.s32.totalorder %s21, 5
    %p123 = scmp.ne.s32.totalorder %s118, %s120
    %p124 = scmp.eq.s32.totalorder %s21, 0
    %p125 = por %p123, %p124
    %p126 = scmp.ne.s32.totalorder %s118, %s120
    %p127 = scmp.eq.s32.totalorder %s26, 5
    %p128 = por %p126, %p127
    %p129 = scmp.ne.s32.totalorder %s120, %s121
    %p130 = scmp.eq.s32.totalorder %s26, 0
    %p131 = por %p129, %p130
    %p132 = scmp.ne.s32.totalorder %s120, %s121
    %p133 = scmp.eq.s32.totalorder %s27, 5
    %p134 = por %p132, %p133
    %p136 = scmp.ne.s32.totalorder %s121, %s135
    %p137 = scmp.eq.s32.totalorder %s27, 0
    %p138 = por %p136, %p137
    %s140 = sadd.s32 %s139, 1
    %p143 = scmp.eq.s32.totalorder %s21, 5
    %p144 = scmp.ne.s32.totalorder %s139, %s141
    %p145 = scmp.eq.s32.totalorder %s21, 0
    %p146 = por %p144, %p145
    %p147 = scmp.ne.s32.totalorder %s139, %s141
    %p148 = scmp.eq.s32.totalorder %s26, 5
    %p149 = por %p147, %p148
    %p150 = scmp.ne.s32.totalorder %s141, %s142
    %p151 = scmp.eq.s32.totalorder %s26, 0
    %p152 = por %p150, %p151
    %p153 = scmp.ne.s32.totalorder %s141, %s142
    %p154 = scmp.eq.s32.totalorder %s27, 5
    %p155 = por %p153, %p154
    %p157 = scmp.ne.s32.totalorder %s142, %s156
    %p158 = scmp.eq.s32.totalorder %s27, 0
    %p159 = por %p157, %p158
    %s161 = sadd.s32 %s160, 1
    %p164 = scmp.eq.s32.totalorder %s21, 5
    %p165 = scmp.ne.s32.totalorder %s160, %s162
    %p166 = scmp.eq.s32.totalorder %s21, 0
    %p167 = por %p165, %p166
    %p168 = scmp.ne.s32.totalorder %s160, %s162
    %p169 = scmp.eq.s32.totalorder %s26, 5
    %p170 = por %p168, %p169
    %p171 = scmp.ne.s32.totalorder %s162, %s163
    %p172 = scmp.eq.s32.totalorder %s26, 0
    %p173 = por %p171, %p172
    %p174 = scmp.ne.s32.totalorder %s162, %s163
    %p175 = scmp.eq.s32.totalorder %s27, 5
    %p176 = por %p174, %p175
    %p178 = scmp.ne.s32.totalorder %s163, %s177
    %p179 = scmp.eq.s32.totalorder %s27, 0
    %p180 = por %p178, %p179
    %s182 = sadd.s32 %s181, 1
    %p185 = scmp.eq.s32.totalorder %s21, 5
    %p186 = scmp.ne.s32.totalorder %s181, %s183
    %p187 = scmp.eq.s32.totalorder %s21, 0
    %p188 = por %p186, %p187
    %p189 = scmp.ne.s32.totalorder %s181, %s183
    %p190 = scmp.eq.s32.totalorder %s26, 5
    %p191 = por %p189, %p190
    %p192 = scmp.ne.s32.totalorder %s183, %s184
    %p193 = scmp.eq.s32.totalorder %s26, 0
    %p194 = por %p192, %p193
    %p195 = scmp.ne.s32.totalorder %s183, %s184
    %p196 = scmp.eq.s32.totalorder %s27, 5
    %p197 = por %p195, %p196
    %p199 = scmp.ne.s32.totalorder %s184, %s198
    %p200 = scmp.eq.s32.totalorder %s27, 0
    %p201 = por %p199, %p200
    %s203 = sadd.s32 %s202, 1
    %p206 = scmp.eq.s32.totalorder %s21, 5
    %p207 = scmp.ne.s32.totalorder %s202, %s204
    %p208 = scmp.eq.s32.totalorder %s21, 0
    %p209 = por %p207, %p208
    %p210 = scmp.ne.s32.totalorder %s202, %s204
    %p211 = scmp.eq.s32.totalorder %s26, 5
    %p212 = por %p210, %p211
    %p213 = scmp.ne.s32.totalorder %s204, %s205
    %p214 = scmp.eq.s32.totalorder %s26, 0
    %p215 = por %p213, %p214
    %p216 = scmp.ne.s32.totalorder %s204, %s205
    %p217 = scmp.eq.s32.totalorder %s27, 5
    %p218 = por %p216, %p217
    %p220 = scmp.ne.s32.totalorder %s205, %s219
    %p221 = scmp.eq.s32.totalorder %s27, 0
    %p222 = por %p220, %p221
    %s224 = sadd.s32 %s223, 1
    %p227 = scmp.eq.s32.totalorder %s21, 5
    %p228 = scmp.ne.s32.totalorder %s223, %s225
    %p229 = scmp.eq.s32.totalorder %s21, 0
    %p230 = por %p228, %p229
    %p231 = scmp.ne.s32.totalorder %s223, %s225
    %p232 = scmp.eq.s32.totalorder %s26, 5
    %p233 = por %p231, %p232
    %p234 = scmp.ne.s32.totalorder %s225, %s226
    %p235 = scmp.eq.s32.totalorder %s26, 0
    %p236 = por %p234, %p235
    %p237 = scmp.ne.s32.totalorder %s225, %s226
    %p238 = scmp.eq.s32.totalorder %s27, 5
    %p239 = por %p237, %p238
    %p241 = scmp.ne.s32.totalorder %s226, %s240
    %p242 = scmp.eq.s32.totalorder %s27, 0
    %p243 = por %p241, %p242
    %s245 = sadd.s32 %s244, 1
    %p248 = scmp.eq.s32.totalorder %s21, 5
    %p249 = scmp.ne.s32.totalorder %s244, %s246
    %p250 = scmp.eq.s32.totalorder %s21, 0
    %p251 = por %p249, %p250
    %p252 = scmp.ne.s32.totalorder %s244, %s246
    %p253 = scmp.eq.s32.totalorder %s26, 5
    %p254 = por %p252, %p253
    %p255 = scmp.ne.s32.totalorder %s246, %s247
    %p256 = scmp.eq.s32.totalorder %s26, 0
    %p257 = por %p255, %p256
    %p258 = scmp.ne.s32.totalorder %s246, %s247
    %p259 = scmp.eq.s32.totalorder %s27, 5
    %p260 = por %p258, %p259
    %p262 = scmp.ne.s32.totalorder %s247, %s261
    %p263 = scmp.eq.s32.totalorder %s27, 0
    %p264 = por %p262, %p263
    %s266 = sadd.s32 %s265, 1
    %p269 = scmp.eq.s32.totalorder %s21, 5
    %p270 = scmp.ne.s32.totalorder %s265, %s267
    %p271 = scmp.eq.s32.totalorder %s21, 0
    %p272 = por %p270, %p271
    %p273 = scmp.ne.s32.totalorder %s265, %s267
    %p274 = scmp.eq.s32.totalorder %s26, 5
    %p275 = por %p273, %p274
    %p276 = scmp.ne.s32.totalorder %s267, %s268
    %p277 = scmp.eq.s32.totalorder %s26, 0
    %p278 = por %p276, %p277
    %p279 = scmp.ne.s32.totalorder %s267, %s268
    %p280 = scmp.eq.s32.totalorder %s27, 5
    %p281 = por %p279, %p280
    %p283 = scmp.ne.s32.totalorder %s268, %s282
    %p284 = scmp.eq.s32.totalorder %s27, 0
    %p285 = por %p283, %p284
    %s287 = sadd.s32 %s286, 1
    %p290 = scmp.eq.s32.totalorder %s21, 5
    %p291 = scmp.ne.s32.totalorder %s286, %s288
    %p292 = scmp.eq.s32.totalorder %s21, 0
    %p293 = por %p291, %p292
    %p294 = scmp.ne.s32.totalorder %s286, %s288
    %p295 = scmp.eq.s32.totalorder %s26, 5
    %p296 = por %p294, %p295
    %p297 = scmp.ne.s32.totalorder %s288, %s289
    %p298 = scmp.eq.s32.totalorder %s26, 0
    %p299 = por %p297, %p298
    %p300 = scmp.ne.s32.totalorder %s288, %s289
    %p301 = scmp.eq.s32.totalorder %s27, 5
    %p302 = por %p300, %p301
    %p304 = scmp.ne.s32.totalorder %s289, %s303
    %p305 = scmp.eq.s32.totalorder %s27, 0
    %p306 = por %p304, %p305
    %s308 = sadd.s32 %s307, 1
    %p311 = scmp.eq.s32.totalorder %s21, 5
    %p312 = scmp.ne.s32.totalorder %s307, %s309
    %p313 = scmp.eq.s32.totalorder %s21, 0
    %p314 = por %p312, %p313
    %p315 = scmp.ne.s32.totalorder %s307, %s309
    %p316 = scmp.eq.s32.totalorder %s26, 5
    %p317 = por %p315, %p316
    %p318 = scmp.ne.s32.totalorder %s309, %s310
    %p319 = scmp.eq.s32.totalorder %s26, 0
    %p320 = por %p318, %p319
    %p321 = scmp.ne.s32.totalorder %s309, %s310
    %p322 = scmp.eq.s32.totalorder %s27, 5
    %p323 = por %p321, %p322
    %p325 = scmp.ne.s32.totalorder %s310, %s324
    %p326 = scmp.eq.s32.totalorder %s27, 0
    %p327 = por %p325, %p326
    %s329 = sadd.s32 %s328, 1
    %p332 = scmp.eq.s32.totalorder %s21, 5
    %p333 = scmp.ne.s32.totalorder %s328, %s330
    %p334 = scmp.eq.s32.totalorder %s21, 0
    %p335 = por %p333, %p334
    %p336 = scmp.ne.s32.totalorder %s328, %s330
    %p337 = scmp.eq.s32.totalorder %s26, 5
    %p338 = por %p336, %p337
    %p339 = scmp.ne.s32.totalorder %s330, %s331
    %p340 = scmp.eq.s32.totalorder %s26, 0
    %p341 = por %p339, %p340
    %p342 = scmp.ne.s32.totalorder %s330, %s331
    %p343 = scmp.eq.s32.totalorder %s27, 5
    %p344 = por %p342, %p343
    %p346 = scmp.ne.s32.totalorder %s331, %s345
    %p347 = scmp.eq.s32.totalorder %s27, 0
    %p348 = por %p346, %p347
    %s349 = ssub.s32 %s21, %s28
    %p350 = scmp.eq.s32.totalorder %s349, 0
    %s352 = sadd.s32 %s351, 1
    %s353 = scalar_select %p350, %s351, %s352
    %p356 = pneg %p350
    %p357 = scmp.eq.s32.totalorder %s21, 5
    %p358 = por %p356, %p357
    %p359 = scmp.ne.s32.totalorder %s351, %s354
    %p360 = scmp.eq.s32.totalorder %s21, 0
    %p361 = por %p359, %p360
    %p362 = scmp.ne.s32.totalorder %s351, %s354
    %p363 = scmp.eq.s32.totalorder %s26, 5
    %p364 = por %p362, %p363
    %p365 = scmp.ne.s32.totalorder %s354, %s355
    %p366 = scmp.eq.s32.totalorder %s26, 0
    %p367 = por %p365, %p366
    %p368 = scmp.ne.s32.totalorder %s354, %s355
    %p369 = scmp.eq.s32.totalorder %s27, 5
    %p370 = por %p368, %p369
    %p372 = scmp.ne.s32.totalorder %s355, %s371
    %p373 = scmp.eq.s32.totalorder %s27, 0
    %p374 = por %p372, %p373
    %p375 = scmp.le.s32.totalorder 1, %s21
    %p376 = scmp.lt.s32.totalorder %s21, 7
    %p377 = pnand %p375, %p376
    %p378 = pneg %p377
    // Predicated region
    $region9: #{doc_encoder_forward.2} parent=5 // pred_check
      _
    $region10: #{doc_encoder_forward.2} parent=5 // pred_check_branch
      %380 = sbr.rel (%p377) target = $region12
    $region11: #{doc_encoder_forward.2} parent=5 // pred_region
      %s381 = ssub.s32 %s21, 1
      // Predicated region
      $region13: #{doc_encoder_forward.2} parent=11 // pred_check
        %p382 = pneg %p68
      $region14: #{doc_encoder_forward.2} parent=11 // pred_check_branch
        %384 = sbr.rel (%p382) target = $region16
      $region15: #{doc_encoder_forward.2} parent=11 // pred_region
        _
      $region16: #{doc_encoder_forward.2} parent=11 // pred_fallthru
        _
      // Predicated region
      $region17: #{doc_encoder_forward.2} parent=11 // pred_check
        %p385 = pneg %p89
      $region18: #{doc_encoder_forward.2} parent=11 // pred_check_branch
        %387 = sbr.rel (%p385) target = $region20
      $region19: #{doc_encoder_forward.2} parent=11 // pred_region
        _
      $region20: #{doc_encoder_forward.2} parent=11 // pred_fallthru
        _
      // Predicated region
      $region21: #{doc_encoder_forward.2} parent=11 // pred_check
        %p388 = pneg %p110
      $region22: #{doc_encoder_forward.2} parent=11 // pred_check_branch
        %390 = sbr.rel (%p388) target = $region24
      $region23: #{doc_encoder_forward.2} parent=11 // pred_region
        _
      $region24: #{doc_encoder_forward.2} parent=11 // pred_fallthru
        _
      // Predicated region
      $region25: #{doc_encoder_forward.2} parent=11 // pred_check
        %p391 = pneg %p131
      $region26: #{doc_encoder_forward.2} parent=11 // pred_check_branch
        %393 = sbr.rel (%p391) target = $region28
      $region27: #{doc_encoder_forward.2} parent=11 // pred_region
        _
      $region28: #{doc_encoder_forward.2} parent=11 // pred_fallthru
        _
      // Predicated region
      $region29: #{doc_encoder_forward.2} parent=11 // pred_check
        %p394 = pneg %p152
      $region30: #{doc_encoder_forward.2} parent=11 // pred_check_branch
        %396 = sbr.rel (%p394) target = $region32
      $region31: #{doc_encoder_forward.2} parent=11 // pred_region
        _
      $region32: #{doc_encoder_forward.2} parent=11 // pred_fallthru
        _
      // Predicated region
      $region33: #{doc_encoder_forward.2} parent=11 // pred_check
        %p397 = pneg %p173
      $region34: #{doc_encoder_forward.2} parent=11 // pred_check_branch
        %399 = sbr.rel (%p397) target = $region36
      $region35: #{doc_encoder_forward.2} parent=11 // pred_region
        _
      $region36: #{doc_encoder_forward.2} parent=11 // pred_fallthru
        _
      // Predicated region
      $region37: #{doc_encoder_forward.2} parent=11 // pred_check
        %p400 = pneg %p194
      $region38: #{doc_encoder_forward.2} parent=11 // pred_check_branch
        %402 = sbr.rel (%p400) target = $region40
      $region39: #{doc_encoder_forward.2} parent=11 // pred_region
        _
      $region40: #{doc_encoder_forward.2} parent=11 // pred_fallthru
        _
      // Predicated region
      $region41: #{doc_encoder_forward.2} parent=11 // pred_check
        %p403 = pneg %p215
      $region42: #{doc_encoder_forward.2} parent=11 // pred_check_branch
        %405 = sbr.rel (%p403) target = $region44
      $region43: #{doc_encoder_forward.2} parent=11 // pred_region
        _
      $region44: #{doc_encoder_forward.2} parent=11 // pred_fallthru
        _
      // Predicated region
      $region45: #{doc_encoder_forward.2} parent=11 // pred_check
        %p406 = pneg %p236
      $region46: #{doc_encoder_forward.2} parent=11 // pred_check_branch
        %408 = sbr.rel (%p406) target = $region48
      $region47: #{doc_encoder_forward.2} parent=11 // pred_region
        _
      $region48: #{doc_encoder_forward.2} parent=11 // pred_fallthru
        _
      // Predicated region
      $region49: #{doc_encoder_forward.2} parent=11 // pred_check
        %p409 = pneg %p257
      $region50: #{doc_encoder_forward.2} parent=11 // pred_check_branch
        %411 = sbr.rel (%p409) target = $region52
      $region51: #{doc_encoder_forward.2} parent=11 // pred_region
        _
      $region52: #{doc_encoder_forward.2} parent=11 // pred_fallthru
        _
      // Predicated region
      $region53: #{doc_encoder_forward.2} parent=11 // pred_check
        %p412 = pneg %p278
      $region54: #{doc_encoder_forward.2} parent=11 // pred_check_branch
        %414 = sbr.rel (%p412) target = $region56
      $region55: #{doc_encoder_forward.2} parent=11 // pred_region
        _
      $region56: #{doc_encoder_forward.2} parent=11 // pred_fallthru
        _
      // Predicated region
      $region57: #{doc_encoder_forward.2} parent=11 // pred_check
        %p415 = pneg %p299
      $region58: #{doc_encoder_forward.2} parent=11 // pred_check_branch
        %417 = sbr.rel (%p415) target = $region60
      $region59: #{doc_encoder_forward.2} parent=11 // pred_region
        _
      $region60: #{doc_encoder_forward.2} parent=11 // pred_fallthru
        _
      // Predicated region
      $region61: #{doc_encoder_forward.2} parent=11 // pred_check
        %p418 = pneg %p320
      $region62: #{doc_encoder_forward.2} parent=11 // pred_check_branch
        %420 = sbr.rel (%p418) target = $region64
      $region63: #{doc_encoder_forward.2} parent=11 // pred_region
        _
      $region64: #{doc_encoder_forward.2} parent=11 // pred_fallthru
        _
      // Predicated region
      $region65: #{doc_encoder_forward.2} parent=11 // pred_check
        %p421 = pneg %p341
      $region66: #{doc_encoder_forward.2} parent=11 // pred_check_branch
        %423 = sbr.rel (%p421) target = $region68
      $region67: #{doc_encoder_forward.2} parent=11 // pred_region
        _
      $region68: #{doc_encoder_forward.2} parent=11 // pred_fallthru
        _
    $region12: #{doc_encoder_forward.2} parent=5 // pred_fallthru
      _
    %p424 = scmp.lt.s32.totalorder %s21, 6
    // Predicated region
    $region69: #{doc_encoder_forward.2} parent=5 // pred_check
      %p425 = pneg %p424
    $region70: #{doc_encoder_forward.2} parent=5 // pred_check_branch
      %427 = sbr.rel (%p425) target = $region72
    $region71: #{doc_encoder_forward.2} parent=5 // pred_region
      // Predicated region
      $region73: #{doc_encoder_forward.2} parent=71 // pred_check
        %p428 = pneg %p41
      $region74: #{doc_encoder_forward.2} parent=71 // pred_check_branch
        %430 = sbr.rel (%p428) target = $region76
      $region75: #{doc_encoder_forward.2} parent=71 // pred_region
        %p431 = scmp.lt.s32.totalorder %s21, 5
        %s432 = scalar_select %p431, %s21, 5
        %s433 = smul.addr %s432, 4
        %s434 = scalar_lea.vmem %s0, %s433
      $region76: #{doc_encoder_forward.2} parent=71 // pred_fallthru
        _
    $region72: #{doc_encoder_forward.2} parent=5 // pred_fallthru
      _
    %p435 = scmp.le.s32.totalorder 1, %s21
    %p436 = scmp.lt.s32.totalorder %s21, 7
    %p437 = pnand %p435, %p436
    %p438 = pneg %p437
    // Predicated region
    $region77: #{doc_encoder_forward.2} parent=5 // pred_check
      _
    $region78: #{doc_encoder_forward.2} parent=5 // pred_check_branch
      %440 = sbr.rel (%p437) target = $region80
    $region79: #{doc_encoder_forward.2} parent=5 // pred_region
      %s441 = ssub.s32 %s21, 1
      %p442 = scmp.lt.s32.totalorder %s26, 5
      %s443 = scalar_select %p442, %s26, 5
      %s444 = smul.addr %s443, 4
      %s445 = scalar_lea.vmem %s0, %s444
      %p446 = pneg %p47
      %p447 = pneg %p44
      %p448 = pneg %p68
      %p449 = pneg %p65
      %p450 = pneg %p89
      %p451 = pneg %p86
      %p452 = pneg %p110
      %p453 = pneg %p107
      %p454 = pneg %p131
      %p455 = pneg %p128
      %p456 = pneg %p152
      %p457 = pneg %p149
      %p458 = pneg %p173
      %p459 = pneg %p170
      %p460 = pneg %p194
      %p461 = pneg %p191
      %p462 = pneg %p215
      %p463 = pneg %p212
      %p464 = pneg %p236
      %p465 = pneg %p233
      %p466 = pneg %p257
      %p467 = pneg %p254
      %p468 = pneg %p278
      %p469 = pneg %p275
      %p470 = pneg %p299
      %p471 = pneg %p296
      %p472 = pneg %p320
      %p473 = pneg %p317
      %p474 = pneg %p341
      %p475 = pneg %p338
      %p476 = pneg %p367
      %p477 = pneg %p364
      %p478 = scmp.lt.s32.totalorder %s26, 5
      %s479 = scalar_select %p478, %s26, 5
      %s480 = smul.addr %s479, 8
      %s481 = scalar_lea.vmem %s15, %s480
      %p482 = scmp.lt.s32.totalorder %s26, 5
      %s483 = scalar_select %p482, %s26, 5
      %s484 = smul.addr %s483, 4
      %s485 = scalar_lea.vmem %s0, %s484
      %p486 = scmp.lt.s32.totalorder %s26, 5
      %s487 = scalar_select %p486, %s26, 5
      %s488 = smul.addr %s487, 8
      %s489 = scalar_lea.vmem %s15, %s488
      %v491 = vld [vmem:[%s485] sm:$0xf]
      %v492 = vunpack.c.l.bf16 %v491
      %v493 = vld [vmem:[%s1] sm:$0x1]
      %v494 = vld [vmem:[%s2] sm:$0x1]
      %vm495 = vcmask 261120
      %v496 = vsel %vm495, %v492, 0.0
      %497 = vadd.xlane.f32.xlu0 %v496
      %v498 = vpop.xlane.xlu0 %497
      %v499 = vrcp.pop 32.0
      %v500 = vmul.f32 32.0, %v499
      %v501 = vsub.f32 1.0, %v500
      %v502 = vmul.f32 %v499, %v501
      %v503 = vadd.f32 %v499, %v502
      %vm504 = vweird.f32 %v499
      %v505 = vsel %vm504, %v499, %v503
      %v506 = vmul.f32 %v498, %v505
      %v507 = vsub.f32 %v492, %v506
      %v508 = vmul.f32 %v507, %v507
      %v509 = vsel %vm495, %v508, 0.0
      %510 = vadd.xlane.f32.xlu0 %v509
      %v511 = vpop.xlane.xlu0 %510
      %v512 = vmul.f32 %v511, %v505
      %v513 = vadd.f32 %v512, 1e-06
      %v514 = vrsqrt.pop %v513
      %v515 = vmul.f32 %v514, %v513
      %v516 = vmul.f32 %v515, %v514
      %v517 = vmul.f32 0.5, %v516
      %v518 = vsub.f32 1.5, %v517
      %v519 = vmul.f32 %v514, %v518
      %vm520 = vweird.f32 %v513
      %vm521 = vweird.f32 %v514
      %vm522 = vmor %vm520, %vm521
      %v523 = vsel %vm522, %v514, %v519
      %v524 = vmul.f32 %v507, %v523
      %v526 = vperm.slane %v493, 0
      %v528 = vmul.f32 %v524, %v526
      %v530 = vperm.slane %v494, 0
      %v532 = vadd.f32 %v528, %v530
      %v533 = vpack.c.bf16 %v532, %v532
      %v534 = vld [vmem:[%s3] sm:$0xf]
      %v535 = vld [vmem:[%s3 + $0x4] sm:$0xf]
      %v536 = vld [vmem:[%s3 + $0x8] sm:$0xf]
      %v537 = vld [vmem:[%s3 + $0xc] sm:$0xf]
      %v538 = vld [vmem:[%s4] sm:$0x1]
      %v540 = vperm.slane %v538, 0
      %v546 = vunpack.c.l.b16 %v534
      %v547 = vunpack.c.l.b16 %v535
      %v548 = vunpack.c.l.b16 %v536
      %v549 = vunpack.c.l.b16 %v537
      %v550 = vpack.c.b16 %v547, %v546
      %v551 = vpack.c.b16 %v549, %v548
      %v555 = vsel %vm495, %v533, 0
      %557 = vmatpush.bf16.msra.mxu0 0
      %558 = vmatpush.bf16.msra.mxu0 0
      %559 = vmatpush.bf16.msra.mxu0 0
      %560 = vmatpush.bf16.msra.mxu0 0
      %561 = vmatpush.bf16.msra.mxu0 0
      %562 = vmatpush.bf16.msra.mxu0 0
      %563 = vmatpush.bf16.msra.mxu0 %v551
      %564 = vmatpush.bf16.msra.mxu0 %v550
      %565 = vmatmul.bf16.gmra.mxu0 %v555
      %v566 = vpop.f32.mrf.mxu0
      %v567 = vadd.f32 %v540, %v566
      %v568 = vpop.f32.mrf.mxu0
      %569 = vdwg.mxu0
      %v570 = vld [vmem:[%s5] sm:$0xf]
      %v571 = vld [vmem:[%s5 + $0x4] sm:$0xf]
      %v572 = vld [vmem:[%s5 + $0x8] sm:$0xf]
      %v573 = vld [vmem:[%s5 + $0xc] sm:$0xf]
      %v574 = vld [vmem:[%s6] sm:$0x1]
      %v575 = vpack.c.bf16 %v567, %v567
      %577 = vrot.lane.b32.xlu0 %v575, 96
      %v578 = vpop.permute.xlu0 %577
      %vm579 = vcmask 64512
      %v581 = vsel %vm579, %v575, 0
      %v584 = vsel %vm579, %v578, 0
      %586 = vmatpush.bf16.xpose.msra.mxu0 0
      %587 = vmatpush.bf16.xpose.msra.mxu0 0
      %588 = vmatpush.bf16.xpose.msra.mxu0 0
      %589 = vmatpush.bf16.xpose.msra.mxu0 0
      %590 = vmatpush.bf16.xpose.msra.mxu0 0
      %591 = vmatpush.bf16.xpose.msra.mxu0 0
      %592 = vmatpush.bf16.xpose.msra.mxu0 0
      %593 = vmatpush.bf16.xpose.msra.mxu0 %v584
      %594 = vmatmul.bf16.gmra.mxu0 %v581
      %v595 = vpop.f32.mrf.mxu0
      %v596 = vadd.f32 0.0, %v595
      %v597 = vpop.f32.mrf.mxu0
      %598 = vdwg.mxu0
      %v599 = vsel %vm579, %v596, -inf
      %600 = vmax.xlane.f32.xlu0 %v599
      %v601 = vpop.xlane.xlu0 %600
      %v602 = vsub.f32 %v596, %v601
      %v603 = vmul.f32 %v602, 1.442695
      %v604 = vpow.pop %v603
      %v605 = vsel %vm579, %v604, 0.0
      %606 = vadd.xlane.f32.xlu0 %v605
      %v607 = vpop.xlane.xlu0 %606
      %v608 = vrcp.pop %v607
      %v609 = vmul.f32 %v604, %v608
      %v610 = vpack.c.bf16 %v609, %v609
      %611 = vrot.lane.b32.xlu0 %v575, 64
      %v612 = vpop.permute.xlu0 %611
      %v614 = vsel %vm579, %v610, 0
      %vm616 = vcmask 1043456
      %v618 = vsel %vm616, %v612, 0
      %620 = vmatpush.bf16.msra.mxu0 0
      %621 = vmatpush.bf16.msra.mxu0 0
      %622 = vmatpush.bf16.msra.mxu0 0
      %623 = vmatpush.bf16.msra.mxu0 0
      %624 = vmatpush.bf16.msra.mxu0 0
      %625 = vmatpush.bf16.msra.mxu0 0
      %626 = vmatpush.bf16.msra.mxu0 0
      %627 = vmatpush.bf16.msra.mxu0 %v618
      %628 = vmatmul.bf16.gmra.mxu0 %v614
      %v629 = vpop.f32.mrf.mxu0
      %v630 = vadd.f32 0.0, %v629
      %v631 = vpop.f32.mrf.mxu0
      %632 = vdwg.mxu0
      %633 = vrot.lane.b32.xlu0 %v575, 120
      %v634 = vpop.permute.xlu0 %633
      %635 = vrot.lane.b32.xlu0 %v575, 88
      %v636 = vpop.permute.xlu0 %635
      %v638 = vsel %vm579, %v634, 0
      %v641 = vsel %vm579, %v636, 0
      %643 = vmatpush.bf16.xpose.msra.mxu0 0
      %644 = vmatpush.bf16.xpose.msra.mxu0 0
      %645 = vmatpush.bf16.xpose.msra.mxu0 0
      %646 = vmatpush.bf16.xpose.msra.mxu0 0
      %647 = vmatpush.bf16.xpose.msra.mxu0 0
      %648 = vmatpush.bf16.xpose.msra.mxu0 0
      %649 = vmatpush.bf16.xpose.msra.mxu0 0
      %650 = vmatpush.bf16.xpose.msra.mxu0 %v641
      %651 = vmatmul.bf16.gmra.mxu0 %v638
      %v652 = vpop.f32.mrf.mxu0
      %v653 = vadd.f32 0.0, %v652
      %v654 = vpop.f32.mrf.mxu0
      %655 = vdwg.mxu0
      %v656 = vsel %vm579, %v653, -inf
      %657 = vmax.xlane.f32.xlu0 %v656
      %v658 = vpop.xlane.xlu0 %657
      %v659 = vsub.f32 %v653, %v658
      %v660 = vmul.f32 %v659, 1.442695
      %v661 = vpow.pop %v660
      %v662 = vsel %vm579, %v661, 0.0
      %663 = vadd.xlane.f32.xlu0 %v662
      %v664 = vpop.xlane.xlu0 %663
      %v665 = vrcp.pop %v664
      %v666 = vmul.f32 %v661, %v665
      %v667 = vpack.c.bf16 %v666, %v666
      %668 = vrot.lane.b32.xlu0 %v575, 56
      %v669 = vpop.permute.xlu0 %668
      %v671 = vsel %vm579, %v667, 0
      %v674 = vsel %vm616, %v669, 0
      %676 = vmatpush.bf16.msra.mxu0 0
      %677 = vmatpush.bf16.msra.mxu0 0
      %678 = vmatpush.bf16.msra.mxu0 0
      %679 = vmatpush.bf16.msra.mxu0 0
      %680 = vmatpush.bf16.msra.mxu0 0
      %681 = vmatpush.bf16.msra.mxu0 0
      %682 = vmatpush.bf16.msra.mxu0 0
      %683 = vmatpush.bf16.msra.mxu0 %v674
      %684 = vmatmul.bf16.gmra.mxu0 %v671
      %v685 = vpop.f32.mrf.mxu0
      %v686 = vadd.f32 0.0, %v685
      %v687 = vpop.f32.mrf.mxu0
      %688 = vdwg.mxu0
      %689 = vrot.lane.b32.xlu0 %v575, 112
      %v690 = vpop.permute.xlu0 %689
      %691 = vrot.lane.b32.xlu0 %v575, 80
      %v692 = vpop.permute.xlu0 %691
      %v694 = vsel %vm579, %v690, 0
      %v697 = vsel %vm579, %v692, 0
      %699 = vmatpush.bf16.xpose.msra.mxu0 0
      %700 = vmatpush.bf16.xpose.msra.mxu0 0
      %701 = vmatpush.bf16.xpose.msra.mxu0 0
      %702 = vmatpush.bf16.xpose.msra.mxu0 0
      %703 = vmatpush.bf16.xpose.msra.mxu0 0
      %704 = vmatpush.bf16.xpose.msra.mxu0 0
      %705 = vmatpush.bf16.xpose.msra.mxu0 0
      %706 = vmatpush.bf16.xpose.msra.mxu0 %v697
      %707 = vmatmul.bf16.gmra.mxu0 %v694
      %v708 = vpop.f32.mrf.mxu0
      %v709 = vadd.f32 0.0, %v708
      %v710 = vpop.f32.mrf.mxu0
      %711 = vdwg.mxu0
      %v712 = vsel %vm579, %v709, -inf
      %713 = vmax.xlane.f32.xlu0 %v712
      %v714 = vpop.xlane.xlu0 %713
      %v715 = vsub.f32 %v709, %v714
      %v716 = vmul.f32 %v715, 1.442695
      %v717 = vpow.pop %v716
      %v718 = vsel %vm579, %v717, 0.0
      %719 = vadd.xlane.f32.xlu0 %v718
      %v720 = vpop.xlane.xlu0 %719
      %v721 = vrcp.pop %v720
      %v722 = vmul.f32 %v717, %v721
      %v723 = vpack.c.bf16 %v722, %v722
      %724 = vrot.lane.b32.xlu0 %v575, 48
      %v725 = vpop.permute.xlu0 %724
      %v727 = vsel %vm579, %v723, 0
      %v730 = vsel %vm616, %v725, 0
      %732 = vmatpush.bf16.msra.mxu0 0
      %733 = vmatpush.bf16.msra.mxu0 0
      %734 = vmatpush.bf16.msra.mxu0 0
      %735 = vmatpush.bf16.msra.mxu0 0
      %736 = vmatpush.bf16.msra.mxu0 0
      %737 = vmatpush.bf16.msra.mxu0 0
      %738 = vmatpush.bf16.msra.mxu0 0
      %739 = vmatpush.bf16.msra.mxu0 %v730
      %740 = vmatmul.bf16.gmra.mxu0 %v727
      %v741 = vpop.f32.mrf.mxu0
      %v742 = vadd.f32 0.0, %v741
      %v743 = vpop.f32.mrf.mxu0
      %744 = vdwg.mxu0
      %745 = vrot.lane.b32.xlu0 %v575, 104
      %v746 = vpop.permute.xlu0 %745
      %747 = vrot.lane.b32.xlu0 %v575, 72
      %v748 = vpop.permute.xlu0 %747
      %v750 = vsel %vm579, %v746, 0
      %v753 = vsel %vm579, %v748, 0
      %755 = vmatpush.bf16.xpose.msra.mxu0 0
      %756 = vmatpush.bf16.xpose.msra.mxu0 0
      %757 = vmatpush.bf16.xpose.msra.mxu0 0
      %758 = vmatpush.bf16.xpose.msra.mxu0 0
      %759 = vmatpush.bf16.xpose.msra.mxu0 0
      %760 = vmatpush.bf16.xpose.msra.mxu0 0
      %761 = vmatpush.bf16.xpose.msra.mxu0 0
      %762 = vmatpush.bf16.xpose.msra.mxu0 %v753
      %763 = vmatmul.bf16.gmra.mxu0 %v750
      %v764 = vpop.f32.mrf.mxu0
      %v765 = vadd.f32 0.0, %v764
      %v766 = vpop.f32.mrf.mxu0
      %767 = vdwg.mxu0
      %v768 = vsel %vm579, %v765, -inf
      %769 = vmax.xlane.f32.xlu0 %v768
      %v770 = vpop.xlane.xlu0 %769
      %v771 = vsub.f32 %v765, %v770
      %v772 = vmul.f32 %v771, 1.442695
      %v773 = vpow.pop %v772
      %v774 = vsel %vm579, %v773, 0.0
      %775 = vadd.xlane.f32.xlu0 %v774
      %v776 = vpop.xlane.xlu0 %775
      %v777 = vrcp.pop %v776
      %v778 = vmul.f32 %v773, %v777
      %v779 = vpack.c.bf16 %v778, %v778
      %780 = vrot.lane.b32.xlu0 %v575, 40
      %v781 = vpop.permute.xlu0 %780
      %v783 = vsel %vm579, %v779, 0
      %v786 = vsel %vm616, %v781, 0
      %788 = vmatpush.bf16.msra.mxu0 0
      %789 = vmatpush.bf16.msra.mxu0 0
      %790 = vmatpush.bf16.msra.mxu0 0
      %791 = vmatpush.bf16.msra.mxu0 0
      %792 = vmatpush.bf16.msra.mxu0 0
      %793 = vmatpush.bf16.msra.mxu0 0
      %794 = vmatpush.bf16.msra.mxu0 0
      %795 = vmatpush.bf16.msra.mxu0 %v786
      %796 = vmatmul.bf16.gmra.mxu0 %v783
      %v797 = vpop.f32.mrf.mxu0
      %v798 = vadd.f32 0.0, %v797
      %v799 = vpop.f32.mrf.mxu0
      %800 = vdwg.mxu0
      %802 = vrot.lane.b32.xlu0 %v686, 8
      %v803 = vpop.permute.xlu0 %802
      %806 = vrot.lane.b32.xlu0 %v742, 16
      %v807 = vpop.permute.xlu0 %806
      %810 = vrot.lane.b32.xlu0 %v798, 24
      %v811 = vpop.permute.xlu0 %810
      %v813 = vsel %vm579, %v630, %v803
      %vm814 = vcmask 130048
      %v815 = vsel %vm814, %v813, %v807
      %vm816 = vcmask 195584
      %v817 = vsel %vm816, %v815, %v811
      %v818 = vpack.c.bf16 %v817, %v817
      %v820 = vperm.slane %v574, 0
      %v826 = vunpack.c.l.b16 %v570
      %v827 = vunpack.c.l.b16 %v571
      %v828 = vunpack.c.l.b16 %v572
      %v829 = vunpack.c.l.b16 %v573
      %v830 = vpack.c.b16 %v827, %v826
      %v831 = vpack.c.b16 %v829, %v828
      %v835 = vsel %vm495, %v818, 0
      %837 = vmatpush.bf16.msra.mxu0 0
      %838 = vmatpush.bf16.msra.mxu0 0
      %839 = vmatpush.bf16.msra.mxu0 0
      %840 = vmatpush.bf16.msra.mxu0 0
      %841 = vmatpush.bf16.msra.mxu0 0
      %842 = vmatpush.bf16.msra.mxu0 0
      %843 = vmatpush.bf16.msra.mxu0 %v831
      %844 = vmatpush.bf16.msra.mxu0 %v830
      %845 = vmatmul.bf16.gmra.mxu0 %v835
      %v846 = vpop.f32.mrf.mxu0
      %v847 = vadd.f32 %v820, %v846
      %v848 = vpop.f32.mrf.mxu0
      %849 = vdwg.mxu0
      %v850 = vadd.f32 %v847, %v492
      %v851 = vld [vmem:[%s7] sm:$0x1]
      %v852 = vld [vmem:[%s8] sm:$0x1]
      %v853 = vld [vmem:[%s9] sm:$0xf]
      %v854 = vld [vmem:[%s9 + $0x4] sm:$0xf]
      %v855 = vld [vmem:[%s9 + $0x8] sm:$0xf]
      %v856 = vld [vmem:[%s9 + $0xc] sm:$0xf]
      %v857 = vld [vmem:[%s10] sm:$0x1]
      %v858 = vld [vmem:[%s11] sm:$0xf]
      %v859 = vld [vmem:[%s11 + $0x4] sm:$0xf]
      %v860 = vld [vmem:[%s11 + $0x8] sm:$0xf]
      %v861 = vld [vmem:[%s11 + $0xc] sm:$0xf]
      %v862 = vld [vmem:[%s11 + $0x10] sm:$0xf]
      %v863 = vld [vmem:[%s11 + $0x14] sm:$0xf]
      %v864 = vld [vmem:[%s11 + $0x18] sm:$0xf]
      %v865 = vld [vmem:[%s11 + $0x1c] sm:$0xf]
      %v866 = vld [vmem:[%s11 + $0x20] sm:$0xf]
      %v867 = vld [vmem:[%s11 + $0x24] sm:$0xf]
      %v868 = vld [vmem:[%s11 + $0x28] sm:$0xf]
      %v869 = vld [vmem:[%s11 + $0x2c] sm:$0xf]
      %v870 = vld [vmem:[%s11 + $0x30] sm:$0xf]
      %v871 = vld [vmem:[%s11 + $0x34] sm:$0xf]
      %v872 = vld [vmem:[%s11 + $0x38] sm:$0xf]
      %v873 = vld [vmem:[%s11 + $0x3c] sm:$0xf]
      %v874 = vld [vmem:[%s12] sm:$0x1]
      %v875 = vsel %vm495, %v850, 0.0
      %876 = vadd.xlane.f32.xlu0 %v875
      %v877 = vpop.xlane.xlu0 %876
      %v878 = vmul.f32 %v877, %v505
      %v879 = vsub.f32 %v850, %v878
      %v880 = vmul.f32 %v879, %v879
      %v881 = vsel %vm495, %v880, 0.0
      %882 = vadd.xlane.f32.xlu0 %v881
      %v883 = vpop.xlane.xlu0 %882
      %v884 = vmul.f32 %v883, %v505
      %v885 = vadd.f32 %v884, 1e-06
      %v886 = vrsqrt.pop %v885
      %v887 = vmul.f32 %v886, %v885
      %v888 = vmul.f32 %v887, %v886
      %v889 = vmul.f32 0.5, %v888
      %v890 = vsub.f32 1.5, %v889
      %v891 = vmul.f32 %v886, %v890
      %vm892 = vweird.f32 %v885
      %vm893 = vweird.f32 %v886
      %vm894 = vmor %vm892, %vm893
      %v895 = vsel %vm894, %v886, %v891
      %v896 = vmul.f32 %v879, %v895
      %v898 = vperm.slane %v851, 0
      %v900 = vmul.f32 %v896, %v898
      %v902 = vperm.slane %v852, 0
      %v904 = vadd.f32 %v900, %v902
      %v905 = vpack.c.bf16 %v904, %v904
      %v907 = vperm.slane %v857, 0
      %v913 = vunpack.c.l.b16 %v853
      %v914 = vunpack.c.l.b16 %v854
      %v915 = vunpack.c.l.b16 %v855
      %v916 = vunpack.c.l.b16 %v856
      %v917 = vpack.c.b16 %v914, %v913
      %v918 = vpack.c.b16 %v916, %v915
      %v922 = vsel %vm495, %v905, 0
      %924 = vmatpush.bf16.msra.mxu0 0
      %925 = vmatpush.bf16.msra.mxu0 0
      %926 = vmatpush.bf16.msra.mxu0 0
      %927 = vmatpush.bf16.msra.mxu0 0
      %928 = vmatpush.bf16.msra.mxu0 0
      %929 = vmatpush.bf16.msra.mxu0 0
      %930 = vmatpush.bf16.msra.mxu0 %v918
      %931 = vmatpush.bf16.msra.mxu0 %v917
      %932 = vmatmul.bf16.gmra.mxu0 %v922
      %v933 = vpop.f32.mrf.mxu0
      %v934 = vadd.f32 %v907, %v933
      %v935 = vpop.f32.mrf.mxu0
      %936 = vdwg.mxu0
      %v937 = vmax.f32 %v934, 0.0
      %v938 = vpack.c.bf16 %v937, %v937
      %v940 = vperm.slane %v874, 0
      %v958 = vunpack.c.l.b16 %v858
      %v959 = vunpack.c.l.b16 %v859
      %v960 = vunpack.c.l.b16 %v860
      %v961 = vunpack.c.l.b16 %v861
      %v962 = vunpack.c.l.b16 %v862
      %v963 = vunpack.c.l.b16 %v863
      %v964 = vunpack.c.l.b16 %v864
      %v965 = vunpack.c.l.b16 %v865
      %v966 = vunpack.c.l.b16 %v866
      %v967 = vunpack.c.l.b16 %v867
      %v968 = vunpack.c.l.b16 %v868
      %v969 = vunpack.c.l.b16 %v869
      %v970 = vunpack.c.l.b16 %v870
      %v971 = vunpack.c.l.b16 %v871
      %v972 = vunpack.c.l.b16 %v872
      %v973 = vunpack.c.l.b16 %v873
      %v974 = vpack.c.b16 %v959, %v958
      %v975 = vpack.c.b16 %v961, %v960
      %v976 = vpack.c.b16 %v963, %v962
      %v977 = vpack.c.b16 %v965, %v964
      %v978 = vpack.c.b16 %v967, %v966
      %v979 = vpack.c.b16 %v969, %v968
      %v980 = vpack.c.b16 %v971, %v970
      %v981 = vpack.c.b16 %v973, %v972
      %990 = vmatpush.bf16.msra.mxu0 %v981
      %991 = vmatpush.bf16.msra.mxu0 %v980
      %992 = vmatpush.bf16.msra.mxu0 %v979
      %993 = vmatpush.bf16.msra.mxu0 %v978
      %994 = vmatpush.bf16.msra.mxu0 %v977
      %995 = vmatpush.bf16.msra.mxu0 %v976
      %996 = vmatpush.bf16.msra.mxu0 %v975
      %997 = vmatpush.bf16.msra.mxu0 %v974
      %998 = vmatmul.bf16.gmra.mxu0 %v938
      %v999 = vpop.f32.mrf.mxu0
      %v1000 = vadd.f32 %v940, %v999
      %v1001 = vpop.f32.mrf.mxu0
      %1002 = vdwg.mxu0
      %v1003 = vadd.f32 %v1000, %v850
      %v1004 = vld [vmem:[%s13] sm:$0x1]
      %v1005 = vld [vmem:[%s14] sm:$0x1]
      %v1006 = vsel %vm495, %v1003, 0.0
      %1007 = vadd.xlane.f32.xlu0 %v1006
      %v1008 = vpop.xlane.xlu0 %1007
      %v1009 = vmul.f32 %v1008, %v505
      %v1010 = vsub.f32 %v1003, %v1009
      %v1011 = vmul.f32 %v1010, %v1010
      %v1012 = vsel %vm495, %v1011, 0.0
      %1013 = vadd.xlane.f32.xlu0 %v1012
      %v1014 = vpop.xlane.xlu0 %1013
      %v1015 = vmul.f32 %v1014, %v505
      %v1016 = vadd.f32 %v1015, 1e-06
      %v1017 = vrsqrt.pop %v1016
      %v1018 = vmul.f32 %v1017, %v1016
      %v1019 = vmul.f32 %v1018, %v1017
      %v1020 = vmul.f32 0.5, %v1019
      %v1021 = vsub.f32 1.5, %v1020
      %v1022 = vmul.f32 %v1017, %v1021
      %vm1023 = vweird.f32 %v1016
      %vm1024 = vweird.f32 %v1017
      %vm1025 = vmor %vm1023, %vm1024
      %v1026 = vsel %vm1025, %v1017, %v1022
      %v1027 = vmul.f32 %v1010, %v1026
      %v1029 = vperm.slane %v1004, 0
      %v1031 = vmul.f32 %v1027, %v1029
      %v1033 = vperm.slane %v1005, 0
      %v1035 = vadd.f32 %v1031, %v1033
      %1036 = vst.msk [vmem:[%s489] sm:$0xff] %vm495, %v1035
      %p1037 = scmp.lt.s32.totalorder %s26, 5
      %s1038 = scalar_select %p1037, %s26, 5
      %s1039 = smul.addr %s1038, 8
      %s1040 = scalar_lea.vmem %s15, %s1039
      // Predicated region
      $region81: #{doc_encoder_forward.2} parent=79 // pred_check
        %p1041 = pneg %p364
      $region82: #{doc_encoder_forward.2} parent=79 // pred_check_branch
        %1043 = sbr.rel (%p1041) target = $region84
      $region83: #{doc_encoder_forward.2} parent=79 // pred_region
        _
      $region84: #{doc_encoder_forward.2} parent=79 // pred_fallthru
        _
    $region80: #{doc_encoder_forward.2} parent=5 // pred_fallthru
      _
    %p1044 = scmp.le.s32.totalorder 2, %s21
    // Predicated region
    $region85: #{doc_encoder_forward.2} parent=5 // pred_check
      %p1045 = pneg %p1044
    $region86: #{doc_encoder_forward.2} parent=5 // pred_check_branch
      %1047 = sbr.rel (%p1045) target = $region88
    $region87: #{doc_encoder_forward.2} parent=5 // pred_region
      %s1048 = ssub.s32 %s21, 2
      // Predicated region
      $region89: #{doc_encoder_forward.2} parent=87 // pred_check
        %p1049 = pneg %p370
      $region90: #{doc_encoder_forward.2} parent=87 // pred_check_branch
        %1051 = sbr.rel (%p1049) target = $region92
      $region91: #{doc_encoder_forward.2} parent=87 // pred_region
        %p1052 = scmp.lt.s32.totalorder %s27, 5
        %s1053 = scalar_select %p1052, %s27, 5
        %s1054 = smul.addr %s1053, 8
        %s1055 = scalar_lea.vmem %s15, %s1054
      $region92: #{doc_encoder_forward.2} parent=87 // pred_fallthru
        _
    $region88: #{doc_encoder_forward.2} parent=5 // pred_fallthru
      _
  $region6: #{doc_encoder_forward.2} parent=0 // loop_footer
    %s25 = sadd.s32 1, %s21
  $region7: #{doc_encoder_forward.2} parent=0 // loop_footer_branch
    %20 = sbr.rel target = $region3
  $region8: #{doc_encoder_forward.2} parent=0 // loop_exit
    _

// kernel: doc_encoder_forward.3
$region0: #{doc_encoder_forward.3}
  #allocation0 [shape = 'u32[]', space=smem, size = 0x4, offset = 0x4, fixed_abs, tag = 'smem constant byte address 0x4 - core index']
  #allocation1 [shape = 'u32[72,128]{1,0:T(1,128)}', space=vmem, size = 0x9000, scoped, tag = 'internal scratch']
  %s0 = inlined_call_operand.smem [shape: u32[40], index: -1, kind: input, shape index: {}]
  %s1 = sld [smem:[%s0]]
  %s2 = scalar_lea.smem %s0, 1
  %s3 = sld [smem:[%s2]]
  %s4 = scalar_lea.smem %s0, 2
  %s5 = sld [smem:[%s4]]
  %s6 = scalar_lea.smem %s0, 3
  %s7 = sld [smem:[%s6]]
  %s8 = scalar_lea.smem %s0, 4
  %s9 = sld [smem:[%s8]]
  %s10 = scalar_lea.smem %s0, 5
  %s11 = sld [smem:[%s10]]
  %s12 = scalar_lea.smem %s0, 6
  %s13 = sld [smem:[%s12]]
  %s14 = scalar_lea.smem %s0, 7
  %s15 = sld [smem:[%s14]]
  %s16 = scalar_lea.smem %s0, 8
  %s17 = sld [smem:[%s16]]
  %s18 = scalar_lea.smem %s0, 9
  %s19 = sld [smem:[%s18]]
  %s20 = scalar_lea.smem %s0, 10
  %s21 = sld [smem:[%s20]]
  %s22 = scalar_lea.smem %s0, 11
  %s23 = sld [smem:[%s22]]
  %s24 = scalar_lea.smem %s0, 12
  %s25 = sld [smem:[%s24]]
  %s26 = scalar_lea.smem %s0, 13
  %s27 = sld [smem:[%s26]]
  %s28 = scalar_lea.smem %s0, 14
  %s29 = sld [smem:[%s28]]
  %s30 = scalar_lea.smem %s0, 15
  %s31 = sld [smem:[%s30]]
  %s32 = scalar_lea.smem %s0, 16
  %s33 = sld [smem:[%s32]]
  %s34 = scalar_lea.smem %s0, 17
  %s35 = sld [smem:[%s34]]
  %s36 = scalar_lea.smem %s0, 18
  %s37 = sld [smem:[%s36]]
  %s38 = scalar_lea.smem %s0, 19
  %s39 = sld [smem:[%s38]]
  %s40 = scalar_lea.smem %s0, 20
  %s41 = sld [smem:[%s40]]
  %s42 = scalar_lea.smem %s0, 21
  %s43 = sld [smem:[%s42]]
  %s44 = scalar_lea.smem %s0, 22
  %s45 = sld [smem:[%s44]]
  %s46 = scalar_lea.smem %s0, 23
  %s47 = sld [smem:[%s46]]
  %s48 = scalar_lea.smem %s0, 24
  %s49 = sld [smem:[%s48]]
  %s50 = scalar_lea.smem %s0, 25
  %s51 = sld [smem:[%s50]]
  %s52 = scalar_lea.smem %s0, 26
  %s53 = sld [smem:[%s52]]
  %s54 = scalar_lea.smem %s0, 27
  %s55 = sld [smem:[%s54]]
  %s56 = scalar_lea.smem %s0, 28
  %s57 = sld [smem:[%s56]]
  %s58 = scalar_lea.smem %s0, 29
  %s59 = sld [smem:[%s58]]
  %s60 = scalar_lea.smem %s0, 30
  %s61 = sld [smem:[%s60]]
  %s62 = scalar_lea.smem %s0, 31
  %s63 = sld [smem:[%s62]]
  %s64 = scalar_lea.smem %s0, 32
  %s65 = sld [smem:[%s64]]
  %s66 = scalar_lea.smem %s0, 33
  %s67 = sld [smem:[%s66]]
  %s68 = scalar_lea.smem %s0, 34
  %s69 = sld [smem:[%s68]]
  %s70 = scalar_lea.smem %s0, 35
  %s71 = sld [smem:[%s70]]
  %s72 = scalar_lea.smem %s0, 36
  %s73 = sld [smem:[%s72]]
  %s74 = scalar_lea.smem %s0, 37
  %s75 = sld [smem:[%s74]]
  %s76 = scalar_lea.smem %s0, 38
  %s77 = sld [smem:[%s76]]
  %s78 = scalar_lea.smem %s0, 39
  %s79 = sld [smem:[%s78]]
  %s80 = sld [smem:[#allocation0]]
  $region189: #{doc_encoder_forward.3} parent=0
    _
  %s82 = ssub.s32 1, %s80
  %s83 = scalar_select 0, %s82, %s80
  $region1: #{doc_encoder_forward.3} parent=0
    #allocation2 [shape = 'u8[8192]{0}', space=vmem, size = 0x2000, scoped, tag = 'output window, operand 0']
    #allocation3 [shape = 's32[2]{0}', space=sflag, size = 0x8, scoped, tag = 'scoped memory for doc_encoder_forward.3']
    %84 = vsyncpa [#allocation3], 0
    %s85 = scalar_lea.sflag [#allocation3], 1
    %86 = vsyncpa %s85, 0
    loop: start=0, step=1, limit=6
    $region2: #{doc_encoder_forward.3} parent=1 // loop_pre_header
      _
    $region3: #{doc_encoder_forward.3} parent=1 // loop_header
      %s88 = sphi 0, %s92
      %p89 = scmp.ge.s32.totalorder %s88, 6
      %s98 = sphi 0, %s100
      %s101 = sphi 0, %s98
      %s102 = sphi 0, %s101
      %s118 = sphi 0, %s102
      %s124 = sphi 0, %s126
      %s127 = sphi 0, %s124
      %s128 = sphi 0, %s127
      %s144 = sphi 0, %s128
      %s150 = sphi 0, %s152
      %s153 = sphi 0, %s150
      %s154 = sphi 0, %s153
      %s170 = sphi 0, %s154
      %s174 = sphi 0, %s174
      %s176 = sphi 0, %s174
      %s177 = sphi 0, %s176
      %s191 = sphi 0, %s177
      %s195 = sphi 0, %s195
      %s197 = sphi 0, %s195
      %s198 = sphi 0, %s197
      %s212 = sphi 0, %s198
      %s216 = sphi 0, %s216
      %s218 = sphi 0, %s216
      %s219 = sphi 0, %s218
      %s233 = sphi 0, %s219
      %s237 = sphi 0, %s237
      %s239 = sphi 0, %s237
      %s240 = sphi 0, %s239
      %s254 = sphi 0, %s240
      %s258 = sphi 0, %s258
      %s260 = sphi 0, %s258
      %s261 = sphi 0, %s260
      %s275 = sphi 0, %s261
      %s279 = sphi 0, %s279
      %s281 = sphi 0, %s279
      %s282 = sphi 0, %s281
      %s296 = sphi 0, %s282
      %s300 = sphi 0, %s300
      %s302 = sphi 0, %s300
      %s303 = sphi 0, %s302
      %s317 = sphi 0, %s303
      %s321 = sphi 0, %s321
      %s323 = sphi 0, %s321
      %s324 = sphi 0, %s323
      %s338 = sphi 0, %s324
      %s342 = sphi 0, %s342
      %s344 = sphi 0, %s342
      %s345 = sphi 0, %s344
      %s359 = sphi 0, %s345
      %s363 = sphi 0, %s363
      %s365 = sphi 0, %s363
      %s366 = sphi 0, %s365
      %s380 = sphi 0, %s366
      %s384 = sphi 0, %s384
      %s386 = sphi 0, %s384
      %s387 = sphi 0, %s386
      %s401 = sphi 0, %s387
      %s405 = sphi 0, %s405
      %s407 = sphi 0, %s405
      %s408 = sphi 0, %s407
      %s422 = sphi 0, %s408
      %s426 = sphi 0, %s426
      %s428 = sphi 0, %s426
      %s429 = sphi 0, %s428
      %s443 = sphi 0, %s429
      %s447 = sphi 0, %s447
      %s449 = sphi 0, %s447
      %s450 = sphi 0, %s449
      %s464 = sphi 0, %s450
      %s468 = sphi 0, %s468
      %s470 = sphi 0, %s468
      %s471 = sphi 0, %s470
      %s485 = sphi 0, %s471
      %s489 = sphi 0, %s489
      %s491 = sphi 0, %s489
      %s492 = sphi 0, %s491
      %s506 = sphi 0, %s492
      %s510 = sphi 0, %s510
      %s512 = sphi 0, %s510
      %s513 = sphi 0, %s512
      %s527 = sphi 0, %s513
      %s531 = sphi 0, %s531
      %s533 = sphi 0, %s531
      %s534 = sphi 0, %s533
      %s548 = sphi 0, %s534
      %s552 = sphi 0, %s552
      %s554 = sphi 0, %s552
      %s555 = sphi 0, %s554
      %s569 = sphi 0, %s555
      %s573 = sphi 0, %s573
      %s575 = sphi 0, %s573
      %s576 = sphi 0, %s575
      %s590 = sphi 0, %s576
      %s594 = sphi 0, %s594
      %s596 = sphi 0, %s594
      %s597 = sphi 0, %s596
      %s611 = sphi 0, %s597
      %s615 = sphi 0, %s615
      %s617 = sphi 0, %s615
      %s618 = sphi 0, %s617
      %s632 = sphi 0, %s618
      %s636 = sphi 0, %s636
      %s638 = sphi 0, %s636
      %s639 = sphi 0, %s638
      %s653 = sphi 0, %s639
      %s657 = sphi 0, %s657
      %s659 = sphi 0, %s657
      %s660 = sphi 0, %s659
      %s674 = sphi 0, %s660
      %s678 = sphi 0, %s678
      %s680 = sphi 0, %s678
      %s681 = sphi 0, %s680
      %s695 = sphi 0, %s681
      %s699 = sphi 0, %s699
      %s701 = sphi 0, %s699
      %s702 = sphi 0, %s701
      %s716 = sphi 0, %s702
      %s720 = sphi 0, %s720
      %s722 = sphi 0, %s720
      %s723 = sphi 0, %s722
      %s737 = sphi 0, %s723
      %s741 = sphi 0, %s741
      %s743 = sphi 0, %s741
      %s744 = sphi 0, %s743
      %s758 = sphi 0, %s744
      %s762 = sphi 0, %s762
      %s764 = sphi 0, %s762
      %s765 = sphi 0, %s764
      %s779 = sphi 0, %s765
      %s783 = sphi 0, %s783
      %s785 = sphi 0, %s783
      %s786 = sphi 0, %s785
      %s800 = sphi 0, %s786
      %s804 = sphi 0, %s804
      %s806 = sphi 0, %s804
      %s807 = sphi 0, %s806
      %s821 = sphi 0, %s807
      %s825 = sphi 0, %s825
      %s827 = sphi 0, %s825
      %s828 = sphi 0, %s827
      %s842 = sphi 0, %s828
      %s846 = sphi 0, %s846
      %s848 = sphi 0, %s846
      %s849 = sphi 0, %s848
      %s863 = sphi 0, %s849
      %s867 = sphi 0, %s867
      %s869 = sphi 0, %s867
      %s870 = sphi 0, %s869
      %s884 = sphi 0, %s870
      %s888 = sphi 0, %s888
      %s890 = sphi 0, %s888
      %s891 = sphi 0, %s890
      %s905 = sphi 0, %s891
      %s909 = sphi 0, %s909
      %s911 = sphi 0, %s909
      %s912 = sphi 0, %s911
      %s926 = sphi 0, %s912
      %s932 = sphi 0, %s934
      %s935 = sphi 0, %s932
      %s936 = sphi 0, %s935
      %s952 = sphi 0, %s936
    $region4: #{doc_encoder_forward.3} parent=1 // loop_header_branch
      %91 = sbr.rel (%p89) target = $region8
    $region5: #{doc_encoder_forward.3} parent=1 // loop_body
      %s93 = ssub.s32 %s88, 1
      %s94 = ssub.s32 %s88, 2
      %s95 = sadd.s32 %s88, 1
      %s96 = ssub.s32 %s88, %s95
      %p97 = scmp.eq.s32.totalorder %s96, 0
      %s99 = sadd.s32 %s98, 1
      %s100 = scalar_select %p97, %s98, %s99
      %p103 = pneg %p97
      %p104 = scmp.eq.s32.totalorder %s88, 3
      %p105 = por %p103, %p104
      %p106 = scmp.ne.s32.totalorder %s98, %s101
      %p107 = scmp.eq.s32.totalorder %s88, 0
      %p108 = por %p106, %p107
      %p109 = scmp.ne.s32.totalorder %s98, %s101
      %p110 = scmp.eq.s32.totalorder %s93, 3
      %p111 = por %p109, %p110
      %p112 = scmp.ne.s32.totalorder %s101, %s102
      %p113 = scmp.eq.s32.totalorder %s93, 0
      %p114 = por %p112, %p113
      %p115 = scmp.ne.s32.totalorder %s101, %s102
      %p116 = scmp.eq.s32.totalorder %s94, 3
      %p117 = por %p115, %p116
      %p119 = scmp.ne.s32.totalorder %s102, %s118
      %p120 = scmp.eq.s32.totalorder %s94, 0
      %p121 = por %p119, %p120
      %s122 = ssub.s32 %s88, %s95
      %p123 = scmp.eq.s32.totalorder %s122, 0
      %s125 = sadd.s32 %s124, 1
      %s126 = scalar_select %p123, %s124, %s125
      %p129 = pneg %p123
      %p130 = scmp.eq.s32.totalorder %s88, 3
      %p131 = por %p129, %p130
      %p132 = scmp.ne.s32.totalorder %s124, %s127
      %p133 = scmp.eq.s32.totalorder %s88, 0
      %p134 = por %p132, %p133
      %p135 = scmp.ne.s32.totalorder %s124, %s127
      %p136 = scmp.eq.s32.totalorder %s93, 3
      %p137 = por %p135, %p136
      %p138 = scmp.ne.s32.totalorder %s127, %s128
      %p139 = scmp.eq.s32.totalorder %s93, 0
      %p140 = por %p138, %p139
      %p141 = scmp.ne.s32.totalorder %s127, %s128
      %p142 = scmp.eq.s32.totalorder %s94, 3
      %p143 = por %p141, %p142
      %p145 = scmp.ne.s32.totalorder %s128, %s144
      %p146 = scmp.eq.s32.totalorder %s94, 0
      %p147 = por %p145, %p146
      %s148 = ssub.s32 %s88, %s95
      %p149 = scmp.eq.s32.totalorder %s148, 0
      %s151 = sadd.s32 %s150, 1
      %s152 = scalar_select %p149, %s150, %s151
      %p155 = pneg %p149
      %p156 = scmp.eq.s32.totalorder %s88, 3
      %p157 = por %p155, %p156
      %p158 = scmp.ne.s32.totalorder %s150, %s153
      %p159 = scmp.eq.s32.totalorder %s88, 0
      %p160 = por %p158, %p159
      %p161 = scmp.ne.s32.totalorder %s150, %s153
      %p162 = scmp.eq.s32.totalorder %s93, 3
      %p163 = por %p161, %p162
      %p164 = scmp.ne.s32.totalorder %s153, %s154
      %p165 = scmp.eq.s32.totalorder %s93, 0
      %p166 = por %p164, %p165
      %p167 = scmp.ne.s32.totalorder %s153, %s154
      %p168 = scmp.eq.s32.totalorder %s94, 3
      %p169 = por %p167, %p168
      %p171 = scmp.ne.s32.totalorder %s154, %s170
      %p172 = scmp.eq.s32.totalorder %s94, 0
      %p173 = por %p171, %p172
      %s175 = sadd.s32 %s174, 1
      %p178 = scmp.eq.s32.totalorder %s88, 3
      %p179 = scmp.ne.s32.totalorder %s174, %s176
      %p180 = scmp.eq.s32.totalorder %s88, 0
      %p181 = por %p179, %p180
      %p182 = scmp.ne.s32.totalorder %s174, %s176
      %p183 = scmp.eq.s32.totalorder %s93, 3
      %p184 = por %p182, %p183
      %p185 = scmp.ne.s32.totalorder %s176, %s177
      %p186 = scmp.eq.s32.totalorder %s93, 0
      %p187 = por %p185, %p186
      %p188 = scmp.ne.s32.totalorder %s176, %s177
      %p189 = scmp.eq.s32.totalorder %s94, 3
      %p190 = por %p188, %p189
      %p192 = scmp.ne.s32.totalorder %s177, %s191
      %p193 = scmp.eq.s32.totalorder %s94, 0
      %p194 = por %p192, %p193
      %s196 = sadd.s32 %s195, 1
      %p199 = scmp.eq.s32.totalorder %s88, 3
      %p200 = scmp.ne.s32.totalorder %s195, %s197
      %p201 = scmp.eq.s32.totalorder %s88, 0
      %p202 = por %p200, %p201
      %p203 = scmp.ne.s32.totalorder %s195, %s197
      %p204 = scmp.eq.s32.totalorder %s93, 3
      %p205 = por %p203, %p204
      %p206 = scmp.ne.s32.totalorder %s197, %s198
      %p207 = scmp.eq.s32.totalorder %s93, 0
      %p208 = por %p206, %p207
      %p209 = scmp.ne.s32.totalorder %s197, %s198
      %p210 = scmp.eq.s32.totalorder %s94, 3
      %p211 = por %p209, %p210
      %p213 = scmp.ne.s32.totalorder %s198, %s212
      %p214 = scmp.eq.s32.totalorder %s94, 0
      %p215 = por %p213, %p214
      %s217 = sadd.s32 %s216, 1
      %p220 = scmp.eq.s32.totalorder %s88, 3
      %p221 = scmp.ne.s32.totalorder %s216, %s218
      %p222 = scmp.eq.s32.totalorder %s88, 0
      %p223 = por %p221, %p222
      %p224 = scmp.ne.s32.totalorder %s216, %s218
      %p225 = scmp.eq.s32.totalorder %s93, 3
      %p226 = por %p224, %p225
      %p227 = scmp.ne.s32.totalorder %s218, %s219
      %p228 = scmp.eq.s32.totalorder %s93, 0
      %p229 = por %p227, %p228
      %p230 = scmp.ne.s32.totalorder %s218, %s219
      %p231 = scmp.eq.s32.totalorder %s94, 3
      %p232 = por %p230, %p231
      %p234 = scmp.ne.s32.totalorder %s219, %s233
      %p235 = scmp.eq.s32.totalorder %s94, 0
      %p236 = por %p234, %p235
      %s238 = sadd.s32 %s237, 1
      %p241 = scmp.eq.s32.totalorder %s88, 3
      %p242 = scmp.ne.s32.totalorder %s237, %s239
      %p243 = scmp.eq.s32.totalorder %s88, 0
      %p244 = por %p242, %p243
      %p245 = scmp.ne.s32.totalorder %s237, %s239
      %p246 = scmp.eq.s32.totalorder %s93, 3
      %p247 = por %p245, %p246
      %p248 = scmp.ne.s32.totalorder %s239, %s240
      %p249 = scmp.eq.s32.totalorder %s93, 0
      %p250 = por %p248, %p249
      %p251 = scmp.ne.s32.totalorder %s239, %s240
      %p252 = scmp.eq.s32.totalorder %s94, 3
      %p253 = por %p251, %p252
      %p255 = scmp.ne.s32.totalorder %s240, %s254
      %p256 = scmp.eq.s32.totalorder %s94, 0
      %p257 = por %p255, %p256
      %s259 = sadd.s32 %s258, 1
      %p262 = scmp.eq.s32.totalorder %s88, 3
      %p263 = scmp.ne.s32.totalorder %s258, %s260
      %p264 = scmp.eq.s32.totalorder %s88, 0
      %p265 = por %p263, %p264
      %p266 = scmp.ne.s32.totalorder %s258, %s260
      %p267 = scmp.eq.s32.totalorder %s93, 3
      %p268 = por %p266, %p267
      %p269 = scmp.ne.s32.totalorder %s260, %s261
      %p270 = scmp.eq.s32.totalorder %s93, 0
      %p271 = por %p269, %p270
      %p272 = scmp.ne.s32.totalorder %s260, %s261
      %p273 = scmp.eq.s32.totalorder %s94, 3
      %p274 = por %p272, %p273
      %p276 = scmp.ne.s32.totalorder %s261, %s275
      %p277 = scmp.eq.s32.totalorder %s94, 0
      %p278 = por %p276, %p277
      %s280 = sadd.s32 %s279, 1
      %p283 = scmp.eq.s32.totalorder %s88, 3
      %p284 = scmp.ne.s32.totalorder %s279, %s281
      %p285 = scmp.eq.s32.totalorder %s88, 0
      %p286 = por %p284, %p285
      %p287 = scmp.ne.s32.totalorder %s279, %s281
      %p288 = scmp.eq.s32.totalorder %s93, 3
      %p289 = por %p287, %p288
      %p290 = scmp.ne.s32.totalorder %s281, %s282
      %p291 = scmp.eq.s32.totalorder %s93, 0
      %p292 = por %p290, %p291
      %p293 = scmp.ne.s32.totalorder %s281, %s282
      %p294 = scmp.eq.s32.totalorder %s94, 3
      %p295 = por %p293, %p294
      %p297 = scmp.ne.s32.totalorder %s282, %s296
      %p298 = scmp.eq.s32.totalorder %s94, 0
      %p299 = por %p297, %p298
      %s301 = sadd.s32 %s300, 1
      %p304 = scmp.eq.s32.totalorder %s88, 3
      %p305 = scmp.ne.s32.totalorder %s300, %s302
      %p306 = scmp.eq.s32.totalorder %s88, 0
      %p307 = por %p305, %p306
      %p308 = scmp.ne.s32.totalorder %s300, %s302
      %p309 = scmp.eq.s32.totalorder %s93, 3
      %p310 = por %p308, %p309
      %p311 = scmp.ne.s32.totalorder %s302, %s303
      %p312 = scmp.eq.s32.totalorder %s93, 0
      %p313 = por %p311, %p312
      %p314 = scmp.ne.s32.totalorder %s302, %s303
      %p315 = scmp.eq.s32.totalorder %s94, 3
      %p316 = por %p314, %p315
      %p318 = scmp.ne.s32.totalorder %s303, %s317
      %p319 = scmp.eq.s32.totalorder %s94, 0
      %p320 = por %p318, %p319
      %s322 = sadd.s32 %s321, 1
      %p325 = scmp.eq.s32.totalorder %s88, 3
      %p326 = scmp.ne.s32.totalorder %s321, %s323
      %p327 = scmp.eq.s32.totalorder %s88, 0
      %p328 = por %p326, %p327
      %p329 = scmp.ne.s32.totalorder %s321, %s323
      %p330 = scmp.eq.s32.totalorder %s93, 3
      %p331 = por %p329, %p330
      %p332 = scmp.ne.s32.totalorder %s323, %s324
      %p333 = scmp.eq.s32.totalorder %s93, 0
      %p334 = por %p332, %p333
      %p335 = scmp.ne.s32.totalorder %s323, %s324
      %p336 = scmp.eq.s32.totalorder %s94, 3
      %p337 = por %p335, %p336
      %p339 = scmp.ne.s32.totalorder %s324, %s338
      %p340 = scmp.eq.s32.totalorder %s94, 0
      %p341 = por %p339, %p340
      %s343 = sadd.s32 %s342, 1
      %p346 = scmp.eq.s32.totalorder %s88, 3
      %p347 = scmp.ne.s32.totalorder %s342, %s344
      %p348 = scmp.eq.s32.totalorder %s88, 0
      %p349 = por %p347, %p348
      %p350 = scmp.ne.s32.totalorder %s342, %s344
      %p351 = scmp.eq.s32.totalorder %s93, 3
      %p352 = por %p350, %p351
      %p353 = scmp.ne.s32.totalorder %s344, %s345
      %p354 = scmp.eq.s32.totalorder %s93, 0
      %p355 = por %p353, %p354
      %p356 = scmp.ne.s32.totalorder %s344, %s345
      %p357 = scmp.eq.s32.totalorder %s94, 3
      %p358 = por %p356, %p357
      %p360 = scmp.ne.s32.totalorder %s345, %s359
      %p361 = scmp.eq.s32.totalorder %s94, 0
      %p362 = por %p360, %p361
      %s364 = sadd.s32 %s363, 1
      %p367 = scmp.eq.s32.totalorder %s88, 3
      %p368 = scmp.ne.s32.totalorder %s363, %s365
      %p369 = scmp.eq.s32.totalorder %s88, 0
      %p370 = por %p368, %p369
      %p371 = scmp.ne.s32.totalorder %s363, %s365
      %p372 = scmp.eq.s32.totalorder %s93, 3
      %p373 = por %p371, %p372
      %p374 = scmp.ne.s32.totalorder %s365, %s366
      %p375 = scmp.eq.s32.totalorder %s93, 0
      %p376 = por %p374, %p375
      %p377 = scmp.ne.s32.totalorder %s365, %s366
      %p378 = scmp.eq.s32.totalorder %s94, 3
      %p379 = por %p377, %p378
      %p381 = scmp.ne.s32.totalorder %s366, %s380
      %p382 = scmp.eq.s32.totalorder %s94, 0
      %p383 = por %p381, %p382
      %s385 = sadd.s32 %s384, 1
      %p388 = scmp.eq.s32.totalorder %s88, 3
      %p389 = scmp.ne.s32.totalorder %s384, %s386
      %p390 = scmp.eq.s32.totalorder %s88, 0
      %p391 = por %p389, %p390
      %p392 = scmp.ne.s32.totalorder %s384, %s386
      %p393 = scmp.eq.s32.totalorder %s93, 3
      %p394 = por %p392, %p393
      %p395 = scmp.ne.s32.totalorder %s386, %s387
      %p396 = scmp.eq.s32.totalorder %s93, 0
      %p397 = por %p395, %p396
      %p398 = scmp.ne.s32.totalorder %s386, %s387
      %p399 = scmp.eq.s32.totalorder %s94, 3
      %p400 = por %p398, %p399
      %p402 = scmp.ne.s32.totalorder %s387, %s401
      %p403 = scmp.eq.s32.totalorder %s94, 0
      %p404 = por %p402, %p403
      %s406 = sadd.s32 %s405, 1
      %p409 = scmp.eq.s32.totalorder %s88, 3
      %p410 = scmp.ne.s32.totalorder %s405, %s407
      %p411 = scmp.eq.s32.totalorder %s88, 0
      %p412 = por %p410, %p411
      %p413 = scmp.ne.s32.totalorder %s405, %s407
      %p414 = scmp.eq.s32.totalorder %s93, 3
      %p415 = por %p413, %p414
      %p416 = scmp.ne.s32.totalorder %s407, %s408
      %p417 = scmp.eq.s32.totalorder %s93, 0
      %p418 = por %p416, %p417
      %p419 = scmp.ne.s32.totalorder %s407, %s408
      %p420 = scmp.eq.s32.totalorder %s94, 3
      %p421 = por %p419, %p420
      %p423 = scmp.ne.s32.totalorder %s408, %s422
      %p424 = scmp.eq.s32.totalorder %s94, 0
      %p425 = por %p423, %p424
      %s427 = sadd.s32 %s426, 1
      %p430 = scmp.eq.s32.totalorder %s88, 3
      %p431 = scmp.ne.s32.totalorder %s426, %s428
      %p432 = scmp.eq.s32.totalorder %s88, 0
      %p433 = por %p431, %p432
      %p434 = scmp.ne.s32.totalorder %s426, %s428
      %p435 = scmp.eq.s32.totalorder %s93, 3
      %p436 = por %p434, %p435
      %p437 = scmp.ne.s32.totalorder %s428, %s429
      %p438 = scmp.eq.s32.totalorder %s93, 0
      %p439 = por %p437, %p438
      %p440 = scmp.ne.s32.totalorder %s428, %s429
      %p441 = scmp.eq.s32.totalorder %s94, 3
      %p442 = por %p440, %p441
      %p444 = scmp.ne.s32.totalorder %s429, %s443
      %p445 = scmp.eq.s32.totalorder %s94, 0
      %p446 = por %p444, %p445
      %s448 = sadd.s32 %s447, 1
      %p451 = scmp.eq.s32.totalorder %s88, 3
      %p452 = scmp.ne.s32.totalorder %s447, %s449
      %p453 = scmp.eq.s32.totalorder %s88, 0
      %p454 = por %p452, %p453
      %p455 = scmp.ne.s32.totalorder %s447, %s449
      %p456 = scmp.eq.s32.totalorder %s93, 3
      %p457 = por %p455, %p456
      %p458 = scmp.ne.s32.totalorder %s449, %s450
      %p459 = scmp.eq.s32.totalorder %s93, 0
      %p460 = por %p458, %p459
      %p461 = scmp.ne.s32.totalorder %s449, %s450
      %p462 = scmp.eq.s32.totalorder %s94, 3
      %p463 = por %p461, %p462
      %p465 = scmp.ne.s32.totalorder %s450, %s464
      %p466 = scmp.eq.s32.totalorder %s94, 0
      %p467 = por %p465, %p466
      %s469 = sadd.s32 %s468, 1
      %p472 = scmp.eq.s32.totalorder %s88, 3
      %p473 = scmp.ne.s32.totalorder %s468, %s470
      %p474 = scmp.eq.s32.totalorder %s88, 0
      %p475 = por %p473, %p474
      %p476 = scmp.ne.s32.totalorder %s468, %s470
      %p477 = scmp.eq.s32.totalorder %s93, 3
      %p478 = por %p476, %p477
      %p479 = scmp.ne.s32.totalorder %s470, %s471
      %p480 = scmp.eq.s32.totalorder %s93, 0
      %p481 = por %p479, %p480
      %p482 = scmp.ne.s32.totalorder %s470, %s471
      %p483 = scmp.eq.s32.totalorder %s94, 3
      %p484 = por %p482, %p483
      %p486 = scmp.ne.s32.totalorder %s471, %s485
      %p487 = scmp.eq.s32.totalorder %s94, 0
      %p488 = por %p486, %p487
      %s490 = sadd.s32 %s489, 1
      %p493 = scmp.eq.s32.totalorder %s88, 3
      %p494 = scmp.ne.s32.totalorder %s489, %s491
      %p495 = scmp.eq.s32.totalorder %s88, 0
      %p496 = por %p494, %p495
      %p497 = scmp.ne.s32.totalorder %s489, %s491
      %p498 = scmp.eq.s32.totalorder %s93, 3
      %p499 = por %p497, %p498
      %p500 = scmp.ne.s32.totalorder %s491, %s492
      %p501 = scmp.eq.s32.totalorder %s93, 0
      %p502 = por %p500, %p501
      %p503 = scmp.ne.s32.totalorder %s491, %s492
      %p504 = scmp.eq.s32.totalorder %s94, 3
      %p505 = por %p503, %p504
      %p507 = scmp.ne.s32.totalorder %s492, %s506
      %p508 = scmp.eq.s32.totalorder %s94, 0
      %p509 = por %p507, %p508
      %s511 = sadd.s32 %s510, 1
      %p514 = scmp.eq.s32.totalorder %s88, 3
      %p515 = scmp.ne.s32.totalorder %s510, %s512
      %p516 = scmp.eq.s32.totalorder %s88, 0
      %p517 = por %p515, %p516
      %p518 = scmp.ne.s32.totalorder %s510, %s512
      %p519 = scmp.eq.s32.totalorder %s93, 3
      %p520 = por %p518, %p519
      %p521 = scmp.ne.s32.totalorder %s512, %s513
      %p522 = scmp.eq.s32.totalorder %s93, 0
      %p523 = por %p521, %p522
      %p524 = scmp.ne.s32.totalorder %s512, %s513
      %p525 = scmp.eq.s32.totalorder %s94, 3
      %p526 = por %p524, %p525
      %p528 = scmp.ne.s32.totalorder %s513, %s527
      %p529 = scmp.eq.s32.totalorder %s94, 0
      %p530 = por %p528, %p529
      %s532 = sadd.s32 %s531, 1
      %p535 = scmp.eq.s32.totalorder %s88, 3
      %p536 = scmp.ne.s32.totalorder %s531, %s533
      %p537 = scmp.eq.s32.totalorder %s88, 0
      %p538 = por %p536, %p537
      %p539 = scmp.ne.s32.totalorder %s531, %s533
      %p540 = scmp.eq.s32.totalorder %s93, 3
      %p541 = por %p539, %p540
      %p542 = scmp.ne.s32.totalorder %s533, %s534
      %p543 = scmp.eq.s32.totalorder %s93, 0
      %p544 = por %p542, %p543
      %p545 = scmp.ne.s32.totalorder %s533, %s534
      %p546 = scmp.eq.s32.totalorder %s94, 3
      %p547 = por %p545, %p546
      %p549 = scmp.ne.s32.totalorder %s534, %s548
      %p550 = scmp.eq.s32.totalorder %s94, 0
      %p551 = por %p549, %p550
      %s553 = sadd.s32 %s552, 1
      %p556 = scmp.eq.s32.totalorder %s88, 3
      %p557 = scmp.ne.s32.totalorder %s552, %s554
      %p558 = scmp.eq.s32.totalorder %s88, 0
      %p559 = por %p557, %p558
      %p560 = scmp.ne.s32.totalorder %s552, %s554
      %p561 = scmp.eq.s32.totalorder %s93, 3
      %p562 = por %p560, %p561
      %p563 = scmp.ne.s32.totalorder %s554, %s555
      %p564 = scmp.eq.s32.totalorder %s93, 0
      %p565 = por %p563, %p564
      %p566 = scmp.ne.s32.totalorder %s554, %s555
      %p567 = scmp.eq.s32.totalorder %s94, 3
      %p568 = por %p566, %p567
      %p570 = scmp.ne.s32.totalorder %s555, %s569
      %p571 = scmp.eq.s32.totalorder %s94, 0
      %p572 = por %p570, %p571
      %s574 = sadd.s32 %s573, 1
      %p577 = scmp.eq.s32.totalorder %s88, 3
      %p578 = scmp.ne.s32.totalorder %s573, %s575
      %p579 = scmp.eq.s32.totalorder %s88, 0
      %p580 = por %p578, %p579
      %p581 = scmp.ne.s32.totalorder %s573, %s575
      %p582 = scmp.eq.s32.totalorder %s93, 3
      %p583 = por %p581, %p582
      %p584 = scmp.ne.s32.totalorder %s575, %s576
      %p585 = scmp.eq.s32.totalorder %s93, 0
      %p586 = por %p584, %p585
      %p587 = scmp.ne.s32.totalorder %s575, %s576
      %p588 = scmp.eq.s32.totalorder %s94, 3
      %p589 = por %p587, %p588
      %p591 = scmp.ne.s32.totalorder %s576, %s590
      %p592 = scmp.eq.s32.totalorder %s94, 0
      %p593 = por %p591, %p592
      %s595 = sadd.s32 %s594, 1
      %p598 = scmp.eq.s32.totalorder %s88, 3
      %p599 = scmp.ne.s32.totalorder %s594, %s596
      %p600 = scmp.eq.s32.totalorder %s88, 0
      %p601 = por %p599, %p600
      %p602 = scmp.ne.s32.totalorder %s594, %s596
      %p603 = scmp.eq.s32.totalorder %s93, 3
      %p604 = por %p602, %p603
      %p605 = scmp.ne.s32.totalorder %s596, %s597
      %p606 = scmp.eq.s32.totalorder %s93, 0
      %p607 = por %p605, %p606
      %p608 = scmp.ne.s32.totalorder %s596, %s597
      %p609 = scmp.eq.s32.totalorder %s94, 3
      %p610 = por %p608, %p609
      %p612 = scmp.ne.s32.totalorder %s597, %s611
      %p613 = scmp.eq.s32.totalorder %s94, 0
      %p614 = por %p612, %p613
      %s616 = sadd.s32 %s615, 1
      %p619 = scmp.eq.s32.totalorder %s88, 3
      %p620 = scmp.ne.s32.totalorder %s615, %s617
      %p621 = scmp.eq.s32.totalorder %s88, 0
      %p622 = por %p620, %p621
      %p623 = scmp.ne.s32.totalorder %s615, %s617
      %p624 = scmp.eq.s32.totalorder %s93, 3
      %p625 = por %p623, %p624
      %p626 = scmp.ne.s32.totalorder %s617, %s618
      %p627 = scmp.eq.s32.totalorder %s93, 0
      %p628 = por %p626, %p627
      %p629 = scmp.ne.s32.totalorder %s617, %s618
      %p630 = scmp.eq.s32.totalorder %s94, 3
      %p631 = por %p629, %p630
      %p633 = scmp.ne.s32.totalorder %s618, %s632
      %p634 = scmp.eq.s32.totalorder %s94, 0
      %p635 = por %p633, %p634
      %s637 = sadd.s32 %s636, 1
      %p640 = scmp.eq.s32.totalorder %s88, 3
      %p641 = scmp.ne.s32.totalorder %s636, %s638
      %p642 = scmp.eq.s32.totalorder %s88, 0
      %p643 = por %p641, %p642
      %p644 = scmp.ne.s32.totalorder %s636, %s638
      %p645 = scmp.eq.s32.totalorder %s93, 3
      %p646 = por %p644, %p645
      %p647 = scmp.ne.s32.totalorder %s638, %s639
      %p648 = scmp.eq.s32.totalorder %s93, 0
      %p649 = por %p647, %p648
      %p650 = scmp.ne.s32.totalorder %s638, %s639
      %p651 = scmp.eq.s32.totalorder %s94, 3
      %p652 = por %p650, %p651
      %p654 = scmp.ne.s32.totalorder %s639, %s653
      %p655 = scmp.eq.s32.totalorder %s94, 0
      %p656 = por %p654, %p655
      %s658 = sadd.s32 %s657, 1
      %p661 = scmp.eq.s32.totalorder %s88, 3
      %p662 = scmp.ne.s32.totalorder %s657, %s659
      %p663 = scmp.eq.s32.totalorder %s88, 0
      %p664 = por %p662, %p663
      %p665 = scmp.ne.s32.totalorder %s657, %s659
      %p666 = scmp.eq.s32.totalorder %s93, 3
      %p667 = por %p665, %p666
      %p668 = scmp.ne.s32.totalorder %s659, %s660
      %p669 = scmp.eq.s32.totalorder %s93, 0
      %p670 = por %p668, %p669
      %p671 = scmp.ne.s32.totalorder %s659, %s660
      %p672 = scmp.eq.s32.totalorder %s94, 3
      %p673 = por %p671, %p672
      %p675 = scmp.ne.s32.totalorder %s660, %s674
      %p676 = scmp.eq.s32.totalorder %s94, 0
      %p677 = por %p675, %p676
      %s679 = sadd.s32 %s678, 1
      %p682 = scmp.eq.s32.totalorder %s88, 3
      %p683 = scmp.ne.s32.totalorder %s678, %s680
      %p684 = scmp.eq.s32.totalorder %s88, 0
      %p685 = por %p683, %p684
      %p686 = scmp.ne.s32.totalorder %s678, %s680
      %p687 = scmp.eq.s32.totalorder %s93, 3
      %p688 = por %p686, %p687
      %p689 = scmp.ne.s32.totalorder %s680, %s681
      %p690 = scmp.eq.s32.totalorder %s93, 0
      %p691 = por %p689, %p690
      %p692 = scmp.ne.s32.totalorder %s680, %s681
      %p693 = scmp.eq.s32.totalorder %s94, 3
      %p694 = por %p692, %p693
      %p696 = scmp.ne.s32.totalorder %s681, %s695
      %p697 = scmp.eq.s32.totalorder %s94, 0
      %p698 = por %p696, %p697
      %s700 = sadd.s32 %s699, 1
      %p703 = scmp.eq.s32.totalorder %s88, 3
      %p704 = scmp.ne.s32.totalorder %s699, %s701
      %p705 = scmp.eq.s32.totalorder %s88, 0
      %p706 = por %p704, %p705
      %p707 = scmp.ne.s32.totalorder %s699, %s701
      %p708 = scmp.eq.s32.totalorder %s93, 3
      %p709 = por %p707, %p708
      %p710 = scmp.ne.s32.totalorder %s701, %s702
      %p711 = scmp.eq.s32.totalorder %s93, 0
      %p712 = por %p710, %p711
      %p713 = scmp.ne.s32.totalorder %s701, %s702
      %p714 = scmp.eq.s32.totalorder %s94, 3
      %p715 = por %p713, %p714
      %p717 = scmp.ne.s32.totalorder %s702, %s716
      %p718 = scmp.eq.s32.totalorder %s94, 0
      %p719 = por %p717, %p718
      %s721 = sadd.s32 %s720, 1
      %p724 = scmp.eq.s32.totalorder %s88, 3
      %p725 = scmp.ne.s32.totalorder %s720, %s722
      %p726 = scmp.eq.s32.totalorder %s88, 0
      %p727 = por %p725, %p726
      %p728 = scmp.ne.s32.totalorder %s720, %s722
      %p729 = scmp.eq.s32.totalorder %s93, 3
      %p730 = por %p728, %p729
      %p731 = scmp.ne.s32.totalorder %s722, %s723
      %p732 = scmp.eq.s32.totalorder %s93, 0
      %p733 = por %p731, %p732
      %p734 = scmp.ne.s32.totalorder %s722, %s723
      %p735 = scmp.eq.s32.totalorder %s94, 3
      %p736 = por %p734, %p735
      %p738 = scmp.ne.s32.totalorder %s723, %s737
      %p739 = scmp.eq.s32.totalorder %s94, 0
      %p740 = por %p738, %p739
      %s742 = sadd.s32 %s741, 1
      %p745 = scmp.eq.s32.totalorder %s88, 3
      %p746 = scmp.ne.s32.totalorder %s741, %s743
      %p747 = scmp.eq.s32.totalorder %s88, 0
      %p748 = por %p746, %p747
      %p749 = scmp.ne.s32.totalorder %s741, %s743
      %p750 = scmp.eq.s32.totalorder %s93, 3
      %p751 = por %p749, %p750
      %p752 = scmp.ne.s32.totalorder %s743, %s744
      %p753 = scmp.eq.s32.totalorder %s93, 0
      %p754 = por %p752, %p753
      %p755 = scmp.ne.s32.totalorder %s743, %s744
      %p756 = scmp.eq.s32.totalorder %s94, 3
      %p757 = por %p755, %p756
      %p759 = scmp.ne.s32.totalorder %s744, %s758
      %p760 = scmp.eq.s32.totalorder %s94, 0
      %p761 = por %p759, %p760
      %s763 = sadd.s32 %s762, 1
      %p766 = scmp.eq.s32.totalorder %s88, 3
      %p767 = scmp.ne.s32.totalorder %s762, %s764
      %p768 = scmp.eq.s32.totalorder %s88, 0
      %p769 = por %p767, %p768
      %p770 = scmp.ne.s32.totalorder %s762, %s764
      %p771 = scmp.eq.s32.totalorder %s93, 3
      %p772 = por %p770, %p771
      %p773 = scmp.ne.s32.totalorder %s764, %s765
      %p774 = scmp.eq.s32.totalorder %s93, 0
      %p775 = por %p773, %p774
      %p776 = scmp.ne.s32.totalorder %s764, %s765
      %p777 = scmp.eq.s32.totalorder %s94, 3
      %p778 = por %p776, %p777
      %p780 = scmp.ne.s32.totalorder %s765, %s779
      %p781 = scmp.eq.s32.totalorder %s94, 0
      %p782 = por %p780, %p781
      %s784 = sadd.s32 %s783, 1
      %p787 = scmp.eq.s32.totalorder %s88, 3
      %p788 = scmp.ne.s32.totalorder %s783, %s785
      %p789 = scmp.eq.s32.totalorder %s88, 0
      %p790 = por %p788, %p789
      %p791 = scmp.ne.s32.totalorder %s783, %s785
      %p792 = scmp.eq.s32.totalorder %s93, 3
      %p793 = por %p791, %p792
      %p794 = scmp.ne.s32.totalorder %s785, %s786
      %p795 = scmp.eq.s32.totalorder %s93, 0
      %p796 = por %p794, %p795
      %p797 = scmp.ne.s32.totalorder %s785, %s786
      %p798 = scmp.eq.s32.totalorder %s94, 3
      %p799 = por %p797, %p798
      %p801 = scmp.ne.s32.totalorder %s786, %s800
      %p802 = scmp.eq.s32.totalorder %s94, 0
      %p803 = por %p801, %p802
      %s805 = sadd.s32 %s804, 1
      %p808 = scmp.eq.s32.totalorder %s88, 3
      %p809 = scmp.ne.s32.totalorder %s804, %s806
      %p810 = scmp.eq.s32.totalorder %s88, 0
      %p811 = por %p809, %p810
      %p812 = scmp.ne.s32.totalorder %s804, %s806
      %p813 = scmp.eq.s32.totalorder %s93, 3
      %p814 = por %p812, %p813
      %p815 = scmp.ne.s32.totalorder %s806, %s807
      %p816 = scmp.eq.s32.totalorder %s93, 0
      %p817 = por %p815, %p816
      %p818 = scmp.ne.s32.totalorder %s806, %s807
      %p819 = scmp.eq.s32.totalorder %s94, 3
      %p820 = por %p818, %p819
      %p822 = scmp.ne.s32.totalorder %s807, %s821
      %p823 = scmp.eq.s32.totalorder %s94, 0
      %p824 = por %p822, %p823
      %s826 = sadd.s32 %s825, 1
      %p829 = scmp.eq.s32.totalorder %s88, 3
      %p830 = scmp.ne.s32.totalorder %s825, %s827
      %p831 = scmp.eq.s32.totalorder %s88, 0
      %p832 = por %p830, %p831
      %p833 = scmp.ne.s32.totalorder %s825, %s827
      %p834 = scmp.eq.s32.totalorder %s93, 3
      %p835 = por %p833, %p834
      %p836 = scmp.ne.s32.totalorder %s827, %s828
      %p837 = scmp.eq.s32.totalorder %s93, 0
      %p838 = por %p836, %p837
      %p839 = scmp.ne.s32.totalorder %s827, %s828
      %p840 = scmp.eq.s32.totalorder %s94, 3
      %p841 = por %p839, %p840
      %p843 = scmp.ne.s32.totalorder %s828, %s842
      %p844 = scmp.eq.s32.totalorder %s94, 0
      %p845 = por %p843, %p844
      %s847 = sadd.s32 %s846, 1
      %p850 = scmp.eq.s32.totalorder %s88, 3
      %p851 = scmp.ne.s32.totalorder %s846, %s848
      %p852 = scmp.eq.s32.totalorder %s88, 0
      %p853 = por %p851, %p852
      %p854 = scmp.ne.s32.totalorder %s846, %s848
      %p855 = scmp.eq.s32.totalorder %s93, 3
      %p856 = por %p854, %p855
      %p857 = scmp.ne.s32.totalorder %s848, %s849
      %p858 = scmp.eq.s32.totalorder %s93, 0
      %p859 = por %p857, %p858
      %p860 = scmp.ne.s32.totalorder %s848, %s849
      %p861 = scmp.eq.s32.totalorder %s94, 3
      %p862 = por %p860, %p861
      %p864 = scmp.ne.s32.totalorder %s849, %s863
      %p865 = scmp.eq.s32.totalorder %s94, 0
      %p866 = por %p864, %p865
      %s868 = sadd.s32 %s867, 1
      %p871 = scmp.eq.s32.totalorder %s88, 3
      %p872 = scmp.ne.s32.totalorder %s867, %s869
      %p873 = scmp.eq.s32.totalorder %s88, 0
      %p874 = por %p872, %p873
      %p875 = scmp.ne.s32.totalorder %s867, %s869
      %p876 = scmp.eq.s32.totalorder %s93, 3
      %p877 = por %p875, %p876
      %p878 = scmp.ne.s32.totalorder %s869, %s870
      %p879 = scmp.eq.s32.totalorder %s93, 0
      %p880 = por %p878, %p879
      %p881 = scmp.ne.s32.totalorder %s869, %s870
      %p882 = scmp.eq.s32.totalorder %s94, 3
      %p883 = por %p881, %p882
      %p885 = scmp.ne.s32.totalorder %s870, %s884
      %p886 = scmp.eq.s32.totalorder %s94, 0
      %p887 = por %p885, %p886
      %s889 = sadd.s32 %s888, 1
      %p892 = scmp.eq.s32.totalorder %s88, 3
      %p893 = scmp.ne.s32.totalorder %s888, %s890
      %p894 = scmp.eq.s32.totalorder %s88, 0
      %p895 = por %p893, %p894
      %p896 = scmp.ne.s32.totalorder %s888, %s890
      %p897 = scmp.eq.s32.totalorder %s93, 3
      %p898 = por %p896, %p897
      %p899 = scmp.ne.s32.totalorder %s890, %s891
      %p900 = scmp.eq.s32.totalorder %s93, 0
      %p901 = por %p899, %p900
      %p902 = scmp.ne.s32.totalorder %s890, %s891
      %p903 = scmp.eq.s32.totalorder %s94, 3
      %p904 = por %p902, %p903
      %p906 = scmp.ne.s32.totalorder %s891, %s905
      %p907 = scmp.eq.s32.totalorder %s94, 0
      %p908 = por %p906, %p907
      %s910 = sadd.s32 %s909, 1
      %p913 = scmp.eq.s32.totalorder %s88, 3
      %p914 = scmp.ne.s32.totalorder %s909, %s911
      %p915 = scmp.eq.s32.totalorder %s88, 0
      %p916 = por %p914, %p915
      %p917 = scmp.ne.s32.totalorder %s909, %s911
      %p918 = scmp.eq.s32.totalorder %s93, 3
      %p919 = por %p917, %p918
      %p920 = scmp.ne.s32.totalorder %s911, %s912
      %p921 = scmp.eq.s32.totalorder %s93, 0
      %p922 = por %p920, %p921
      %p923 = scmp.ne.s32.totalorder %s911, %s912
      %p924 = scmp.eq.s32.totalorder %s94, 3
      %p925 = por %p923, %p924
      %p927 = scmp.ne.s32.totalorder %s912, %s926
      %p928 = scmp.eq.s32.totalorder %s94, 0
      %p929 = por %p927, %p928
      %s930 = ssub.s32 %s88, %s95
      %p931 = scmp.eq.s32.totalorder %s930, 0
      %s933 = sadd.s32 %s932, 1
      %s934 = scalar_select %p931, %s932, %s933
      %p937 = pneg %p931
      %p938 = scmp.eq.s32.totalorder %s88, 3
      %p939 = por %p937, %p938
      %p940 = scmp.ne.s32.totalorder %s932, %s935
      %p941 = scmp.eq.s32.totalorder %s88, 0
      %p942 = por %p940, %p941
      %p943 = scmp.ne.s32.totalorder %s932, %s935
      %p944 = scmp.eq.s32.totalorder %s93, 3
      %p945 = por %p943, %p944
      %p946 = scmp.ne.s32.totalorder %s935, %s936
      %p947 = scmp.eq.s32.totalorder %s93, 0
      %p948 = por %p946, %p947
      %p949 = scmp.ne.s32.totalorder %s935, %s936
      %p950 = scmp.eq.s32.totalorder %s94, 3
      %p951 = por %p949, %p950
      %p953 = scmp.ne.s32.totalorder %s936, %s952
      %p954 = scmp.eq.s32.totalorder %s94, 0
      %p955 = por %p953, %p954
      %p956 = scmp.le.s32.totalorder 1, %s88
      %p957 = scmp.lt.s32.totalorder %s88, 5
      %p958 = pnand %p956, %p957
      %p959 = pneg %p958
      // Predicated region
      $region9: #{doc_encoder_forward.3} parent=5 // pred_check
        _
      $region10: #{doc_encoder_forward.3} parent=5 // pred_check_branch
        %961 = sbr.rel (%p958) target = $region12
      $region11: #{doc_encoder_forward.3} parent=5 // pred_region
        %s962 = ssub.s32 %s88, 1
        // Predicated region
        $region13: #{doc_encoder_forward.3} parent=11 // pred_check
          %p963 = pneg %p187
        $region14: #{doc_encoder_forward.3} parent=11 // pred_check_branch
          %965 = sbr.rel (%p963) target = $region16
        $region15: #{doc_encoder_forward.3} parent=11 // pred_region
          _
        $region16: #{doc_encoder_forward.3} parent=11 // pred_fallthru
          _
        // Predicated region
        $region17: #{doc_encoder_forward.3} parent=11 // pred_check
          %p966 = pneg %p208
        $region18: #{doc_encoder_forward.3} parent=11 // pred_check_branch
          %968 = sbr.rel (%p966) target = $region20
        $region19: #{doc_encoder_forward.3} parent=11 // pred_region
          _
        $region20: #{doc_encoder_forward.3} parent=11 // pred_fallthru
          _
        // Predicated region
        $region21: #{doc_encoder_forward.3} parent=11 // pred_check
          %p969 = pneg %p229
        $region22: #{doc_encoder_forward.3} parent=11 // pred_check_branch
          %971 = sbr.rel (%p969) target = $region24
        $region23: #{doc_encoder_forward.3} parent=11 // pred_region
          _
        $region24: #{doc_encoder_forward.3} parent=11 // pred_fallthru
          _
        // Predicated region
        $region25: #{doc_encoder_forward.3} parent=11 // pred_check
          %p972 = pneg %p250
        $region26: #{doc_encoder_forward.3} parent=11 // pred_check_branch
          %974 = sbr.rel (%p972) target = $region28
        $region27: #{doc_encoder_forward.3} parent=11 // pred_region
          _
        $region28: #{doc_encoder_forward.3} parent=11 // pred_fallthru
          _
        // Predicated region
        $region29: #{doc_encoder_forward.3} parent=11 // pred_check
          %p975 = pneg %p271
        $region30: #{doc_encoder_forward.3} parent=11 // pred_check_branch
          %977 = sbr.rel (%p975) target = $region32
        $region31: #{doc_encoder_forward.3} parent=11 // pred_region
          _
        $region32: #{doc_encoder_forward.3} parent=11 // pred_fallthru
          _
        // Predicated region
        $region33: #{doc_encoder_forward.3} parent=11 // pred_check
          %p978 = pneg %p292
        $region34: #{doc_encoder_forward.3} parent=11 // pred_check_branch
          %980 = sbr.rel (%p978) target = $region36
        $region35: #{doc_encoder_forward.3} parent=11 // pred_region
          _
        $region36: #{doc_encoder_forward.3} parent=11 // pred_fallthru
          _
        // Predicated region
        $region37: #{doc_encoder_forward.3} parent=11 // pred_check
          %p981 = pneg %p313
        $region38: #{doc_encoder_forward.3} parent=11 // pred_check_branch
          %983 = sbr.rel (%p981) target = $region40
        $region39: #{doc_encoder_forward.3} parent=11 // pred_region
          _
        $region40: #{doc_encoder_forward.3} parent=11 // pred_fallthru
          _
        // Predicated region
        $region41: #{doc_encoder_forward.3} parent=11 // pred_check
          %p984 = pneg %p334
        $region42: #{doc_encoder_forward.3} parent=11 // pred_check_branch
          %986 = sbr.rel (%p984) target = $region44
        $region43: #{doc_encoder_forward.3} parent=11 // pred_region
          _
        $region44: #{doc_encoder_forward.3} parent=11 // pred_fallthru
          _
        // Predicated region
        $region45: #{doc_encoder_forward.3} parent=11 // pred_check
          %p987 = pneg %p355
        $region46: #{doc_encoder_forward.3} parent=11 // pred_check_branch
          %989 = sbr.rel (%p987) target = $region48
        $region47: #{doc_encoder_forward.3} parent=11 // pred_region
          _
        $region48: #{doc_encoder_forward.3} parent=11 // pred_fallthru
          _
        // Predicated region
        $region49: #{doc_encoder_forward.3} parent=11 // pred_check
          %p990 = pneg %p376
        $region50: #{doc_encoder_forward.3} parent=11 // pred_check_branch
          %992 = sbr.rel (%p990) target = $region52
        $region51: #{doc_encoder_forward.3} parent=11 // pred_region
          _
        $region52: #{doc_encoder_forward.3} parent=11 // pred_fallthru
          _
        // Predicated region
        $region53: #{doc_encoder_forward.3} parent=11 // pred_check
          %p993 = pneg %p397
        $region54: #{doc_encoder_forward.3} parent=11 // pred_check_branch
          %995 = sbr.rel (%p993) target = $region56
        $region55: #{doc_encoder_forward.3} parent=11 // pred_region
          _
        $region56: #{doc_encoder_forward.3} parent=11 // pred_fallthru
          _
        // Predicated region
        $region57: #{doc_encoder_forward.3} parent=11 // pred_check
          %p996 = pneg %p418
        $region58: #{doc_encoder_forward.3} parent=11 // pred_check_branch
          %998 = sbr.rel (%p996) target = $region60
        $region59: #{doc_encoder_forward.3} parent=11 // pred_region
          _
        $region60: #{doc_encoder_forward.3} parent=11 // pred_fallthru
          _
        // Predicated region
        $region61: #{doc_encoder_forward.3} parent=11 // pred_check
          %p999 = pneg %p439
        $region62: #{doc_encoder_forward.3} parent=11 // pred_check_branch
          %1001 = sbr.rel (%p999) target = $region64
        $region63: #{doc_encoder_forward.3} parent=11 // pred_region
          _
        $region64: #{doc_encoder_forward.3} parent=11 // pred_fallthru
          _
        // Predicated region
        $region65: #{doc_encoder_forward.3} parent=11 // pred_check
          %p1002 = pneg %p460
        $region66: #{doc_encoder_forward.3} parent=11 // pred_check_branch
          %1004 = sbr.rel (%p1002) target = $region68
        $region67: #{doc_encoder_forward.3} parent=11 // pred_region
          _
        $region68: #{doc_encoder_forward.3} parent=11 // pred_fallthru
          _
        // Predicated region
        $region69: #{doc_encoder_forward.3} parent=11 // pred_check
          %p1005 = pneg %p481
        $region70: #{doc_encoder_forward.3} parent=11 // pred_check_branch
          %1007 = sbr.rel (%p1005) target = $region72
        $region71: #{doc_encoder_forward.3} parent=11 // pred_region
          _
        $region72: #{doc_encoder_forward.3} parent=11 // pred_fallthru
          _
        // Predicated region
        $region73: #{doc_encoder_forward.3} parent=11 // pred_check
          %p1008 = pneg %p502
        $region74: #{doc_encoder_forward.3} parent=11 // pred_check_branch
          %1010 = sbr.rel (%p1008) target = $region76
        $region75: #{doc_encoder_forward.3} parent=11 // pred_region
          _
        $region76: #{doc_encoder_forward.3} parent=11 // pred_fallthru
          _
        // Predicated region
        $region77: #{doc_encoder_forward.3} parent=11 // pred_check
          %p1011 = pneg %p523
        $region78: #{doc_encoder_forward.3} parent=11 // pred_check_branch
          %1013 = sbr.rel (%p1011) target = $region80
        $region79: #{doc_encoder_forward.3} parent=11 // pred_region
          _
        $region80: #{doc_encoder_forward.3} parent=11 // pred_fallthru
          _
        // Predicated region
        $region81: #{doc_encoder_forward.3} parent=11 // pred_check
          %p1014 = pneg %p544
        $region82: #{doc_encoder_forward.3} parent=11 // pred_check_branch
          %1016 = sbr.rel (%p1014) target = $region84
        $region83: #{doc_encoder_forward.3} parent=11 // pred_region
          _
        $region84: #{doc_encoder_forward.3} parent=11 // pred_fallthru
          _
        // Predicated region
        $region85: #{doc_encoder_forward.3} parent=11 // pred_check
          %p1017 = pneg %p565
        $region86: #{doc_encoder_forward.3} parent=11 // pred_check_branch
          %1019 = sbr.rel (%p1017) target = $region88
        $region87: #{doc_encoder_forward.3} parent=11 // pred_region
          _
        $region88: #{doc_encoder_forward.3} parent=11 // pred_fallthru
          _
        // Predicated region
        $region89: #{doc_encoder_forward.3} parent=11 // pred_check
          %p1020 = pneg %p586
        $region90: #{doc_encoder_forward.3} parent=11 // pred_check_branch
          %1022 = sbr.rel (%p1020) target = $region92
        $region91: #{doc_encoder_forward.3} parent=11 // pred_region
          _
        $region92: #{doc_encoder_forward.3} parent=11 // pred_fallthru
          _
        // Predicated region
        $region93: #{doc_encoder_forward.3} parent=11 // pred_check
          %p1023 = pneg %p607
        $region94: #{doc_encoder_forward.3} parent=11 // pred_check_branch
          %1025 = sbr.rel (%p1023) target = $region96
        $region95: #{doc_encoder_forward.3} parent=11 // pred_region
          _
        $region96: #{doc_encoder_forward.3} parent=11 // pred_fallthru
          _
        // Predicated region
        $region97: #{doc_encoder_forward.3} parent=11 // pred_check
          %p1026 = pneg %p628
        $region98: #{doc_encoder_forward.3} parent=11 // pred_check_branch
          %1028 = sbr.rel (%p1026) target = $region100
        $region99: #{doc_encoder_forward.3} parent=11 // pred_region
          _
        $region100: #{doc_encoder_forward.3} parent=11 // pred_fallthru
          _
        // Predicated region
        $region101: #{doc_encoder_forward.3} parent=11 // pred_check
          %p1029 = pneg %p649
        $region102: #{doc_encoder_forward.3} parent=11 // pred_check_branch
          %1031 = sbr.rel (%p1029) target = $region104
        $region103: #{doc_encoder_forward.3} parent=11 // pred_region
          _
        $region104: #{doc_encoder_forward.3} parent=11 // pred_fallthru
          _
        // Predicated region
        $region105: #{doc_encoder_forward.3} parent=11 // pred_check
          %p1032 = pneg %p670
        $region106: #{doc_encoder_forward.3} parent=11 // pred_check_branch
          %1034 = sbr.rel (%p1032) target = $region108
        $region107: #{doc_encoder_forward.3} parent=11 // pred_region
          _
        $region108: #{doc_encoder_forward.3} parent=11 // pred_fallthru
          _
        // Predicated region
        $region109: #{doc_encoder_forward.3} parent=11 // pred_check
          %p1035 = pneg %p691
        $region110: #{doc_encoder_forward.3} parent=11 // pred_check_branch
          %1037 = sbr.rel (%p1035) target = $region112
        $region111: #{doc_encoder_forward.3} parent=11 // pred_region
          _
        $region112: #{doc_encoder_forward.3} parent=11 // pred_fallthru
          _
        // Predicated region
        $region113: #{doc_encoder_forward.3} parent=11 // pred_check
          %p1038 = pneg %p712
        $region114: #{doc_encoder_forward.3} parent=11 // pred_check_branch
          %1040 = sbr.rel (%p1038) target = $region116
        $region115: #{doc_encoder_forward.3} parent=11 // pred_region
          _
        $region116: #{doc_encoder_forward.3} parent=11 // pred_fallthru
          _
        // Predicated region
        $region117: #{doc_encoder_forward.3} parent=11 // pred_check
          %p1041 = pneg %p733
        $region118: #{doc_encoder_forward.3} parent=11 // pred_check_branch
          %1043 = sbr.rel (%p1041) target = $region120
        $region119: #{doc_encoder_forward.3} parent=11 // pred_region
          _
        $region120: #{doc_encoder_forward.3} parent=11 // pred_fallthru
          _
        // Predicated region
        $region121: #{doc_encoder_forward.3} parent=11 // pred_check
          %p1044 = pneg %p754
        $region122: #{doc_encoder_forward.3} parent=11 // pred_check_branch
          %1046 = sbr.rel (%p1044) target = $region124
        $region123: #{doc_encoder_forward.3} parent=11 // pred_region
          _
        $region124: #{doc_encoder_forward.3} parent=11 // pred_fallthru
          _
        // Predicated region
        $region125: #{doc_encoder_forward.3} parent=11 // pred_check
          %p1047 = pneg %p775
        $region126: #{doc_encoder_forward.3} parent=11 // pred_check_branch
          %1049 = sbr.rel (%p1047) target = $region128
        $region127: #{doc_encoder_forward.3} parent=11 // pred_region
          _
        $region128: #{doc_encoder_forward.3} parent=11 // pred_fallthru
          _
        // Predicated region
        $region129: #{doc_encoder_forward.3} parent=11 // pred_check
          %p1050 = pneg %p796
        $region130: #{doc_encoder_forward.3} parent=11 // pred_check_branch
          %1052 = sbr.rel (%p1050) target = $region132
        $region131: #{doc_encoder_forward.3} parent=11 // pred_region
          _
        $region132: #{doc_encoder_forward.3} parent=11 // pred_fallthru
          _
        // Predicated region
        $region133: #{doc_encoder_forward.3} parent=11 // pred_check
          %p1053 = pneg %p817
        $region134: #{doc_encoder_forward.3} parent=11 // pred_check_branch
          %1055 = sbr.rel (%p1053) target = $region136
        $region135: #{doc_encoder_forward.3} parent=11 // pred_region
          _
        $region136: #{doc_encoder_forward.3} parent=11 // pred_fallthru
          _
        // Predicated region
        $region137: #{doc_encoder_forward.3} parent=11 // pred_check
          %p1056 = pneg %p838
        $region138: #{doc_encoder_forward.3} parent=11 // pred_check_branch
          %1058 = sbr.rel (%p1056) target = $region140
        $region139: #{doc_encoder_forward.3} parent=11 // pred_region
          _
        $region140: #{doc_encoder_forward.3} parent=11 // pred_fallthru
          _
        // Predicated region
        $region141: #{doc_encoder_forward.3} parent=11 // pred_check
          %p1059 = pneg %p859
        $region142: #{doc_encoder_forward.3} parent=11 // pred_check_branch
          %1061 = sbr.rel (%p1059) target = $region144
        $region143: #{doc_encoder_forward.3} parent=11 // pred_region
          _
        $region144: #{doc_encoder_forward.3} parent=11 // pred_fallthru
          _
        // Predicated region
        $region145: #{doc_encoder_forward.3} parent=11 // pred_check
          %p1062 = pneg %p880
        $region146: #{doc_encoder_forward.3} parent=11 // pred_check_branch
          %1064 = sbr.rel (%p1062) target = $region148
        $region147: #{doc_encoder_forward.3} parent=11 // pred_region
          _
        $region148: #{doc_encoder_forward.3} parent=11 // pred_fallthru
          _
        // Predicated region
        $region149: #{doc_encoder_forward.3} parent=11 // pred_check
          %p1065 = pneg %p901
        $region150: #{doc_encoder_forward.3} parent=11 // pred_check_branch
          %1067 = sbr.rel (%p1065) target = $region152
        $region151: #{doc_encoder_forward.3} parent=11 // pred_region
          _
        $region152: #{doc_encoder_forward.3} parent=11 // pred_fallthru
          _
        // Predicated region
        $region153: #{doc_encoder_forward.3} parent=11 // pred_check
          %p1068 = pneg %p922
        $region154: #{doc_encoder_forward.3} parent=11 // pred_check_branch
          %1070 = sbr.rel (%p1068) target = $region156
        $region155: #{doc_encoder_forward.3} parent=11 // pred_region
          _
        $region156: #{doc_encoder_forward.3} parent=11 // pred_fallthru
          _
      $region12: #{doc_encoder_forward.3} parent=5 // pred_fallthru
        _
      %p1071 = scmp.lt.s32.totalorder %s88, 4
      // Predicated region
      $region157: #{doc_encoder_forward.3} parent=5 // pred_check
        %p1072 = pneg %p1071
      $region158: #{doc_encoder_forward.3} parent=5 // pred_check_branch
        %1074 = sbr.rel (%p1072) target = $region160
      $region159: #{doc_encoder_forward.3} parent=5 // pred_region
        // Predicated region
        $region161: #{doc_encoder_forward.3} parent=159 // pred_check
          %p1075 = pneg %p108
        $region162: #{doc_encoder_forward.3} parent=159 // pred_check_branch
          %1077 = sbr.rel (%p1075) target = $region164
        $region163: #{doc_encoder_forward.3} parent=159 // pred_region
          %p1078 = scmp.lt.s32.totalorder %s88, 3
          %s1079 = scalar_select %p1078, %s88, 3
          %s1080 = smul.addr %s1079, 4
          %s1081 = scalar_lea.vmem %s1, %s1080
        $region164: #{doc_encoder_forward.3} parent=159 // pred_fallthru
          _
        // Predicated region
        $region165: #{doc_encoder_forward.3} parent=159 // pred_check
          %p1082 = pneg %p134
        $region166: #{doc_encoder_forward.3} parent=159 // pred_check_branch
          %1084 = sbr.rel (%p1082) target = $region168
        $region167: #{doc_encoder_forward.3} parent=159 // pred_region
          %p1085 = scmp.lt.s32.totalorder %s88, 3
          %s1086 = scalar_select %p1085, %s88, 3
          %s1087 = smul.addr %s1086, 4
          %s1088 = scalar_lea.vmem %s3, %s1087
        $region168: #{doc_encoder_forward.3} parent=159 // pred_fallthru
          _
        // Predicated region
        $region169: #{doc_encoder_forward.3} parent=159 // pred_check
          %p1089 = pneg %p160
        $region170: #{doc_encoder_forward.3} parent=159 // pred_check_branch
          %1091 = sbr.rel (%p1089) target = $region172
        $region171: #{doc_encoder_forward.3} parent=159 // pred_region
          %p1092 = scmp.lt.s32.totalorder %s88, 3
          %s1093 = scalar_select %p1092, %s88, 3
          %s1094 = smul.addr %s1093, 4
          %s1095 = scalar_lea.vmem %s5, %s1094
        $region172: #{doc_encoder_forward.3} parent=159 // pred_fallthru
          _
      $region160: #{doc_encoder_forward.3} parent=5 // pred_fallthru
        _
      %p1096 = scmp.le.s32.totalorder 1, %s88
      %p1097 = scmp.lt.s32.totalorder %s88, 5
      %p1098 = pnand %p1096, %p1097
      %p1099 = pneg %p1098
      // Predicated region
      $region173: #{doc_encoder_forward.3} parent=5 // pred_check
        _
      $region174: #{doc_encoder_forward.3} parent=5 // pred_check_branch
        %1101 = sbr.rel (%p1098) target = $region176
      $region175: #{doc_encoder_forward.3} parent=5 // pred_region
        %s1102 = ssub.s32 %s88, 1
        %p1103 = scmp.lt.s32.totalorder %s93, 3
        %s1104 = scalar_select %p1103, %s93, 3
        %s1105 = smul.addr %s1104, 4
        %s1106 = scalar_lea.vmem %s1, %s1105
        %p1107 = pneg %p114
        %p1108 = pneg %p111
        %p1109 = scmp.lt.s32.totalorder %s93, 3
        %s1110 = scalar_select %p1109, %s93, 3
        %s1111 = smul.addr %s1110, 4
        %s1112 = scalar_lea.vmem %s3, %s1111
        %p1113 = pneg %p140
        %p1114 = pneg %p137
        %p1115 = scmp.lt.s32.totalorder %s93, 3
        %s1116 = scalar_select %p1115, %s93, 3
        %s1117 = smul.addr %s1116, 4
        %s1118 = scalar_lea.vmem %s5, %s1117
        %p1119 = pneg %p166
        %p1120 = pneg %p163
        %p1121 = pneg %p187
        %p1122 = pneg %p184
        %p1123 = pneg %p208
        %p1124 = pneg %p205
        %p1125 = pneg %p229
        %p1126 = pneg %p226
        %p1127 = pneg %p250
        %p1128 = pneg %p247
        %p1129 = pneg %p271
        %p1130 = pneg %p268
        %p1131 = pneg %p292
        %p1132 = pneg %p289
        %p1133 = pneg %p313
        %p1134 = pneg %p310
        %p1135 = pneg %p334
        %p1136 = pneg %p331
        %p1137 = pneg %p355
        %p1138 = pneg %p352
        %p1139 = pneg %p376
        %p1140 = pneg %p373
        %p1141 = pneg %p397
        %p1142 = pneg %p394
        %p1143 = pneg %p418
        %p1144 = pneg %p415
        %p1145 = pneg %p439
        %p1146 = pneg %p436
        %p1147 = pneg %p460
        %p1148 = pneg %p457
        %p1149 = pneg %p481
        %p1150 = pneg %p478
        %p1151 = pneg %p502
        %p1152 = pneg %p499
        %p1153 = pneg %p523
        %p1154 = pneg %p520
        %p1155 = pneg %p544
        %p1156 = pneg %p541
        %p1157 = pneg %p565
        %p1158 = pneg %p562
        %p1159 = pneg %p586
        %p1160 = pneg %p583
        %p1161 = pneg %p607
        %p1162 = pneg %p604
        %p1163 = pneg %p628
        %p1164 = pneg %p625
        %p1165 = pneg %p649
        %p1166 = pneg %p646
        %p1167 = pneg %p670
        %p1168 = pneg %p667
        %p1169 = pneg %p691
        %p1170 = pneg %p688
        %p1171 = pneg %p712
        %p1172 = pneg %p709
        %p1173 = pneg %p733
        %p1174 = pneg %p730
        %p1175 = pneg %p754
        %p1176 = pneg %p751
        %p1177 = pneg %p775
        %p1178 = pneg %p772
        %p1179 = pneg %p796
        %p1180 = pneg %p793
        %p1181 = pneg %p817
        %p1182 = pneg %p814
        %p1183 = pneg %p838
        %p1184 = pneg %p835
        %p1185 = pneg %p859
        %p1186 = pneg %p856
        %p1187 = pneg %p880
        %p1188 = pneg %p877
        %p1189 = pneg %p901
        %p1190 = pneg %p898
        %p1191 = pneg %p922
        %p1192 = pneg %p919
        %p1193 = pneg %p948
        %p1194 = pneg %p945
        %s1195 = sand.u32 %s935, 1
        %s1196 = scalar_lea.sflag [#allocation3], %s1195
        %s1197 = sand.u32 %s935, 1
        %s1198 = smul.addr %s1197, 8
        %s1199 = scalar_lea.vmem [#allocation2], %s1198
        %p1200 = scmp.lt.s32.totalorder %s93, 3
        %s1201 = scalar_select %p1200, %s93, 3
        %s1202 = smul.addr %s1201, 4
        %s1203 = scalar_lea.vmem %s1, %s1202
        %p1204 = scmp.lt.s32.totalorder %s93, 3
        %s1205 = scalar_select %p1204, %s93, 3
        %s1206 = smul.addr %s1205, 4
        %s1207 = scalar_lea.vmem %s3, %s1206
        %p1208 = scmp.lt.s32.totalorder %s93, 3
        %s1209 = scalar_select %p1208, %s93, 3
        %s1210 = smul.addr %s1209, 4
        %s1211 = scalar_lea.vmem %s5, %s1210
        %v1213 = vld [vmem:[%s1203] sm:$0xf]
        %v1214 = vunpack.c.l.bf16 %v1213
        %v1215 = vld [vmem:[%s7] sm:$0x1]
        %v1216 = vld [vmem:[%s9] sm:$0x1]
        %vm1217 = vcmask 261120
        %v1218 = vsel %vm1217, %v1214, 0.0
        %1219 = vadd.xlane.f32.xlu0 %v1218
        %v1220 = vpop.xlane.xlu0 %1219
        %v1221 = vrcp.pop 32.0
        %v1222 = vmul.f32 32.0, %v1221
        %v1223 = vsub.f32 1.0, %v1222
        %v1224 = vmul.f32 %v1221, %v1223
        %v1225 = vadd.f32 %v1221, %v1224
        %vm1226 = vweird.f32 %v1221
        %v1227 = vsel %vm1226, %v1221, %v1225
        %v1228 = vmul.f32 %v1220, %v1227
        %v1229 = vsub.f32 %v1214, %v1228
        %v1230 = vmul.f32 %v1229, %v1229
        %v1231 = vsel %vm1217, %v1230, 0.0
        %1232 = vadd.xlane.f32.xlu0 %v1231
        %v1233 = vpop.xlane.xlu0 %1232
        %v1234 = vmul.f32 %v1233, %v1227
        %v1235 = vadd.f32 %v1234, 1e-06
        %v1236 = vrsqrt.pop %v1235
        %v1237 = vmul.f32 %v1236, %v1235
        %v1238 = vmul.f32 %v1237, %v1236
        %v1239 = vmul.f32 0.5, %v1238
        %v1240 = vsub.f32 1.5, %v1239
        %v1241 = vmul.f32 %v1236, %v1240
        %vm1242 = vweird.f32 %v1235
        %vm1243 = vweird.f32 %v1236
        %vm1244 = vmor %vm1242, %vm1243
        %v1245 = vsel %vm1244, %v1236, %v1241
        %v1246 = vmul.f32 %v1229, %v1245
        %v1248 = vperm.slane %v1215, 0
        %v1250 = vmul.f32 %v1246, %v1248
        %v1252 = vperm.slane %v1216, 0
        %v1254 = vadd.f32 %v1250, %v1252
        %v1255 = vpack.c.bf16 %v1254, %v1254
        %v1256 = vld [vmem:[%s11] sm:$0xf]
        %v1257 = vld [vmem:[%s11 + $0x4] sm:$0xf]
        %v1258 = vld [vmem:[%s11 + $0x8] sm:$0xf]
        %v1259 = vld [vmem:[%s11 + $0xc] sm:$0xf]
        %v1260 = vld [vmem:[%s13] sm:$0x1]
        %v1262 = vperm.slane %v1260, 0
        %v1268 = vunpack.c.l.b16 %v1256
        %v1269 = vunpack.c.l.b16 %v1257
        %v1270 = vunpack.c.l.b16 %v1258
        %v1271 = vunpack.c.l.b16 %v1259
        %v1272 = vpack.c.b16 %v1269, %v1268
        %v1273 = vpack.c.b16 %v1271, %v1270
        %v1277 = vsel %vm1217, %v1255, 0
        %1279 = vmatpush.bf16.msra.mxu0 0
        %1280 = vmatpush.bf16.msra.mxu0 0
        %1281 = vmatpush.bf16.msra.mxu0 0
        %1282 = vmatpush.bf16.msra.mxu0 0
        %1283 = vmatpush.bf16.msra.mxu0 0
        %1284 = vmatpush.bf16.msra.mxu0 0
        %1285 = vmatpush.bf16.msra.mxu0 %v1273
        %1286 = vmatpush.bf16.msra.mxu0 %v1272
        %1287 = vmatmul.bf16.gmra.mxu0 %v1277
        %v1288 = vpop.f32.mrf.mxu0
        %v1289 = vadd.f32 %v1262, %v1288
        %v1290 = vpop.f32.mrf.mxu0
        %1291 = vdwg.mxu0
        %v1292 = vld [vmem:[%s15] sm:$0xf]
        %v1293 = vld [vmem:[%s15 + $0x4] sm:$0xf]
        %v1294 = vld [vmem:[%s15 + $0x8] sm:$0xf]
        %v1295 = vld [vmem:[%s15 + $0xc] sm:$0xf]
        %v1296 = vld [vmem:[%s17] sm:$0x1]
        %v1297 = vpack.c.bf16 %v1289, %v1289
        %1299 = vrot.lane.b32.xlu0 %v1297, 96
        %v1300 = vpop.permute.xlu0 %1299
        %vm1301 = vcmask 64512
        %v1303 = vsel %vm1301, %v1297, 0
        %v1306 = vsel %vm1301, %v1300, 0
        %1308 = vmatpush.bf16.xpose.msra.mxu0 0
        %1309 = vmatpush.bf16.xpose.msra.mxu0 0
        %1310 = vmatpush.bf16.xpose.msra.mxu0 0
        %1311 = vmatpush.bf16.xpose.msra.mxu0 0
        %1312 = vmatpush.bf16.xpose.msra.mxu0 0
        %1313 = vmatpush.bf16.xpose.msra.mxu0 0
        %1314 = vmatpush.bf16.xpose.msra.mxu0 0
        %1315 = vmatpush.bf16.xpose.msra.mxu0 %v1306
        %1316 = vmatmul.bf16.gmra.mxu0 %v1303
        %v1317 = vpop.f32.mrf.mxu0
        %v1318 = vadd.f32 0.0, %v1317
        %v1319 = vpop.f32.mrf.mxu0
        %1320 = vdwg.mxu0
        %v1321 = vsel %vm1301, %v1318, -inf
        %1322 = vmax.xlane.f32.xlu0 %v1321
        %v1323 = vpop.xlane.xlu0 %1322
        %v1324 = vsub.f32 %v1318, %v1323
        %v1325 = vmul.f32 %v1324, 1.442695
        %v1326 = vpow.pop %v1325
        %v1327 = vsel %vm1301, %v1326, 0.0
        %1328 = vadd.xlane.f32.xlu0 %v1327
        %v1329 = vpop.xlane.xlu0 %1328
        %v1330 = vrcp.pop %v1329
        %v1331 = vmul.f32 %v1326, %v1330
        %v1332 = vpack.c.bf16 %v1331, %v1331
        %1333 = vrot.lane.b32.xlu0 %v1297, 64
        %v1334 = vpop.permute.xlu0 %1333
        %v1336 = vsel %vm1301, %v1332, 0
        %vm1338 = vcmask 1043456
        %v1340 = vsel %vm1338, %v1334, 0
        %1342 = vmatpush.bf16.msra.mxu0 0
        %1343 = vmatpush.bf16.msra.mxu0 0
        %1344 = vmatpush.bf16.msra.mxu0 0
        %1345 = vmatpush.bf16.msra.mxu0 0
        %1346 = vmatpush.bf16.msra.mxu0 0
        %1347 = vmatpush.bf16.msra.mxu0 0
        %1348 = vmatpush.bf16.msra.mxu0 0
        %1349 = vmatpush.bf16.msra.mxu0 %v1340
        %1350 = vmatmul.bf16.gmra.mxu0 %v1336
        %v1351 = vpop.f32.mrf.mxu0
        %v1352 = vadd.f32 0.0, %v1351
        %v1353 = vpop.f32.mrf.mxu0
        %1354 = vdwg.mxu0
        %1355 = vrot.lane.b32.xlu0 %v1297, 120
        %v1356 = vpop.permute.xlu0 %1355
        %1357 = vrot.lane.b32.xlu0 %v1297, 88
        %v1358 = vpop.permute.xlu0 %1357
        %v1360 = vsel %vm1301, %v1356, 0
        %v1363 = vsel %vm1301, %v1358, 0
        %1365 = vmatpush.bf16.xpose.msra.mxu0 0
        %1366 = vmatpush.bf16.xpose.msra.mxu0 0
        %1367 = vmatpush.bf16.xpose.msra.mxu0 0
        %1368 = vmatpush.bf16.xpose.msra.mxu0 0
        %1369 = vmatpush.bf16.xpose.msra.mxu0 0
        %1370 = vmatpush.bf16.xpose.msra.mxu0 0
        %1371 = vmatpush.bf16.xpose.msra.mxu0 0
        %1372 = vmatpush.bf16.xpose.msra.mxu0 %v1363
        %1373 = vmatmul.bf16.gmra.mxu0 %v1360
        %v1374 = vpop.f32.mrf.mxu0
        %v1375 = vadd.f32 0.0, %v1374
        %v1376 = vpop.f32.mrf.mxu0
        %1377 = vdwg.mxu0
        %v1378 = vsel %vm1301, %v1375, -inf
        %1379 = vmax.xlane.f32.xlu0 %v1378
        %v1380 = vpop.xlane.xlu0 %1379
        %v1381 = vsub.f32 %v1375, %v1380
        %v1382 = vmul.f32 %v1381, 1.442695
        %v1383 = vpow.pop %v1382
        %v1384 = vsel %vm1301, %v1383, 0.0
        %1385 = vadd.xlane.f32.xlu0 %v1384
        %v1386 = vpop.xlane.xlu0 %1385
        %v1387 = vrcp.pop %v1386
        %v1388 = vmul.f32 %v1383, %v1387
        %v1389 = vpack.c.bf16 %v1388, %v1388
        %1390 = vrot.lane.b32.xlu0 %v1297, 56
        %v1391 = vpop.permute.xlu0 %1390
        %v1393 = vsel %vm1301, %v1389, 0
        %v1396 = vsel %vm1338, %v1391, 0
        %1398 = vmatpush.bf16.msra.mxu0 0
        %1399 = vmatpush.bf16.msra.mxu0 0
        %1400 = vmatpush.bf16.msra.mxu0 0
        %1401 = vmatpush.bf16.msra.mxu0 0
        %1402 = vmatpush.bf16.msra.mxu0 0
        %1403 = vmatpush.bf16.msra.mxu0 0
        %1404 = vmatpush.bf16.msra.mxu0 0
        %1405 = vmatpush.bf16.msra.mxu0 %v1396
        %1406 = vmatmul.bf16.gmra.mxu0 %v1393
        %v1407 = vpop.f32.mrf.mxu0
        %v1408 = vadd.f32 0.0, %v1407
        %v1409 = vpop.f32.mrf.mxu0
        %1410 = vdwg.mxu0
        %1411 = vrot.lane.b32.xlu0 %v1297, 112
        %v1412 = vpop.permute.xlu0 %1411
        %1413 = vrot.lane.b32.xlu0 %v1297, 80
        %v1414 = vpop.permute.xlu0 %1413
        %v1416 = vsel %vm1301, %v1412, 0
        %v1419 = vsel %vm1301, %v1414, 0
        %1421 = vmatpush.bf16.xpose.msra.mxu0 0
        %1422 = vmatpush.bf16.xpose.msra.mxu0 0
        %1423 = vmatpush.bf16.xpose.msra.mxu0 0
        %1424 = vmatpush.bf16.xpose.msra.mxu0 0
        %1425 = vmatpush.bf16.xpose.msra.mxu0 0
        %1426 = vmatpush.bf16.xpose.msra.mxu0 0
        %1427 = vmatpush.bf16.xpose.msra.mxu0 0
        %1428 = vmatpush.bf16.xpose.msra.mxu0 %v1419
        %1429 = vmatmul.bf16.gmra.mxu0 %v1416
        %v1430 = vpop.f32.mrf.mxu0
        %v1431 = vadd.f32 0.0, %v1430
        %v1432 = vpop.f32.mrf.mxu0
        %1433 = vdwg.mxu0
        %v1434 = vsel %vm1301, %v1431, -inf
        %1435 = vmax.xlane.f32.xlu0 %v1434
        %v1436 = vpop.xlane.xlu0 %1435
        %v1437 = vsub.f32 %v1431, %v1436
        %v1438 = vmul.f32 %v1437, 1.442695
        %v1439 = vpow.pop %v1438
        %v1440 = vsel %vm1301, %v1439, 0.0
        %1441 = vadd.xlane.f32.xlu0 %v1440
        %v1442 = vpop.xlane.xlu0 %1441
        %v1443 = vrcp.pop %v1442
        %v1444 = vmul.f32 %v1439, %v1443
        %v1445 = vpack.c.bf16 %v1444, %v1444
        %1446 = vrot.lane.b32.xlu0 %v1297, 48
        %v1447 = vpop.permute.xlu0 %1446
        %v1449 = vsel %vm1301, %v1445, 0
        %v1452 = vsel %vm1338, %v1447, 0
        %1454 = vmatpush.bf16.msra.mxu0 0
        %1455 = vmatpush.bf16.msra.mxu0 0
        %1456 = vmatpush.bf16.msra.mxu0 0
        %1457 = vmatpush.bf16.msra.mxu0 0
        %1458 = vmatpush.bf16.msra.mxu0 0
        %1459 = vmatpush.bf16.msra.mxu0 0
        %1460 = vmatpush.bf16.msra.mxu0 0
        %1461 = vmatpush.bf16.msra.mxu0 %v1452
        %1462 = vmatmul.bf16.gmra.mxu0 %v1449
        %v1463 = vpop.f32.mrf.mxu0
        %v1464 = vadd.f32 0.0, %v1463
        %v1465 = vpop.f32.mrf.mxu0
        %1466 = vdwg.mxu0
        %1467 = vrot.lane.b32.xlu0 %v1297, 104
        %v1468 = vpop.permute.xlu0 %1467
        %1469 = vrot.lane.b32.xlu0 %v1297, 72
        %v1470 = vpop.permute.xlu0 %1469
        %v1472 = vsel %vm1301, %v1468, 0
        %v1475 = vsel %vm1301, %v1470, 0
        %1477 = vmatpush.bf16.xpose.msra.mxu0 0
        %1478 = vmatpush.bf16.xpose.msra.mxu0 0
        %1479 = vmatpush.bf16.xpose.msra.mxu0 0
        %1480 = vmatpush.bf16.xpose.msra.mxu0 0
        %1481 = vmatpush.bf16.xpose.msra.mxu0 0
        %1482 = vmatpush.bf16.xpose.msra.mxu0 0
        %1483 = vmatpush.bf16.xpose.msra.mxu0 0
        %1484 = vmatpush.bf16.xpose.msra.mxu0 %v1475
        %1485 = vmatmul.bf16.gmra.mxu0 %v1472
        %v1486 = vpop.f32.mrf.mxu0
        %v1487 = vadd.f32 0.0, %v1486
        %v1488 = vpop.f32.mrf.mxu0
        %1489 = vdwg.mxu0
        %v1490 = vsel %vm1301, %v1487, -inf
        %1491 = vmax.xlane.f32.xlu0 %v1490
        %v1492 = vpop.xlane.xlu0 %1491
        %v1493 = vsub.f32 %v1487, %v1492
        %v1494 = vmul.f32 %v1493, 1.442695
        %v1495 = vpow.pop %v1494
        %v1496 = vsel %vm1301, %v1495, 0.0
        %1497 = vadd.xlane.f32.xlu0 %v1496
        %v1498 = vpop.xlane.xlu0 %1497
        %v1499 = vrcp.pop %v1498
        %v1500 = vmul.f32 %v1495, %v1499
        %v1501 = vpack.c.bf16 %v1500, %v1500
        %1502 = vrot.lane.b32.xlu0 %v1297, 40
        %v1503 = vpop.permute.xlu0 %1502
        %v1505 = vsel %vm1301, %v1501, 0
        %v1508 = vsel %vm1338, %v1503, 0
        %1510 = vmatpush.bf16.msra.mxu0 0
        %1511 = vmatpush.bf16.msra.mxu0 0
        %1512 = vmatpush.bf16.msra.mxu0 0
        %1513 = vmatpush.bf16.msra.mxu0 0
        %1514 = vmatpush.bf16.msra.mxu0 0
        %1515 = vmatpush.bf16.msra.mxu0 0
        %1516 = vmatpush.bf16.msra.mxu0 0
        %1517 = vmatpush.bf16.msra.mxu0 %v1508
        %1518 = vmatmul.bf16.gmra.mxu0 %v1505
        %v1519 = vpop.f32.mrf.mxu0
        %v1520 = vadd.f32 0.0, %v1519
        %v1521 = vpop.f32.mrf.mxu0
        %1522 = vdwg.mxu0
        %1524 = vrot.lane.b32.xlu0 %v1408, 8
        %v1525 = vpop.permute.xlu0 %1524
        %1528 = vrot.lane.b32.xlu0 %v1464, 16
        %v1529 = vpop.permute.xlu0 %1528
        %1532 = vrot.lane.b32.xlu0 %v1520, 24
        %v1533 = vpop.permute.xlu0 %1532
        %v1535 = vsel %vm1301, %v1352, %v1525
        %vm1536 = vcmask 130048
        %v1537 = vsel %vm1536, %v1535, %v1529
        %vm1538 = vcmask 195584
        %v1539 = vsel %vm1538, %v1537, %v1533
        %v1540 = vpack.c.bf16 %v1539, %v1539
        %v1542 = vperm.slane %v1296, 0
        %v1548 = vunpack.c.l.b16 %v1292
        %v1549 = vunpack.c.l.b16 %v1293
        %v1550 = vunpack.c.l.b16 %v1294
        %v1551 = vunpack.c.l.b16 %v1295
        %v1552 = vpack.c.b16 %v1549, %v1548
        %v1553 = vpack.c.b16 %v1551, %v1550
        %v1557 = vsel %vm1217, %v1540, 0
        %1559 = vmatpush.bf16.msra.mxu0 0
        %1560 = vmatpush.bf16.msra.mxu0 0
        %1561 = vmatpush.bf16.msra.mxu0 0
        %1562 = vmatpush.bf16.msra.mxu0 0
        %1563 = vmatpush.bf16.msra.mxu0 0
        %1564 = vmatpush.bf16.msra.mxu0 0
        %1565 = vmatpush.bf16.msra.mxu0 %v1553
        %1566 = vmatpush.bf16.msra.mxu0 %v1552
        %1567 = vmatmul.bf16.gmra.mxu0 %v1557
        %v1568 = vpop.f32.mrf.mxu0
        %v1569 = vadd.f32 %v1542, %v1568
        %v1570 = vpop.f32.mrf.mxu0
        %1571 = vdwg.mxu0
        %v1572 = vadd.f32 %v1569, %v1214
        %v1573 = vld [vmem:[%s1207] sm:$0xf]
        %v1574 = vld [vmem:[%s19] sm:$0x1]
        %v1575 = vld [vmem:[%s21] sm:$0x1]
        %v1576 = vsel %vm1217, %v1572, 0.0
        %1577 = vadd.xlane.f32.xlu0 %v1576
        %v1578 = vpop.xlane.xlu0 %1577
        %v1579 = vmul.f32 %v1578, %v1227
        %v1580 = vsub.f32 %v1572, %v1579
        %v1581 = vmul.f32 %v1580, %v1580
        %v1582 = vsel %vm1217, %v1581, 0.0
        %1583 = vadd.xlane.f32.xlu0 %v1582
        %v1584 = vpop.xlane.xlu0 %1583
        %v1585 = vmul.f32 %v1584, %v1227
        %v1586 = vadd.f32 %v1585, 1e-06
        %v1587 = vrsqrt.pop %v1586
        %v1588 = vmul.f32 %v1587, %v1586
        %v1589 = vmul.f32 %v1588, %v1587
        %v1590 = vmul.f32 0.5, %v1589
        %v1591 = vsub.f32 1.5, %v1590
        %v1592 = vmul.f32 %v1587, %v1591
        %vm1593 = vweird.f32 %v1586
        %vm1594 = vweird.f32 %v1587
        %vm1595 = vmor %vm1593, %vm1594
        %v1596 = vsel %vm1595, %v1587, %v1592
        %v1597 = vmul.f32 %v1580, %v1596
        %v1599 = vperm.slane %v1574, 0
        %v1601 = vmul.f32 %v1597, %v1599
        %v1603 = vperm.slane %v1575, 0
        %v1605 = vadd.f32 %v1601, %v1603
        %v1606 = vpack.c.bf16 %v1605, %v1605
        %v1607 = vld [vmem:[%s23] sm:$0xf]
        %v1608 = vld [vmem:[%s23 + $0x4] sm:$0xf]
        %v1609 = vld [vmem:[%s23 + $0x8] sm:$0xf]
        %v1610 = vld [vmem:[%s23 + $0xc] sm:$0xf]
        %v1611 = vld [vmem:[%s25] sm:$0x1]
        %v1613 = vperm.slane %v1611, 0
        %v1619 = vunpack.c.l.b16 %v1607
        %v1620 = vunpack.c.l.b16 %v1608
        %v1621 = vunpack.c.l.b16 %v1609
        %v1622 = vunpack.c.l.b16 %v1610
        %v1623 = vpack.c.b16 %v1620, %v1619
        %v1624 = vpack.c.b16 %v1622, %v1621
        %v1628 = vsel %vm1217, %v1606, 0
        %1630 = vmatpush.bf16.msra.mxu0 0
        %1631 = vmatpush.bf16.msra.mxu0 0
        %1632 = vmatpush.bf16.msra.mxu0 0
        %1633 = vmatpush.bf16.msra.mxu0 0
        %1634 = vmatpush.bf16.msra.mxu0 0
        %1635 = vmatpush.bf16.msra.mxu0 0
        %1636 = vmatpush.bf16.msra.mxu0 %v1624
        %1637 = vmatpush.bf16.msra.mxu0 %v1623
        %1638 = vmatmul.bf16.gmra.mxu0 %v1628
        %v1639 = vpop.f32.mrf.mxu0
        %v1640 = vadd.f32 %v1613, %v1639
        %v1641 = vpop.f32.mrf.mxu0
        %1642 = vdwg.mxu0
        %v1643 = vld [vmem:[%s27] sm:$0xf]
        %v1644 = vld [vmem:[%s27 + $0x4] sm:$0xf]
        %v1645 = vld [vmem:[%s27 + $0x8] sm:$0xf]
        %v1646 = vld [vmem:[%s27 + $0xc] sm:$0xf]
        %v1647 = vld [vmem:[%s29] sm:$0x1]
        %v1649 = vperm.slane %v1647, 0
        %v1655 = vunpack.c.l.b16 %v1643
        %v1656 = vunpack.c.l.b16 %v1644
        %v1657 = vunpack.c.l.b16 %v1645
        %v1658 = vunpack.c.l.b16 %v1646
        %v1659 = vpack.c.b16 %v1656, %v1655
        %v1660 = vpack.c.b16 %v1658, %v1657
        %v1664 = vsel %vm1217, %v1573, 0
        %1666 = vmatpush.bf16.msra.mxu0 0
        %1667 = vmatpush.bf16.msra.mxu0 0
        %1668 = vmatpush.bf16.msra.mxu0 0
        %1669 = vmatpush.bf16.msra.mxu0 0
        %1670 = vmatpush.bf16.msra.mxu0 0
        %1671 = vmatpush.bf16.msra.mxu0 0
        %1672 = vmatpush.bf16.msra.mxu0 %v1660
        %1673 = vmatpush.bf16.msra.mxu0 %v1659
        %1674 = vmatmul.bf16.gmra.mxu0 %v1664
        %v1675 = vpop.f32.mrf.mxu0
        %v1676 = vadd.f32 %v1649, %v1675
        %v1677 = vpop.f32.mrf.mxu0
        %1678 = vdwg.mxu0
        %v1679 = vld [vmem:[%s31] sm:$0xf]
        %v1680 = vld [vmem:[%s31 + $0x4] sm:$0xf]
        %v1681 = vld [vmem:[%s31 + $0x8] sm:$0xf]
        %v1682 = vld [vmem:[%s31 + $0xc] sm:$0xf]
        %v1683 = vld [vmem:[%s33] sm:$0x1]
        %v1684 = vpack.c.bf16 %v1640, %v1640
        %v1685 = vpack.c.bf16 %v1676, %v1676
        %v1687 = vsel %vm1301, %v1684, 0
        %v1690 = vsel %vm1301, %v1685, 0
        %1692 = vmatpush.bf16.xpose.msra.mxu0 0
        %1693 = vmatpush.bf16.xpose.msra.mxu0 0
        %1694 = vmatpush.bf16.xpose.msra.mxu0 0
        %1695 = vmatpush.bf16.xpose.msra.mxu0 0
        %1696 = vmatpush.bf16.xpose.msra.mxu0 0
        %1697 = vmatpush.bf16.xpose.msra.mxu0 0
        %1698 = vmatpush.bf16.xpose.msra.mxu0 0
        %1699 = vmatpush.bf16.xpose.msra.mxu0 %v1690
        %1700 = vmatmul.bf16.gmra.mxu0 %v1687
        %v1701 = vpop.f32.mrf.mxu0
        %v1702 = vadd.f32 0.0, %v1701
        %v1703 = vpop.f32.mrf.mxu0
        %1704 = vdwg.mxu0
        %v1705 = vsel %vm1301, %v1702, -inf
        %1706 = vmax.xlane.f32.xlu0 %v1705
        %v1707 = vpop.xlane.xlu0 %1706
        %v1708 = vsub.f32 %v1702, %v1707
        %v1709 = vmul.f32 %v1708, 1.442695
        %v1710 = vpow.pop %v1709
        %v1711 = vsel %vm1301, %v1710, 0.0
        %1712 = vadd.xlane.f32.xlu0 %v1711
        %v1713 = vpop.xlane.xlu0 %1712
        %v1714 = vrcp.pop %v1713
        %v1715 = vmul.f32 %v1710, %v1714
        %v1716 = vpack.c.bf16 %v1715, %v1715
        %1718 = vrot.lane.b32.xlu0 %v1685, 96
        %v1719 = vpop.permute.xlu0 %1718
        %v1721 = vsel %vm1301, %v1716, 0
        %v1724 = vsel %vm1338, %v1719, 0
        %1726 = vmatpush.bf16.msra.mxu0 0
        %1727 = vmatpush.bf16.msra.mxu0 0
        %1728 = vmatpush.bf16.msra.mxu0 0
        %1729 = vmatpush.bf16.msra.mxu0 0
        %1730 = vmatpush.bf16.msra.mxu0 0
        %1731 = vmatpush.bf16.msra.mxu0 0
        %1732 = vmatpush.bf16.msra.mxu0 0
        %1733 = vmatpush.bf16.msra.mxu0 %v1724
        %1734 = vmatmul.bf16.gmra.mxu0 %v1721
        %v1735 = vpop.f32.mrf.mxu0
        %v1736 = vadd.f32 0.0, %v1735
        %v1737 = vpop.f32.mrf.mxu0
        %1738 = vdwg.mxu0
        %1740 = vrot.lane.b32.xlu0 %v1684, 120
        %v1741 = vpop.permute.xlu0 %1740
        %1742 = vrot.lane.b32.xlu0 %v1685, 120
        %v1743 = vpop.permute.xlu0 %1742
        %v1745 = vsel %vm1301, %v1741, 0
        %v1748 = vsel %vm1301, %v1743, 0
        %1750 = vmatpush.bf16.xpose.msra.mxu0 0
        %1751 = vmatpush.bf16.xpose.msra.mxu0 0
        %1752 = vmatpush.bf16.xpose.msra.mxu0 0
        %1753 = vmatpush.bf16.xpose.msra.mxu0 0
        %1754 = vmatpush.bf16.xpose.msra.mxu0 0
        %1755 = vmatpush.bf16.xpose.msra.mxu0 0
        %1756 = vmatpush.bf16.xpose.msra.mxu0 0
        %1757 = vmatpush.bf16.xpose.msra.mxu0 %v1748
        %1758 = vmatmul.bf16.gmra.mxu0 %v1745
        %v1759 = vpop.f32.mrf.mxu0
        %v1760 = vadd.f32 0.0, %v1759
        %v1761 = vpop.f32.mrf.mxu0
        %1762 = vdwg.mxu0
        %v1763 = vsel %vm1301, %v1760, -inf
        %1764 = vmax.xlane.f32.xlu0 %v1763
        %v1765 = vpop.xlane.xlu0 %1764
        %v1766 = vsub.f32 %v1760, %v1765
        %v1767 = vmul.f32 %v1766, 1.442695
        %v1768 = vpow.pop %v1767
        %v1769 = vsel %vm1301, %v1768, 0.0
        %1770 = vadd.xlane.f32.xlu0 %v1769
        %v1771 = vpop.xlane.xlu0 %1770
        %v1772 = vrcp.pop %v1771
        %v1773 = vmul.f32 %v1768, %v1772
        %v1774 = vpack.c.bf16 %v1773, %v1773
        %1775 = vrot.lane.b32.xlu0 %v1685, 88
        %v1776 = vpop.permute.xlu0 %1775
        %v1778 = vsel %vm1301, %v1774, 0
        %v1781 = vsel %vm1338, %v1776, 0
        %1783 = vmatpush.bf16.msra.mxu0 0
        %1784 = vmatpush.bf16.msra.mxu0 0
        %1785 = vmatpush.bf16.msra.mxu0 0
        %1786 = vmatpush.bf16.msra.mxu0 0
        %1787 = vmatpush.bf16.msra.mxu0 0
        %1788 = vmatpush.bf16.msra.mxu0 0
        %1789 = vmatpush.bf16.msra.mxu0 0
        %1790 = vmatpush.bf16.msra.mxu0 %v1781
        %1791 = vmatmul.bf16.gmra.mxu0 %v1778
        %v1792 = vpop.f32.mrf.mxu0
        %v1793 = vadd.f32 0.0, %v1792
        %v1794 = vpop.f32.mrf.mxu0
        %1795 = vdwg.mxu0
        %1796 = vrot.lane.b32.xlu0 %v1684, 112
        %v1797 = vpop.permute.xlu0 %1796
        %1798 = vrot.lane.b32.xlu0 %v1685, 112
        %v1799 = vpop.permute.xlu0 %1798
        %v1801 = vsel %vm1301, %v1797, 0
        %v1804 = vsel %vm1301, %v1799, 0
        %1806 = vmatpush.bf16.xpose.msra.mxu0 0
        %1807 = vmatpush.bf16.xpose.msra.mxu0 0
        %1808 = vmatpush.bf16.xpose.msra.mxu0 0
        %1809 = vmatpush.bf16.xpose.msra.mxu0 0
        %1810 = vmatpush.bf16.xpose.msra.mxu0 0
        %1811 = vmatpush.bf16.xpose.msra.mxu0 0
        %1812 = vmatpush.bf16.xpose.msra.mxu0 0
        %1813 = vmatpush.bf16.xpose.msra.mxu0 %v1804
        %1814 = vmatmul.bf16.gmra.mxu0 %v1801
        %v1815 = vpop.f32.mrf.mxu0
        %v1816 = vadd.f32 0.0, %v1815
        %v1817 = vpop.f32.mrf.mxu0
        %1818 = vdwg.mxu0
        %v1819 = vsel %vm1301, %v1816, -inf
        %1820 = vmax.xlane.f32.xlu0 %v1819
        %v1821 = vpop.xlane.xlu0 %1820
        %v1822 = vsub.f32 %v1816, %v1821
        %v1823 = vmul.f32 %v1822, 1.442695
        %v1824 = vpow.pop %v1823
        %v1825 = vsel %vm1301, %v1824, 0.0
        %1826 = vadd.xlane.f32.xlu0 %v1825
        %v1827 = vpop.xlane.xlu0 %1826
        %v1828 = vrcp.pop %v1827
        %v1829 = vmul.f32 %v1824, %v1828
        %v1830 = vpack.c.bf16 %v1829, %v1829
        %1831 = vrot.lane.b32.xlu0 %v1685, 80
        %v1832 = vpop.permute.xlu0 %1831
        %v1834 = vsel %vm1301, %v1830, 0
        %v1837 = vsel %vm1338, %v1832, 0
        %1839 = vmatpush.bf16.msra.mxu0 0
        %1840 = vmatpush.bf16.msra.mxu0 0
        %1841 = vmatpush.bf16.msra.mxu0 0
        %1842 = vmatpush.bf16.msra.mxu0 0
        %1843 = vmatpush.bf16.msra.mxu0 0
        %1844 = vmatpush.bf16.msra.mxu0 0
        %1845 = vmatpush.bf16.msra.mxu0 0
        %1846 = vmatpush.bf16.msra.mxu0 %v1837
        %1847 = vmatmul.bf16.gmra.mxu0 %v1834
        %v1848 = vpop.f32.mrf.mxu0
        %v1849 = vadd.f32 0.0, %v1848
        %v1850 = vpop.f32.mrf.mxu0
        %1851 = vdwg.mxu0
        %1852 = vrot.lane.b32.xlu0 %v1684, 104
        %v1853 = vpop.permute.xlu0 %1852
        %1854 = vrot.lane.b32.xlu0 %v1685, 104
        %v1855 = vpop.permute.xlu0 %1854
        %v1857 = vsel %vm1301, %v1853, 0
        %v1860 = vsel %vm1301, %v1855, 0
        %1862 = vmatpush.bf16.xpose.msra.mxu0 0
        %1863 = vmatpush.bf16.xpose.msra.mxu0 0
        %1864 = vmatpush.bf16.xpose.msra.mxu0 0
        %1865 = vmatpush.bf16.xpose.msra.mxu0 0
        %1866 = vmatpush.bf16.xpose.msra.mxu0 0
        %1867 = vmatpush.bf16.xpose.msra.mxu0 0
        %1868 = vmatpush.bf16.xpose.msra.mxu0 0
        %1869 = vmatpush.bf16.xpose.msra.mxu0 %v1860
        %1870 = vmatmul.bf16.gmra.mxu0 %v1857
        %v1871 = vpop.f32.mrf.mxu0
        %v1872 = vadd.f32 0.0, %v1871
        %v1873 = vpop.f32.mrf.mxu0
        %1874 = vdwg.mxu0
        %v1875 = vsel %vm1301, %v1872, -inf
        %1876 = vmax.xlane.f32.xlu0 %v1875
        %v1877 = vpop.xlane.xlu0 %1876
        %v1878 = vsub.f32 %v1872, %v1877
        %v1879 = vmul.f32 %v1878, 1.442695
        %v1880 = vpow.pop %v1879
        %v1881 = vsel %vm1301, %v1880, 0.0
        %1882 = vadd.xlane.f32.xlu0 %v1881
        %v1883 = vpop.xlane.xlu0 %1882
        %v1884 = vrcp.pop %v1883
        %v1885 = vmul.f32 %v1880, %v1884
        %v1886 = vpack.c.bf16 %v1885, %v1885
        %1887 = vrot.lane.b32.xlu0 %v1685, 72
        %v1888 = vpop.permute.xlu0 %1887
        %v1890 = vsel %vm1301, %v1886, 0
        %v1893 = vsel %vm1338, %v1888, 0
        %1895 = vmatpush.bf16.msra.mxu0 0
        %1896 = vmatpush.bf16.msra.mxu0 0
        %1897 = vmatpush.bf16.msra.mxu0 0
        %1898 = vmatpush.bf16.msra.mxu0 0
        %1899 = vmatpush.bf16.msra.mxu0 0
        %1900 = vmatpush.bf16.msra.mxu0 0
        %1901 = vmatpush.bf16.msra.mxu0 0
        %1902 = vmatpush.bf16.msra.mxu0 %v1893
        %1903 = vmatmul.bf16.gmra.mxu0 %v1890
        %v1904 = vpop.f32.mrf.mxu0
        %v1905 = vadd.f32 0.0, %v1904
        %v1906 = vpop.f32.mrf.mxu0
        %1907 = vdwg.mxu0
        %1909 = vrot.lane.b32.xlu0 %v1793, 8
        %v1910 = vpop.permute.xlu0 %1909
        %1913 = vrot.lane.b32.xlu0 %v1849, 16
        %v1914 = vpop.permute.xlu0 %1913
        %1917 = vrot.lane.b32.xlu0 %v1905, 24
        %v1918 = vpop.permute.xlu0 %1917
        %v1920 = vsel %vm1301, %v1736, %v1910
        %v1921 = vsel %vm1536, %v1920, %v1914
        %v1922 = vsel %vm1538, %v1921, %v1918
        %v1923 = vpack.c.bf16 %v1922, %v1922
        %v1925 = vperm.slane %v1683, 0
        %v1931 = vunpack.c.l.b16 %v1679
        %v1932 = vunpack.c.l.b16 %v1680
        %v1933 = vunpack.c.l.b16 %v1681
        %v1934 = vunpack.c.l.b16 %v1682
        %v1935 = vpack.c.b16 %v1932, %v1931
        %v1936 = vpack.c.b16 %v1934, %v1933
        %v1940 = vsel %vm1217, %v1923, 0
        %1942 = vmatpush.bf16.msra.mxu0 0
        %1943 = vmatpush.bf16.msra.mxu0 0
        %1944 = vmatpush.bf16.msra.mxu0 0
        %1945 = vmatpush.bf16.msra.mxu0 0
        %1946 = vmatpush.bf16.msra.mxu0 0
        %1947 = vmatpush.bf16.msra.mxu0 0
        %1948 = vmatpush.bf16.msra.mxu0 %v1936
        %1949 = vmatpush.bf16.msra.mxu0 %v1935
        %1950 = vmatmul.bf16.gmra.mxu0 %v1940
        %v1951 = vpop.f32.mrf.mxu0
        %v1952 = vadd.f32 %v1925, %v1951
        %v1953 = vpop.f32.mrf.mxu0
        %1954 = vdwg.mxu0
        %v1955 = vpack.c.bf16 %v1952, %v1952
        %v1956 = vld [vmem:[%s35] sm:$0xf]
        %v1957 = vld [vmem:[%s35 + $0x4] sm:$0xf]
        %v1958 = vld [vmem:[%s35 + $0x8] sm:$0xf]
        %v1959 = vld [vmem:[%s35 + $0xc] sm:$0xf]
        %v1960 = vpack.c.bf16 %v1572, %v1572
        %v1961 = vld [vmem:[%s37] sm:$0xf]
        %v1962 = vld [vmem:[%s37 + $0x4] sm:$0xf]
        %v1963 = vld [vmem:[%s37 + $0x8] sm:$0xf]
        %v1964 = vld [vmem:[%s37 + $0xc] sm:$0xf]
        %v1969 = vunpack.c.l.b16 %v1961
        %v1970 = vunpack.c.l.b16 %v1962
        %v1971 = vunpack.c.l.b16 %v1963
        %v1972 = vunpack.c.l.b16 %v1964
        %v1973 = vpack.c.b16 %v1970, %v1969
        %v1974 = vpack.c.b16 %v1972, %v1971
        %v1978 = vsel %vm1217, %v1960, 0
        %1980 = vmatpush.bf16.msra.mxu0 0
        %1981 = vmatpush.bf16.msra.mxu0 0
        %1982 = vmatpush.bf16.msra.mxu0 0
        %1983 = vmatpush.bf16.msra.mxu0 0
        %1984 = vmatpush.bf16.msra.mxu0 0
        %1985 = vmatpush.bf16.msra.mxu0 0
        %1986 = vmatpush.bf16.msra.mxu0 %v1974
        %1987 = vmatpush.bf16.msra.mxu0 %v1973
        %1988 = vmatmul.bf16.gmra.mxu0 %v1978
        %v1989 = vpop.f32.mrf.mxu0
        %v1990 = vadd.f32 0.0, %v1989
        %v1991 = vpop.f32.mrf.mxu0
        %1992 = vdwg.mxu0
        %v1997 = vunpack.c.l.b16 %v1956
        %v1998 = vunpack.c.l.b16 %v1957
        %v1999 = vunpack.c.l.b16 %v1958
        %v2000 = vunpack.c.l.b16 %v1959
        %v2001 = vpack.c.b16 %v1998, %v1997
        %v2002 = vpack.c.b16 %v2000, %v1999
        %v2006 = vsel %vm1217, %v1955, 0
        %2008 = vmatpush.bf16.msra.mxu0 0
        %2009 = vmatpush.bf16.msra.mxu0 0
        %2010 = vmatpush.bf16.msra.mxu0 0
        %2011 = vmatpush.bf16.msra.mxu0 0
        %2012 = vmatpush.bf16.msra.mxu0 0
        %2013 = vmatpush.bf16.msra.mxu0 0
        %2014 = vmatpush.bf16.msra.mxu0 %v2002
        %2015 = vmatpush.bf16.msra.mxu0 %v2001
        %2016 = vmatmul.bf16.gmra.mxu0 %v2006
        %v2017 = vpop.f32.mrf.mxu0
        %v2018 = vadd.f32 %v1990, %v2017
        %v2019 = vpop.f32.mrf.mxu0
        %2020 = vdwg.mxu0
        %v2021 = vld [vmem:[%s39] sm:$0x1]
        %v2023 = vperm.slane %v2021, 0
        %v2025 = vadd.f32 %v2018, %v2023
        %v2026 = vxor.u32 %v2025, 2147483648
        %v2027 = vmul.f32 %v2026, 1.442695
        %v2028 = vpow.pop %v2027
        %v2029 = vadd.f32 %v2028, 1.0
        %v2030 = vrcp.pop %v2029
        %v2031 = vmul.f32 %v2029, %v2030
        %v2032 = vsub.f32 1.0, %v2031
        %v2033 = vmul.f32 %v2030, %v2032
        %v2034 = vadd.f32 %v2030, %v2033
        %vm2035 = vweird.f32 %v2029
        %vm2036 = vweird.f32 %v2030
        %vm2037 = vmor %vm2035, %vm2036
        %v2038 = vsel %vm2037, %v2030, %v2034
        %v2039 = vand.u32 2147483647, %v2029
        %vm2040 = vcmp.eq.f32.partialorder %v2039, 8.507059e+37
        %v2041 = vand.u32 %v2029, 2147483648
        %v2042 = vor.u32 1.1754944e-38, %v2041
        %v2043 = vsel %vm2040, %v2042, %v2038
        %v2044 = vmul.f32 1.0, %v2043
        %v2045 = vmul.f32 %v1952, %v2044
        %v2046 = vsub.f32 1.0, %v2044
        %v2047 = vmul.f32 %v1572, %v2046
        %v2048 = vadd.f32 %v2045, %v2047
        %v2049 = vld [vmem:[%s1211] sm:$0xf]
        %v2050 = vld [vmem:[%s41] sm:$0x1]
        %v2051 = vld [vmem:[%s43] sm:$0x1]
        %v2052 = vsel %vm1217, %v2048, 0.0
        %2053 = vadd.xlane.f32.xlu0 %v2052
        %v2054 = vpop.xlane.xlu0 %2053
        %v2055 = vmul.f32 %v2054, %v1227
        %v2056 = vsub.f32 %v2048, %v2055
        %v2057 = vmul.f32 %v2056, %v2056
        %v2058 = vsel %vm1217, %v2057, 0.0
        %2059 = vadd.xlane.f32.xlu0 %v2058
        %v2060 = vpop.xlane.xlu0 %2059
        %v2061 = vmul.f32 %v2060, %v1227
        %v2062 = vadd.f32 %v2061, 1e-06
        %v2063 = vrsqrt.pop %v2062
        %v2064 = vmul.f32 %v2063, %v2062
        %v2065 = vmul.f32 %v2064, %v2063
        %v2066 = vmul.f32 0.5, %v2065
        %v2067 = vsub.f32 1.5, %v2066
        %v2068 = vmul.f32 %v2063, %v2067
        %vm2069 = vweird.f32 %v2062
        %vm2070 = vweird.f32 %v2063
        %vm2071 = vmor %vm2069, %vm2070
        %v2072 = vsel %vm2071, %v2063, %v2068
        %v2073 = vmul.f32 %v2056, %v2072
        %v2075 = vperm.slane %v2050, 0
        %v2077 = vmul.f32 %v2073, %v2075
        %v2079 = vperm.slane %v2051, 0
        %v2081 = vadd.f32 %v2077, %v2079
        %v2082 = vpack.c.bf16 %v2081, %v2081
        %v2083 = vld [vmem:[%s45] sm:$0xf]
        %v2084 = vld [vmem:[%s45 + $0x4] sm:$0xf]
        %v2085 = vld [vmem:[%s45 + $0x8] sm:$0xf]
        %v2086 = vld [vmem:[%s45 + $0xc] sm:$0xf]
        %v2087 = vld [vmem:[%s47] sm:$0x1]
        %v2089 = vperm.slane %v2087, 0
        %v2095 = vunpack.c.l.b16 %v2083
        %v2096 = vunpack.c.l.b16 %v2084
        %v2097 = vunpack.c.l.b16 %v2085
        %v2098 = vunpack.c.l.b16 %v2086
        %v2099 = vpack.c.b16 %v2096, %v2095
        %v2100 = vpack.c.b16 %v2098, %v2097
        %v2104 = vsel %vm1217, %v2082, 0
        %2106 = vmatpush.bf16.msra.mxu0 0
        %2107 = vmatpush.bf16.msra.mxu0 0
        %2108 = vmatpush.bf16.msra.mxu0 0
        %2109 = vmatpush.bf16.msra.mxu0 0
        %2110 = vmatpush.bf16.msra.mxu0 0
        %2111 = vmatpush.bf16.msra.mxu0 0
        %2112 = vmatpush.bf16.msra.mxu0 %v2100
        %2113 = vmatpush.bf16.msra.mxu0 %v2099
        %2114 = vmatmul.bf16.gmra.mxu0 %v2104
        %v2115 = vpop.f32.mrf.mxu0
        %v2116 = vadd.f32 %v2089, %v2115
        %v2117 = vpop.f32.mrf.mxu0
        %2118 = vdwg.mxu0
        %v2119 = vld [vmem:[%s49] sm:$0xf]
        %v2120 = vld [vmem:[%s49 + $0x4] sm:$0xf]
        %v2121 = vld [vmem:[%s49 + $0x8] sm:$0xf]
        %v2122 = vld [vmem:[%s49 + $0xc] sm:$0xf]
        %v2123 = vld [vmem:[%s51] sm:$0x1]
        %v2125 = vperm.slane %v2123, 0
        %v2131 = vunpack.c.l.b16 %v2119
        %v2132 = vunpack.c.l.b16 %v2120
        %v2133 = vunpack.c.l.b16 %v2121
        %v2134 = vunpack.c.l.b16 %v2122
        %v2135 = vpack.c.b16 %v2132, %v2131
        %v2136 = vpack.c.b16 %v2134, %v2133
        %v2140 = vsel %vm1217, %v2049, 0
        %2142 = vmatpush.bf16.msra.mxu0 0
        %2143 = vmatpush.bf16.msra.mxu0 0
        %2144 = vmatpush.bf16.msra.mxu0 0
        %2145 = vmatpush.bf16.msra.mxu0 0
        %2146 = vmatpush.bf16.msra.mxu0 0
        %2147 = vmatpush.bf16.msra.mxu0 0
        %2148 = vmatpush.bf16.msra.mxu0 %v2136
        %2149 = vmatpush.bf16.msra.mxu0 %v2135
        %2150 = vmatmul.bf16.gmra.mxu0 %v2140
        %v2151 = vpop.f32.mrf.mxu0
        %v2152 = vadd.f32 %v2125, %v2151
        %v2153 = vpop.f32.mrf.mxu0
        %2154 = vdwg.mxu0
        %v2155 = vld [vmem:[%s53] sm:$0xf]
        %v2156 = vld [vmem:[%s53 + $0x4] sm:$0xf]
        %v2157 = vld [vmem:[%s53 + $0x8] sm:$0xf]
        %v2158 = vld [vmem:[%s53 + $0xc] sm:$0xf]
        %v2159 = vld [vmem:[%s55] sm:$0x1]
        %v2160 = vpack.c.bf16 %v2116, %v2116
        %v2161 = vpack.c.bf16 %v2152, %v2152
        %v2163 = vsel %vm1301, %v2160, 0
        %v2166 = vsel %vm1301, %v2161, 0
        %2168 = vmatpush.bf16.xpose.msra.mxu0 0
        %2169 = vmatpush.bf16.xpose.msra.mxu0 0
        %2170 = vmatpush.bf16.xpose.msra.mxu0 0
        %2171 = vmatpush.bf16.xpose.msra.mxu0 0
        %2172 = vmatpush.bf16.xpose.msra.mxu0 0
        %2173 = vmatpush.bf16.xpose.msra.mxu0 0
        %2174 = vmatpush.bf16.xpose.msra.mxu0 0
        %2175 = vmatpush.bf16.xpose.msra.mxu0 %v2166
        %2176 = vmatmul.bf16.gmra.mxu0 %v2163
        %v2177 = vpop.f32.mrf.mxu0
        %v2178 = vadd.f32 0.0, %v2177
        %v2179 = vpop.f32.mrf.mxu0
        %2180 = vdwg.mxu0
        %v2181 = vsel %vm1301, %v2178, -inf
        %2182 = vmax.xlane.f32.xlu0 %v2181
        %v2183 = vpop.xlane.xlu0 %2182
        %v2184 = vsub.f32 %v2178, %v2183
        %v2185 = vmul.f32 %v2184, 1.442695
        %v2186 = vpow.pop %v2185
        %v2187 = vsel %vm1301, %v2186, 0.0
        %2188 = vadd.xlane.f32.xlu0 %v2187
        %v2189 = vpop.xlane.xlu0 %2188
        %v2190 = vrcp.pop %v2189
        %v2191 = vmul.f32 %v2186, %v2190
        %v2192 = vpack.c.bf16 %v2191, %v2191
        %2194 = vrot.lane.b32.xlu0 %v2161, 96
        %v2195 = vpop.permute.xlu0 %2194
        %v2197 = vsel %vm1301, %v2192, 0
        %v2200 = vsel %vm1338, %v2195, 0
        %2202 = vmatpush.bf16.msra.mxu0 0
        %2203 = vmatpush.bf16.msra.mxu0 0
        %2204 = vmatpush.bf16.msra.mxu0 0
        %2205 = vmatpush.bf16.msra.mxu0 0
        %2206 = vmatpush.bf16.msra.mxu0 0
        %2207 = vmatpush.bf16.msra.mxu0 0
        %2208 = vmatpush.bf16.msra.mxu0 0
        %2209 = vmatpush.bf16.msra.mxu0 %v2200
        %2210 = vmatmul.bf16.gmra.mxu0 %v2197
        %v2211 = vpop.f32.mrf.mxu0
        %v2212 = vadd.f32 0.0, %v2211
        %v2213 = vpop.f32.mrf.mxu0
        %2214 = vdwg.mxu0
        %2216 = vrot.lane.b32.xlu0 %v2160, 120
        %v2217 = vpop.permute.xlu0 %2216
        %2218 = vrot.lane.b32.xlu0 %v2161, 120
        %v2219 = vpop.permute.xlu0 %2218
        %v2221 = vsel %vm1301, %v2217, 0
        %v2224 = vsel %vm1301, %v2219, 0
        %2226 = vmatpush.bf16.xpose.msra.mxu0 0
        %2227 = vmatpush.bf16.xpose.msra.mxu0 0
        %2228 = vmatpush.bf16.xpose.msra.mxu0 0
        %2229 = vmatpush.bf16.xpose.msra.mxu0 0
        %2230 = vmatpush.bf16.xpose.msra.mxu0 0
        %2231 = vmatpush.bf16.xpose.msra.mxu0 0
        %2232 = vmatpush.bf16.xpose.msra.mxu0 0
        %2233 = vmatpush.bf16.xpose.msra.mxu0 %v2224
        %2234 = vmatmul.bf16.gmra.mxu0 %v2221
        %v2235 = vpop.f32.mrf.mxu0
        %v2236 = vadd.f32 0.0, %v2235
        %v2237 = vpop.f32.mrf.mxu0
        %2238 = vdwg.mxu0
        %v2239 = vsel %vm1301, %v2236, -inf
        %2240 = vmax.xlane.f32.xlu0 %v2239
        %v2241 = vpop.xlane.xlu0 %2240
        %v2242 = vsub.f32 %v2236, %v2241
        %v2243 = vmul.f32 %v2242, 1.442695
        %v2244 = vpow.pop %v2243
        %v2245 = vsel %vm1301, %v2244, 0.0
        %2246 = vadd.xlane.f32.xlu0 %v2245
        %v2247 = vpop.xlane.xlu0 %2246
        %v2248 = vrcp.pop %v2247
        %v2249 = vmul.f32 %v2244, %v2248
        %v2250 = vpack.c.bf16 %v2249, %v2249
        %2251 = vrot.lane.b32.xlu0 %v2161, 88
        %v2252 = vpop.permute.xlu0 %2251
        %v2254 = vsel %vm1301, %v2250, 0
        %v2257 = vsel %vm1338, %v2252, 0
        %2259 = vmatpush.bf16.msra.mxu0 0
        %2260 = vmatpush.bf16.msra.mxu0 0
        %2261 = vmatpush.bf16.msra.mxu0 0
        %2262 = vmatpush.bf16.msra.mxu0 0
        %2263 = vmatpush.bf16.msra.mxu0 0
        %2264 = vmatpush.bf16.msra.mxu0 0
        %2265 = vmatpush.bf16.msra.mxu0 0
        %2266 = vmatpush.bf16.msra.mxu0 %v2257
        %2267 = vmatmul.bf16.gmra.mxu0 %v2254
        %v2268 = vpop.f32.mrf.mxu0
        %v2269 = vadd.f32 0.0, %v2268
        %v2270 = vpop.f32.mrf.mxu0
        %2271 = vdwg.mxu0
        %2272 = vrot.lane.b32.xlu0 %v2160, 112
        %v2273 = vpop.permute.xlu0 %2272
        %2274 = vrot.lane.b32.xlu0 %v2161, 112
        %v2275 = vpop.permute.xlu0 %2274
        %v2277 = vsel %vm1301, %v2273, 0
        %v2280 = vsel %vm1301, %v2275, 0
        %2282 = vmatpush.bf16.xpose.msra.mxu0 0
        %2283 = vmatpush.bf16.xpose.msra.mxu0 0
        %2284 = vmatpush.bf16.xpose.msra.mxu0 0
        %2285 = vmatpush.bf16.xpose.msra.mxu0 0
        %2286 = vmatpush.bf16.xpose.msra.mxu0 0
        %2287 = vmatpush.bf16.xpose.msra.mxu0 0
        %2288 = vmatpush.bf16.xpose.msra.mxu0 0
        %2289 = vmatpush.bf16.xpose.msra.mxu0 %v2280
        %2290 = vmatmul.bf16.gmra.mxu0 %v2277
        %v2291 = vpop.f32.mrf.mxu0
        %v2292 = vadd.f32 0.0, %v2291
        %v2293 = vpop.f32.mrf.mxu0
        %2294 = vdwg.mxu0
        %v2295 = vsel %vm1301, %v2292, -inf
        %2296 = vmax.xlane.f32.xlu0 %v2295
        %v2297 = vpop.xlane.xlu0 %2296
        %v2298 = vsub.f32 %v2292, %v2297
        %v2299 = vmul.f32 %v2298, 1.442695
        %v2300 = vpow.pop %v2299
        %v2301 = vsel %vm1301, %v2300, 0.0
        %2302 = vadd.xlane.f32.xlu0 %v2301
        %v2303 = vpop.xlane.xlu0 %2302
        %v2304 = vrcp.pop %v2303
        %v2305 = vmul.f32 %v2300, %v2304
        %v2306 = vpack.c.bf16 %v2305, %v2305
        %2307 = vrot.lane.b32.xlu0 %v2161, 80
        %v2308 = vpop.permute.xlu0 %2307
        %v2310 = vsel %vm1301, %v2306, 0
        %v2313 = vsel %vm1338, %v2308, 0
        %2315 = vmatpush.bf16.msra.mxu0 0
        %2316 = vmatpush.bf16.msra.mxu0 0
        %2317 = vmatpush.bf16.msra.mxu0 0
        %2318 = vmatpush.bf16.msra.mxu0 0
        %2319 = vmatpush.bf16.msra.mxu0 0
        %2320 = vmatpush.bf16.msra.mxu0 0
        %2321 = vmatpush.bf16.msra.mxu0 0
        %2322 = vmatpush.bf16.msra.mxu0 %v2313
        %2323 = vmatmul.bf16.gmra.mxu0 %v2310
        %v2324 = vpop.f32.mrf.mxu0
        %v2325 = vadd.f32 0.0, %v2324
        %v2326 = vpop.f32.mrf.mxu0
        %2327 = vdwg.mxu0
        %2328 = vrot.lane.b32.xlu0 %v2160, 104
        %v2329 = vpop.permute.xlu0 %2328
        %2330 = vrot.lane.b32.xlu0 %v2161, 104
        %v2331 = vpop.permute.xlu0 %2330
        %v2333 = vsel %vm1301, %v2329, 0
        %v2336 = vsel %vm1301, %v2331, 0
        %2338 = vmatpush.bf16.xpose.msra.mxu0 0
        %2339 = vmatpush.bf16.xpose.msra.mxu0 0
        %2340 = vmatpush.bf16.xpose.msra.mxu0 0
        %2341 = vmatpush.bf16.xpose.msra.mxu0 0
        %2342 = vmatpush.bf16.xpose.msra.mxu0 0
        %2343 = vmatpush.bf16.xpose.msra.mxu0 0
        %2344 = vmatpush.bf16.xpose.msra.mxu0 0
        %2345 = vmatpush.bf16.xpose.msra.mxu0 %v2336
        %2346 = vmatmul.bf16.gmra.mxu0 %v2333
        %v2347 = vpop.f32.mrf.mxu0
        %v2348 = vadd.f32 0.0, %v2347
        %v2349 = vpop.f32.mrf.mxu0
        %2350 = vdwg.mxu0
        %v2351 = vsel %vm1301, %v2348, -inf
        %2352 = vmax.xlane.f32.xlu0 %v2351
        %v2353 = vpop.xlane.xlu0 %2352
        %v2354 = vsub.f32 %v2348, %v2353
        %v2355 = vmul.f32 %v2354, 1.442695
        %v2356 = vpow.pop %v2355
        %v2357 = vsel %vm1301, %v2356, 0.0
        %2358 = vadd.xlane.f32.xlu0 %v2357
        %v2359 = vpop.xlane.xlu0 %2358
        %v2360 = vrcp.pop %v2359
        %v2361 = vmul.f32 %v2356, %v2360
        %v2362 = vpack.c.bf16 %v2361, %v2361
        %2363 = vrot.lane.b32.xlu0 %v2161, 72
        %v2364 = vpop.permute.xlu0 %2363
        %v2366 = vsel %vm1301, %v2362, 0
        %v2369 = vsel %vm1338, %v2364, 0
        %2371 = vmatpush.bf16.msra.mxu0 0
        %2372 = vmatpush.bf16.msra.mxu0 0
        %2373 = vmatpush.bf16.msra.mxu0 0
        %2374 = vmatpush.bf16.msra.mxu0 0
        %2375 = vmatpush.bf16.msra.mxu0 0
        %2376 = vmatpush.bf16.msra.mxu0 0
        %2377 = vmatpush.bf16.msra.mxu0 0
        %2378 = vmatpush.bf16.msra.mxu0 %v2369
        %2379 = vmatmul.bf16.gmra.mxu0 %v2366
        %v2380 = vpop.f32.mrf.mxu0
        %v2381 = vadd.f32 0.0, %v2380
        %v2382 = vpop.f32.mrf.mxu0
        %2383 = vdwg.mxu0
        %2385 = vrot.lane.b32.xlu0 %v2269, 8
        %v2386 = vpop.permute.xlu0 %2385
        %2389 = vrot.lane.b32.xlu0 %v2325, 16
        %v2390 = vpop.permute.xlu0 %2389
        %2393 = vrot.lane.b32.xlu0 %v2381, 24
        %v2394 = vpop.permute.xlu0 %2393
        %v2396 = vsel %vm1301, %v2212, %v2386
        %v2397 = vsel %vm1536, %v2396, %v2390
        %v2398 = vsel %vm1538, %v2397, %v2394
        %v2399 = vpack.c.bf16 %v2398, %v2398
        %v2401 = vperm.slane %v2159, 0
        %v2407 = vunpack.c.l.b16 %v2155
        %v2408 = vunpack.c.l.b16 %v2156
        %v2409 = vunpack.c.l.b16 %v2157
        %v2410 = vunpack.c.l.b16 %v2158
        %v2411 = vpack.c.b16 %v2408, %v2407
        %v2412 = vpack.c.b16 %v2410, %v2409
        %v2416 = vsel %vm1217, %v2399, 0
        %2418 = vmatpush.bf16.msra.mxu0 0
        %2419 = vmatpush.bf16.msra.mxu0 0
        %2420 = vmatpush.bf16.msra.mxu0 0
        %2421 = vmatpush.bf16.msra.mxu0 0
        %2422 = vmatpush.bf16.msra.mxu0 0
        %2423 = vmatpush.bf16.msra.mxu0 0
        %2424 = vmatpush.bf16.msra.mxu0 %v2412
        %2425 = vmatpush.bf16.msra.mxu0 %v2411
        %2426 = vmatmul.bf16.gmra.mxu0 %v2416
        %v2427 = vpop.f32.mrf.mxu0
        %v2428 = vadd.f32 %v2401, %v2427
        %v2429 = vpop.f32.mrf.mxu0
        %2430 = vdwg.mxu0
        %v2431 = vpack.c.bf16 %v2428, %v2428
        %v2432 = vld [vmem:[%s57] sm:$0xf]
        %v2433 = vld [vmem:[%s57 + $0x4] sm:$0xf]
        %v2434 = vld [vmem:[%s57 + $0x8] sm:$0xf]
        %v2435 = vld [vmem:[%s57 + $0xc] sm:$0xf]
        %v2436 = vpack.c.bf16 %v2048, %v2048
        %v2437 = vld [vmem:[%s59] sm:$0xf]
        %v2438 = vld [vmem:[%s59 + $0x4] sm:$0xf]
        %v2439 = vld [vmem:[%s59 + $0x8] sm:$0xf]
        %v2440 = vld [vmem:[%s59 + $0xc] sm:$0xf]
        %v2445 = vunpack.c.l.b16 %v2437
        %v2446 = vunpack.c.l.b16 %v2438
        %v2447 = vunpack.c.l.b16 %v2439
        %v2448 = vunpack.c.l.b16 %v2440
        %v2449 = vpack.c.b16 %v2446, %v2445
        %v2450 = vpack.c.b16 %v2448, %v2447
        %v2454 = vsel %vm1217, %v2436, 0
        %2456 = vmatpush.bf16.msra.mxu0 0
        %2457 = vmatpush.bf16.msra.mxu0 0
        %2458 = vmatpush.bf16.msra.mxu0 0
        %2459 = vmatpush.bf16.msra.mxu0 0
        %2460 = vmatpush.bf16.msra.mxu0 0
        %2461 = vmatpush.bf16.msra.mxu0 0
        %2462 = vmatpush.bf16.msra.mxu0 %v2450
        %2463 = vmatpush.bf16.msra.mxu0 %v2449
        %2464 = vmatmul.bf16.gmra.mxu0 %v2454
        %v2465 = vpop.f32.mrf.mxu0
        %v2466 = vadd.f32 0.0, %v2465
        %v2467 = vpop.f32.mrf.mxu0
        %2468 = vdwg.mxu0
        %v2473 = vunpack.c.l.b16 %v2432
        %v2474 = vunpack.c.l.b16 %v2433
        %v2475 = vunpack.c.l.b16 %v2434
        %v2476 = vunpack.c.l.b16 %v2435
        %v2477 = vpack.c.b16 %v2474, %v2473
        %v2478 = vpack.c.b16 %v2476, %v2475
        %v2482 = vsel %vm1217, %v2431, 0
        %2484 = vmatpush.bf16.msra.mxu0 0
        %2485 = vmatpush.bf16.msra.mxu0 0
        %2486 = vmatpush.bf16.msra.mxu0 0
        %2487 = vmatpush.bf16.msra.mxu0 0
        %2488 = vmatpush.bf16.msra.mxu0 0
        %2489 = vmatpush.bf16.msra.mxu0 0
        %2490 = vmatpush.bf16.msra.mxu0 %v2478
        %2491 = vmatpush.bf16.msra.mxu0 %v2477
        %2492 = vmatmul.bf16.gmra.mxu0 %v2482
        %v2493 = vpop.f32.mrf.mxu0
        %v2494 = vadd.f32 %v2466, %v2493
        %v2495 = vpop.f32.mrf.mxu0
        %2496 = vdwg.mxu0
        %v2497 = vld [vmem:[%s61] sm:$0x1]
        %v2499 = vperm.slane %v2497, 0
        %v2501 = vadd.f32 %v2494, %v2499
        %v2502 = vxor.u32 %v2501, 2147483648
        %v2503 = vmul.f32 %v2502, 1.442695
        %v2504 = vpow.pop %v2503
        %v2505 = vadd.f32 %v2504, 1.0
        %v2506 = vrcp.pop %v2505
        %v2507 = vmul.f32 %v2505, %v2506
        %v2508 = vsub.f32 1.0, %v2507
        %v2509 = vmul.f32 %v2506, %v2508
        %v2510 = vadd.f32 %v2506, %v2509
        %vm2511 = vweird.f32 %v2505
        %vm2512 = vweird.f32 %v2506
        %vm2513 = vmor %vm2511, %vm2512
        %v2514 = vsel %vm2513, %v2506, %v2510
        %v2515 = vand.u32 2147483647, %v2505
        %vm2516 = vcmp.eq.f32.partialorder %v2515, 8.507059e+37
        %v2517 = vand.u32 %v2505, 2147483648
        %v2518 = vor.u32 1.1754944e-38, %v2517
        %v2519 = vsel %vm2516, %v2518, %v2514
        %v2520 = vmul.f32 1.0, %v2519
        %v2521 = vmul.f32 %v2428, %v2520
        %v2522 = vsub.f32 1.0, %v2520
        %v2523 = vmul.f32 %v2048, %v2522
        %v2524 = vadd.f32 %v2521, %v2523
        %v2525 = vld [vmem:[%s63] sm:$0x1]
        %v2526 = vld [vmem:[%s65] sm:$0x1]
        %v2527 = vld [vmem:[%s67] sm:$0xf]
        %v2528 = vld [vmem:[%s67 + $0x4] sm:$0xf]
        %v2529 = vld [vmem:[%s67 + $0x8] sm:$0xf]
        %v2530 = vld [vmem:[%s67 + $0xc] sm:$0xf]
        %v2531 = vld [vmem:[%s69] sm:$0x1]
        %v2532 = vld [vmem:[%s71] sm:$0xf]
        %v2533 = vld [vmem:[%s71 + $0x4] sm:$0xf]
        %v2534 = vld [vmem:[%s71 + $0x8] sm:$0xf]
        %v2535 = vld [vmem:[%s71 + $0xc] sm:$0xf]
        %v2536 = vld [vmem:[%s71 + $0x10] sm:$0xf]
        %v2537 = vld [vmem:[%s71 + $0x14] sm:$0xf]
        %v2538 = vld [vmem:[%s71 + $0x18] sm:$0xf]
        %v2539 = vld [vmem:[%s71 + $0x1c] sm:$0xf]
        %v2540 = vld [vmem:[%s71 + $0x20] sm:$0xf]
        %v2541 = vld [vmem:[%s71 + $0x24] sm:$0xf]
        %v2542 = vld [vmem:[%s71 + $0x28] sm:$0xf]
        %v2543 = vld [vmem:[%s71 + $0x2c] sm:$0xf]
        %v2544 = vld [vmem:[%s71 + $0x30] sm:$0xf]
        %v2545 = vld [vmem:[%s71 + $0x34] sm:$0xf]
        %v2546 = vld [vmem:[%s71 + $0x38] sm:$0xf]
        %v2547 = vld [vmem:[%s71 + $0x3c] sm:$0xf]
        %v2548 = vld [vmem:[%s73] sm:$0x1]
        %v2549 = vsel %vm1217, %v2524, 0.0
        %2550 = vadd.xlane.f32.xlu0 %v2549
        %v2551 = vpop.xlane.xlu0 %2550
        %v2552 = vmul.f32 %v2551, %v1227
        %v2553 = vsub.f32 %v2524, %v2552
        %v2554 = vmul.f32 %v2553, %v2553
        %v2555 = vsel %vm1217, %v2554, 0.0
        %2556 = vadd.xlane.f32.xlu0 %v2555
        %v2557 = vpop.xlane.xlu0 %2556
        %v2558 = vmul.f32 %v2557, %v1227
        %v2559 = vadd.f32 %v2558, 1e-06
        %v2560 = vrsqrt.pop %v2559
        %v2561 = vmul.f32 %v2560, %v2559
        %v2562 = vmul.f32 %v2561, %v2560
        %v2563 = vmul.f32 0.5, %v2562
        %v2564 = vsub.f32 1.5, %v2563
        %v2565 = vmul.f32 %v2560, %v2564
        %vm2566 = vweird.f32 %v2559
        %vm2567 = vweird.f32 %v2560
        %vm2568 = vmor %vm2566, %vm2567
        %v2569 = vsel %vm2568, %v2560, %v2565
        %v2570 = vmul.f32 %v2553, %v2569
        %v2572 = vperm.slane %v2525, 0
        %v2574 = vmul.f32 %v2570, %v2572
        %v2576 = vperm.slane %v2526, 0
        %v2578 = vadd.f32 %v2574, %v2576
        %v2579 = vpack.c.bf16 %v2578, %v2578
        %v2581 = vperm.slane %v2531, 0
        %v2587 = vunpack.c.l.b16 %v2527
        %v2588 = vunpack.c.l.b16 %v2528
        %v2589 = vunpack.c.l.b16 %v2529
        %v2590 = vunpack.c.l.b16 %v2530
        %v2591 = vpack.c.b16 %v2588, %v2587
        %v2592 = vpack.c.b16 %v2590, %v2589
        %v2596 = vsel %vm1217, %v2579, 0
        %2598 = vmatpush.bf16.msra.mxu0 0
        %2599 = vmatpush.bf16.msra.mxu0 0
        %2600 = vmatpush.bf16.msra.mxu0 0
        %2601 = vmatpush.bf16.msra.mxu0 0
        %2602 = vmatpush.bf16.msra.mxu0 0
        %2603 = vmatpush.bf16.msra.mxu0 0
        %2604 = vmatpush.bf16.msra.mxu0 %v2592
        %2605 = vmatpush.bf16.msra.mxu0 %v2591
        %2606 = vmatmul.bf16.gmra.mxu0 %v2596
        %v2607 = vpop.f32.mrf.mxu0
        %v2608 = vadd.f32 %v2581, %v2607
        %v2609 = vpop.f32.mrf.mxu0
        %2610 = vdwg.mxu0
        %v2611 = vmax.f32 %v2608, 0.0
        %v2612 = vpack.c.bf16 %v2611, %v2611
        %v2614 = vperm.slane %v2548, 0
        %v2632 = vunpack.c.l.b16 %v2532
        %v2633 = vunpack.c.l.b16 %v2533
        %v2634 = vunpack.c.l.b16 %v2534
        %v2635 = vunpack.c.l.b16 %v2535
        %v2636 = vunpack.c.l.b16 %v2536
        %v2637 = vunpack.c.l.b16 %v2537
        %v2638 = vunpack.c.l.b16 %v2538
        %v2639 = vunpack.c.l.b16 %v2539
        %v2640 = vunpack.c.l.b16 %v2540
        %v2641 = vunpack.c.l.b16 %v2541
        %v2642 = vunpack.c.l.b16 %v2542
        %v2643 = vunpack.c.l.b16 %v2543
        %v2644 = vunpack.c.l.b16 %v2544
        %v2645 = vunpack.c.l.b16 %v2545
        %v2646 = vunpack.c.l.b16 %v2546
        %v2647 = vunpack.c.l.b16 %v2547
        %v2648 = vpack.c.b16 %v2633, %v2632
        %v2649 = vpack.c.b16 %v2635, %v2634
        %v2650 = vpack.c.b16 %v2637, %v2636
        %v2651 = vpack.c.b16 %v2639, %v2638
        %v2652 = vpack.c.b16 %v2641, %v2640
        %v2653 = vpack.c.b16 %v2643, %v2642
        %v2654 = vpack.c.b16 %v2645, %v2644
        %v2655 = vpack.c.b16 %v2647, %v2646
        %2664 = vmatpush.bf16.msra.mxu0 %v2655
        %2665 = vmatpush.bf16.msra.mxu0 %v2654
        %2666 = vmatpush.bf16.msra.mxu0 %v2653
        %2667 = vmatpush.bf16.msra.mxu0 %v2652
        %2668 = vmatpush.bf16.msra.mxu0 %v2651
        %2669 = vmatpush.bf16.msra.mxu0 %v2650
        %2670 = vmatpush.bf16.msra.mxu0 %v2649
        %2671 = vmatpush.bf16.msra.mxu0 %v2648
        %2672 = vmatmul.bf16.gmra.mxu0 %v2612
        %v2673 = vpop.f32.mrf.mxu0
        %v2674 = vadd.f32 %v2614, %v2673
        %v2675 = vpop.f32.mrf.mxu0
        %2676 = vdwg.mxu0
        %v2677 = vadd.f32 %v2674, %v2524
        %v2678 = vld [vmem:[%s75] sm:$0x1]
        %v2679 = vld [vmem:[%s77] sm:$0x1]
        %v2680 = vsel %vm1217, %v2677, 0.0
        %2681 = vadd.xlane.f32.xlu0 %v2680
        %v2682 = vpop.xlane.xlu0 %2681
        %v2683 = vmul.f32 %v2682, %v1227
        %v2684 = vsub.f32 %v2677, %v2683
        %v2685 = vmul.f32 %v2684, %v2684
        %v2686 = vsel %vm1217, %v2685, 0.0
        %2687 = vadd.xlane.f32.xlu0 %v2686
        %v2688 = vpop.xlane.xlu0 %2687
        %v2689 = vmul.f32 %v2688, %v1227
        %v2690 = vadd.f32 %v2689, 1e-06
        %v2691 = vrsqrt.pop %v2690
        %v2692 = vmul.f32 %v2691, %v2690
        %v2693 = vmul.f32 %v2692, %v2691
        %v2694 = vmul.f32 0.5, %v2693
        %v2695 = vsub.f32 1.5, %v2694
        %v2696 = vmul.f32 %v2691, %v2695
        %vm2697 = vweird.f32 %v2690
        %vm2698 = vweird.f32 %v2691
        %vm2699 = vmor %vm2697, %vm2698
        %v2700 = vsel %vm2699, %v2691, %v2696
        %v2701 = vmul.f32 %v2684, %v2700
        %v2703 = vperm.slane %v2678, 0
        %v2705 = vmul.f32 %v2701, %v2703
        %v2707 = vperm.slane %v2679, 0
        %v2709 = vadd.f32 %v2705, %v2707
        %2710 = vst.msk [vmem:[%s1199] sm:$0xff] %vm1217, %v2709
        %s2711 = sand.u32 %s935, 1
        %s2712 = scalar_lea.sflag [#allocation3], %s2711
        %s2713 = sand.u32 %s935, 1
        %s2714 = smul.addr %s2713, 8
        %s2715 = scalar_lea.vmem [#allocation2], %s2714
        // Predicated region
        $region177: #{doc_encoder_forward.3} parent=175 // pred_check
          %p2716 = pneg %p945
        $region178: #{doc_encoder_forward.3} parent=175 // pred_check_branch
          %2718 = sbr.rel (%p2716) target = $region180
        $region179: #{doc_encoder_forward.3} parent=175 // pred_region
          %2720 = vsyncadd %s2712, 0
          %s2721 = smul.addr %s93, 8
          %s2722 = scalar_lea.hbm %s79, %s2721
          %s2724 = sshll.u32 %s2715, 4
          %s2725 = int_to_ptr.vmem [resolvable:$true] %s2724
          %s2726 = sshll.u32 %s2722, 4
          %s2727 = int_to_ptr.hbm [resolvable:$true] %s2726
          %2729 = dma.vmem_to_hbm [thread:$0]  %s2725, 128, %s2727, %s2712
        $region180: #{doc_encoder_forward.3} parent=175 // pred_fallthru
          _
      $region176: #{doc_encoder_forward.3} parent=5 // pred_fallthru
        _
      %p2730 = scmp.le.s32.totalorder 2, %s88
      // Predicated region
      $region181: #{doc_encoder_forward.3} parent=5 // pred_check
        %p2731 = pneg %p2730
      $region182: #{doc_encoder_forward.3} parent=5 // pred_check_branch
        %2733 = sbr.rel (%p2731) target = $region184
      $region183: #{doc_encoder_forward.3} parent=5 // pred_region
        %s2734 = ssub.s32 %s88, 2
        // Predicated region
        $region185: #{doc_encoder_forward.3} parent=183 // pred_check
          %p2735 = pneg %p951
        $region186: #{doc_encoder_forward.3} parent=183 // pred_check_branch
          %2737 = sbr.rel (%p2735) target = $region188
        $region187: #{doc_encoder_forward.3} parent=183 // pred_region
          %s2738 = sand.u32 %s936, 1
          %s2739 = scalar_lea.sflag [#allocation3], %s2738
          %s2740 = sand.u32 %s936, 1
          %s2741 = smul.addr %s2740, 8
          %s2742 = scalar_lea.vmem [#allocation2], %s2741
          %2744 = dma.done %s2739, 128
        $region188: #{doc_encoder_forward.3} parent=183 // pred_fallthru
          _
      $region184: #{doc_encoder_forward.3} parent=5 // pred_fallthru
        _
    $region6: #{doc_encoder_forward.3} parent=1 // loop_footer
      %s92 = sadd.s32 1, %s88
    $region7: #{doc_encoder_forward.3} parent=1 // loop_footer_branch
      %87 = sbr.rel target = $region3
    $region8: #{doc_encoder_forward.3} parent=1 // loop_exit
      _
    %2745 = vsyncpa [#allocation3], 1
    %s2746 = scalar_lea.sflag [#allocation3], 1
    %2747 = vsyncpa %s2746, 1

</llo_original>
